<compile_context>
chip_gen: v7x
topology: tpu7x:2x2x1
jax: 0.10.0
libtpu: 0.0.40
codegen_flags: <defaults>
</compile_context>

<pallas_src>
import functools

import jax
import jax.numpy as jnp
from jax.experimental import pallas as pl
from jax.experimental.pallas import tpu as pltpu

EMB_SIZE = 384
HIDDEN = 128
OUT = 2
OUT_PAD = 128          # lane-dense padded output width
NUM_LAYERS = 3
NEG_SLOPE = 0.01       # F.leaky_relu default negative_slope
TILE_B = 512           # batch tile (multiple of 256; sweepable)


def _leaky_relu(x):
    return jnp.where(x > 0, x, NEG_SLOPE * x)


def classifier_kernel(x_ref, w_in_ref, w1_ref, w2_ref, w3_ref, w_out_ref,
                      bias_ref, o_ref):
    # x: (TILE_B, 384) bf16; weights bf16; biases stacked f32 (8, 128):
    #   row 0 = b_in, rows 1..3 = b1..b3, row 4 = b_out (cols 2.. zero), rows 5..7 pad.
    x = x_ref[...]

    emb = jnp.dot(x, w_in_ref[...],
                  preferred_element_type=jnp.float32) + bias_ref[0:1, :]   # f32 (TILE_B, 128)

    h = emb
    for idx, w_ref in enumerate((w1_ref, w2_ref, w3_ref)):
        h = jnp.dot(h.astype(jnp.bfloat16), w_ref[...],
                    preferred_element_type=jnp.float32) + bias_ref[idx + 1:idx + 2, :]
        h = _leaky_relu(h)

    # x += self.input_emb(input_)  (residual re-add of the embedding)
    h = _leaky_relu(h + emb)

    # TODO(synk): Dropout(p=0.5) is identity at inference; training-mode dropout
    # (pltpu.prng_random_bits mask) is not implemented here.

    o_ref[...] = jnp.dot(h.astype(jnp.bfloat16), w_out_ref[...],
                         preferred_element_type=jnp.float32) + bias_ref[4:5, :]


def _prepare_kernel_params(params):
    """Cast weights to bf16, zero-pad the output head to 128 lanes, stack biases."""
    w_in = params["w_in"].astype(jnp.bfloat16)
    w1 = params["w1"].astype(jnp.bfloat16)
    w2 = params["w2"].astype(jnp.bfloat16)
    w3 = params["w3"].astype(jnp.bfloat16)

    w_out_pad = jnp.zeros((HIDDEN, OUT_PAD), jnp.float32)
    w_out_pad = w_out_pad.at[:, :OUT].set(params["w_out"]).astype(jnp.bfloat16)

    b_out_pad = jnp.zeros((1, OUT_PAD), jnp.float32).at[:, :OUT].set(params["b_out"])
    bias_stack = jnp.concatenate(
        [params["b_in"], params["b1"], params["b2"], params["b3"], b_out_pad,
         jnp.zeros((3, HIDDEN), jnp.float32)], axis=0)              # (8, 128) f32

    return w_in, w1, w2, w3, w_out_pad, bias_stack


@functools.partial(jax.jit, static_argnames=("tile_b",))
def classifier_forward(x, params, tile_b=TILE_B):
    B = x.shape[0]
    n_tiles = pl.cdiv(B, tile_b)
    b_pad = n_tiles * tile_b
    if b_pad != B:
        x = jnp.pad(x, ((0, b_pad - B), (0, 0)))
    x_bf16 = x.astype(jnp.bfloat16)

    w_in, w1, w2, w3, w_out_pad, bias_stack = _prepare_kernel_params(params)

    const = lambda shape: pl.BlockSpec(shape, lambda i: (0, 0))  # VMEM-resident operand

    out_padded = pl.pallas_call(
        classifier_kernel,
        out_shape=jax.ShapeDtypeStruct((b_pad, OUT_PAD), jnp.float32),
        grid=(n_tiles,),
        in_specs=[
            pl.BlockSpec((tile_b, EMB_SIZE), lambda i: (i, 0)),   # x tiles pipeline
            const((EMB_SIZE, HIDDEN)),                            # w_in
            const((HIDDEN, HIDDEN)),                              # w1
            const((HIDDEN, HIDDEN)),                              # w2
            const((HIDDEN, HIDDEN)),                              # w3
            const((HIDDEN, OUT_PAD)),                             # w_out (padded)
            const((8, HIDDEN)),                                   # stacked biases
        ],
        out_specs=pl.BlockSpec((tile_b, OUT_PAD), lambda i: (i, 0)),
        compiler_params=pltpu.CompilerParams(
            dimension_semantics=("parallel",),
            vmem_limit_bytes=32 * 1024 * 1024,
        ),
    )(x_bf16, w_in, w1, w2, w3, w_out_pad, bias_stack)

    return out_padded[:B, :OUT]


def init_params(key):
    """Mirrors Classifier.init_weights(): uniform(-0.1, 0.1) weights, zero biases."""
    initrange = 0.1
    keys = jax.random.split(key, 5)
    p = {}
    p["w_in"] = jax.random.uniform(keys[0], (EMB_SIZE, HIDDEN), jnp.float32,
                                   -initrange, initrange)
    p["b_in"] = jnp.zeros((1, HIDDEN), jnp.float32)
    for i in range(NUM_LAYERS):
        p[f"w{i+1}"] = jax.random.uniform(keys[1 + i], (HIDDEN, HIDDEN), jnp.float32,
                                          -initrange, initrange)
        p[f"b{i+1}"] = jnp.zeros((1, HIDDEN), jnp.float32)
    p["w_out"] = jax.random.uniform(keys[4], (HIDDEN, OUT), jnp.float32,
                                    -initrange, initrange)
    p["b_out"] = jnp.zeros((1, OUT), jnp.float32)
    return p


def reference_forward(x, p):
    """Pure-JAX reference using the same bf16-quantized weights (f32 intermediates)."""
    q = lambda w: w.astype(jnp.bfloat16).astype(jnp.float32)
    xq = x.astype(jnp.bfloat16).astype(jnp.float32)
    emb = xq @ q(p["w_in"]) + p["b_in"]
    h = emb
    for i in range(NUM_LAYERS):
        h = _leaky_relu(h @ q(p[f"w{i+1}"]) + p[f"b{i+1}"])
    h = _leaky_relu(h + emb)
    return h @ q(p["w_out"]) + p["b_out"]


if __name__ == "__main__":
    key = jax.random.PRNGKey(0)
    k_param, k_x = jax.random.split(key)
    params = init_params(k_param)

    B = 8
    x = jax.random.normal(k_x, (B, EMB_SIZE), jnp.float32)

    out = classifier_forward(x, params)
    out = jax.block_until_ready(out)

    ref = reference_forward(x, params)
    assert out.shape == (B, OUT), out.shape
    assert jnp.allclose(out, ref, atol=2e-2, rtol=2e-2), "mismatch vs reference"

    print("KERNEL_OK")
</pallas_src>

<mosaic_0001>
module attributes {stable_mosaic.version = 11 : i64} {
  func.func @classifier_kernel(%arg0: i32, %arg1: memref<512x384xbf16, #tpu.memory_space<vmem>>, %arg2: memref<384x128xbf16, #tpu.memory_space<vmem>>, %arg3: memref<128x128xbf16, #tpu.memory_space<vmem>>, %arg4: memref<128x128xbf16, #tpu.memory_space<vmem>>, %arg5: memref<128x128xbf16, #tpu.memory_space<vmem>>, %arg6: memref<128x128xbf16, #tpu.memory_space<vmem>>, %arg7: memref<8x128xf32, #tpu.memory_space<vmem>>, %arg8: memref<512x128xf32, #tpu.memory_space<vmem>>) attributes {dimension_semantics = [#tpu.dimension_semantics<parallel>], iteration_bounds = array<i64: 1>, scalar_prefetch = 0 : i64, scratch_operands = 0 : i64, tpu.core_type = #tpu.core_type<tc>, window_params = [{transform_indices = @transform_0, window_bounds = array<i64: 512, 384>}, {pipeline_mode = #tpu.pipeline_mode<synchronous>, transform_indices = @transform_1, window_bounds = array<i64: 384, 128>}, {pipeline_mode = #tpu.pipeline_mode<synchronous>, transform_indices = @transform_2, window_bounds = array<i64: 128, 128>}, {pipeline_mode = #tpu.pipeline_mode<synchronous>, transform_indices = @transform_3, window_bounds = array<i64: 128, 128>}, {pipeline_mode = #tpu.pipeline_mode<synchronous>, transform_indices = @transform_4, window_bounds = array<i64: 128, 128>}, {pipeline_mode = #tpu.pipeline_mode<synchronous>, transform_indices = @transform_5, window_bounds = array<i64: 128, 128>}, {pipeline_mode = #tpu.pipeline_mode<synchronous>, transform_indices = @transform_6, window_bounds = array<i64: 8, 128>}, {transform_indices = @transform_7, window_bounds = array<i64: 512, 128>}]} {
    %c0 = arith.constant 0 : index
    %c0_0 = arith.constant 0 : index
    %0 = vector.load %arg1[%c0, %c0_0] : memref<512x384xbf16, #tpu.memory_space<vmem>>, vector<512x384xbf16>
    %c0_1 = arith.constant 0 : index
    %c0_2 = arith.constant 0 : index
    %1 = vector.load %arg2[%c0_1, %c0_2] : memref<384x128xbf16, #tpu.memory_space<vmem>>, vector<384x128xbf16>
    %cst = arith.constant dense<0.000000e+00> : vector<512x128xf32>
    %2 = tpu.matmul %0, %1, %cst {dimension_numbers = #tpu.dot_dimension_numbers<[1], [0], [0], [1], [0, 0, 1, 1], [], []>} : vector<512x384xbf16>, vector<384x128xbf16>, vector<512x128xf32> -> vector<512x128xf32>
    %c0_3 = arith.constant 0 : index
    %c0_4 = arith.constant 0 : index
    %3 = vector.load %arg7[%c0_3, %c0_4] : memref<8x128xf32, #tpu.memory_space<vmem>>, vector<1x128xf32>
    %4 = vector.broadcast %3 : vector<1x128xf32> to vector<512x128xf32>
    %5 = arith.addf %2, %4 : vector<512x128xf32>
    %6 = arith.truncf %5 : vector<512x128xf32> to vector<512x128xbf16>
    %c0_5 = arith.constant 0 : index
    %c0_6 = arith.constant 0 : index
    %7 = vector.load %arg3[%c0_5, %c0_6] : memref<128x128xbf16, #tpu.memory_space<vmem>>, vector<128x128xbf16>
    %cst_7 = arith.constant dense<0.000000e+00> : vector<512x128xf32>
    %8 = tpu.matmul %6, %7, %cst_7 {dimension_numbers = #tpu.dot_dimension_numbers<[1], [0], [0], [1], [0, 0, 1, 1], [], []>} : vector<512x128xbf16>, vector<128x128xbf16>, vector<512x128xf32> -> vector<512x128xf32>
    %c1 = arith.constant 1 : index
    %c0_8 = arith.constant 0 : index
    %9 = vector.load %arg7[%c1, %c0_8] : memref<8x128xf32, #tpu.memory_space<vmem>>, vector<1x128xf32>
    %10 = vector.broadcast %9 : vector<1x128xf32> to vector<512x128xf32>
    %11 = arith.addf %8, %10 : vector<512x128xf32>
    %cst_9 = arith.constant 0.000000e+00 : f32
    %12 = vector.broadcast %cst_9 : f32 to vector<512x128xf32>
    %13 = arith.cmpf ogt, %11, %12 : vector<512x128xf32>
    %cst_10 = arith.constant 0.00999999977 : f32
    %14 = vector.broadcast %cst_10 : f32 to vector<512x128xf32>
    %15 = arith.mulf %14, %11 : vector<512x128xf32>
    %16 = arith.select %13, %11, %15 : vector<512x128xi1>, vector<512x128xf32>
    %17 = arith.truncf %16 : vector<512x128xf32> to vector<512x128xbf16>
    %c0_11 = arith.constant 0 : index
    %c0_12 = arith.constant 0 : index
    %18 = vector.load %arg4[%c0_11, %c0_12] : memref<128x128xbf16, #tpu.memory_space<vmem>>, vector<128x128xbf16>
    %cst_13 = arith.constant dense<0.000000e+00> : vector<512x128xf32>
    %19 = tpu.matmul %17, %18, %cst_13 {dimension_numbers = #tpu.dot_dimension_numbers<[1], [0], [0], [1], [0, 0, 1, 1], [], []>} : vector<512x128xbf16>, vector<128x128xbf16>, vector<512x128xf32> -> vector<512x128xf32>
    %c2 = arith.constant 2 : index
    %c0_14 = arith.constant 0 : index
    %20 = vector.load %arg7[%c2, %c0_14] : memref<8x128xf32, #tpu.memory_space<vmem>>, vector<1x128xf32>
    %21 = vector.broadcast %20 : vector<1x128xf32> to vector<512x128xf32>
    %22 = arith.addf %19, %21 : vector<512x128xf32>
    %cst_15 = arith.constant 0.000000e+00 : f32
    %23 = vector.broadcast %cst_15 : f32 to vector<512x128xf32>
    %24 = arith.cmpf ogt, %22, %23 : vector<512x128xf32>
    %cst_16 = arith.constant 0.00999999977 : f32
    %25 = vector.broadcast %cst_16 : f32 to vector<512x128xf32>
    %26 = arith.mulf %25, %22 : vector<512x128xf32>
    %27 = arith.select %24, %22, %26 : vector<512x128xi1>, vector<512x128xf32>
    %28 = arith.truncf %27 : vector<512x128xf32> to vector<512x128xbf16>
    %c0_17 = arith.constant 0 : index
    %c0_18 = arith.constant 0 : index
    %29 = vector.load %arg5[%c0_17, %c0_18] : memref<128x128xbf16, #tpu.memory_space<vmem>>, vector<128x128xbf16>
    %cst_19 = arith.constant dense<0.000000e+00> : vector<512x128xf32>
    %30 = tpu.matmul %28, %29, %cst_19 {dimension_numbers = #tpu.dot_dimension_numbers<[1], [0], [0], [1], [0, 0, 1, 1], [], []>} : vector<512x128xbf16>, vector<128x128xbf16>, vector<512x128xf32> -> vector<512x128xf32>
    %c3 = arith.constant 3 : index
    %c0_20 = arith.constant 0 : index
    %31 = vector.load %arg7[%c3, %c0_20] : memref<8x128xf32, #tpu.memory_space<vmem>>, vector<1x128xf32>
    %32 = vector.broadcast %31 : vector<1x128xf32> to vector<512x128xf32>
    %33 = arith.addf %30, %32 : vector<512x128xf32>
    %cst_21 = arith.constant 0.000000e+00 : f32
    %34 = vector.broadcast %cst_21 : f32 to vector<512x128xf32>
    %35 = arith.cmpf ogt, %33, %34 : vector<512x128xf32>
    %cst_22 = arith.constant 0.00999999977 : f32
    %36 = vector.broadcast %cst_22 : f32 to vector<512x128xf32>
    %37 = arith.mulf %36, %33 : vector<512x128xf32>
    %38 = arith.select %35, %33, %37 : vector<512x128xi1>, vector<512x128xf32>
    %39 = arith.addf %38, %5 : vector<512x128xf32>
    %cst_23 = arith.constant 0.000000e+00 : f32
    %40 = vector.broadcast %cst_23 : f32 to vector<512x128xf32>
    %41 = arith.cmpf ogt, %39, %40 : vector<512x128xf32>
    %cst_24 = arith.constant 0.00999999977 : f32
    %42 = vector.broadcast %cst_24 : f32 to vector<512x128xf32>
    %43 = arith.mulf %42, %39 : vector<512x128xf32>
    %44 = arith.select %41, %39, %43 : vector<512x128xi1>, vector<512x128xf32>
    %45 = arith.truncf %44 : vector<512x128xf32> to vector<512x128xbf16>
    %c0_25 = arith.constant 0 : index
    %c0_26 = arith.constant 0 : index
    %46 = vector.load %arg6[%c0_25, %c0_26] : memref<128x128xbf16, #tpu.memory_space<vmem>>, vector<128x128xbf16>
    %cst_27 = arith.constant dense<0.000000e+00> : vector<512x128xf32>
    %47 = tpu.matmul %45, %46, %cst_27 {dimension_numbers = #tpu.dot_dimension_numbers<[1], [0], [0], [1], [0, 0, 1, 1], [], []>} : vector<512x128xbf16>, vector<128x128xbf16>, vector<512x128xf32> -> vector<512x128xf32>
    %c4 = arith.constant 4 : index
    %c0_28 = arith.constant 0 : index
    %48 = vector.load %arg7[%c4, %c0_28] : memref<8x128xf32, #tpu.memory_space<vmem>>, vector<1x128xf32>
    %49 = vector.broadcast %48 : vector<1x128xf32> to vector<512x128xf32>
    %50 = arith.addf %47, %49 : vector<512x128xf32>
    %c0_29 = arith.constant 0 : index
    %c0_30 = arith.constant 0 : index
    %51 = vector.load %arg8[%c0_29, %c0_30] : memref<512x128xf32, #tpu.memory_space<vmem>>, vector<512x128xf32>
    tpu.vector_store %arg8[%c0_29, %c0_30], %50 {strides = array<i32>} : memref<512x128xf32, #tpu.memory_space<vmem>>, vector<512x128xf32>,
    return
  }
  func.func @transform_0(%arg0: i32) -> (i32, i32) {
    %c0_i32 = arith.constant 0 : i32
    %c0_i32_0 = arith.constant 0 : i32
    return %arg0, %c0_i32 : i32, i32
  }
  func.func @transform_1(%arg0: i32) -> (i32, i32) {
    %c0_i32 = arith.constant 0 : i32
    %c0_i32_0 = arith.constant 0 : i32
    %c0_i32_1 = arith.constant 0 : i32
    return %c0_i32, %c0_i32_0 : i32, i32
  }
  func.func @transform_2(%arg0: i32) -> (i32, i32) {
    %c0_i32 = arith.constant 0 : i32
    %c0_i32_0 = arith.constant 0 : i32
    %c0_i32_1 = arith.constant 0 : i32
    return %c0_i32, %c0_i32_0 : i32, i32
  }
  func.func @transform_3(%arg0: i32) -> (i32, i32) {
    %c0_i32 = arith.constant 0 : i32
    %c0_i32_0 = arith.constant 0 : i32
    %c0_i32_1 = arith.constant 0 : i32
    return %c0_i32, %c0_i32_0 : i32, i32
  }
  func.func @transform_4(%arg0: i32) -> (i32, i32) {
    %c0_i32 = arith.constant 0 : i32
    %c0_i32_0 = arith.constant 0 : i32
    %c0_i32_1 = arith.constant 0 : i32
    return %c0_i32, %c0_i32_0 : i32, i32
  }
  func.func @transform_5(%arg0: i32) -> (i32, i32) {
    %c0_i32 = arith.constant 0 : i32
    %c0_i32_0 = arith.constant 0 : i32
    %c0_i32_1 = arith.constant 0 : i32
    return %c0_i32, %c0_i32_0 : i32, i32
  }
  func.func @transform_6(%arg0: i32) -> (i32, i32) {
    %c0_i32 = arith.constant 0 : i32
    %c0_i32_0 = arith.constant 0 : i32
    %c0_i32_1 = arith.constant 0 : i32
    return %c0_i32, %c0_i32_0 : i32, i32
  }
  func.func @transform_7(%arg0: i32) -> (i32, i32) {
    %c0_i32 = arith.constant 0 : i32
    %c0_i32_0 = arith.constant 0 : i32
    return %arg0, %c0_i32 : i32, i32
  }
}

</mosaic_0001>

<llo_original>
// kernel: classifier_forward.1
$region0: #{classifier_forward.1}
  #allocation0 [shape = 'u32[]', space=smem, size = 0x4, offset = 0x4, fixed_abs, tag = 'smem constant byte address 0x4 - core index']
  #allocation1 [shape = 'u32[144,128]{1,0:T(1,128)}', space=vmem, size = 0x12000, scoped, tag = 'internal scratch']
  %s0 = inlined_call_operand.vmem [shape: bf16[512,384], index: 0, kind: input, shape index: {}]
  %s1 = inlined_call_operand.vmem [shape: bf16[384,128], index: 1, kind: input, shape index: {}]
  %s2 = inlined_call_operand.vmem [shape: bf16[128,128], index: 2, kind: input, shape index: {}]
  %s3 = inlined_call_operand.vmem [shape: bf16[128,128], index: 3, kind: input, shape index: {}]
  %s4 = inlined_call_operand.vmem [shape: bf16[128,128], index: 4, kind: input, shape index: {}]
  %s5 = inlined_call_operand.vmem [shape: bf16[128,128], index: 5, kind: input, shape index: {}]
  %s6 = inlined_call_operand.vmem [shape: f32[8,128], index: 6, kind: input, shape index: {}]
  %s7 = inlined_call_operand.vmem [shape: f32[512,128], index: 7, kind: output, shape index: {}]
  %s8 = sld [smem:[#allocation0]]
  $region38: #{classifier_forward.1} parent=0
    _
  %s10 = ssub.s32 1, %s8
  %s11 = scalar_select 0, %s10, %s8
  // Predicated region
  $region2: #{classifier_forward.1} parent=0 // pred_check
    _
  $region3: #{classifier_forward.1} parent=0 // pred_check_branch
    %13 = sbr.rel (0) target = $region5
  $region4: #{classifier_forward.1} parent=0 // pred_region
    _
  $region5: #{classifier_forward.1} parent=0 // pred_fallthru
    _
  // Predicated region
  $region6: #{classifier_forward.1} parent=0 // pred_check
    _
  $region7: #{classifier_forward.1} parent=0 // pred_check_branch
    %15 = sbr.rel (0) target = $region9
  $region8: #{classifier_forward.1} parent=0 // pred_region
    _
  $region9: #{classifier_forward.1} parent=0 // pred_fallthru
    _
  // Predicated region
  $region10: #{classifier_forward.1} parent=0 // pred_check
    _
  $region11: #{classifier_forward.1} parent=0 // pred_check_branch
    %17 = sbr.rel (0) target = $region13
  $region12: #{classifier_forward.1} parent=0 // pred_region
    _
  $region13: #{classifier_forward.1} parent=0 // pred_fallthru
    _
  // Predicated region
  $region14: #{classifier_forward.1} parent=0 // pred_check
    _
  $region15: #{classifier_forward.1} parent=0 // pred_check_branch
    %19 = sbr.rel (0) target = $region17
  $region16: #{classifier_forward.1} parent=0 // pred_region
    _
  $region17: #{classifier_forward.1} parent=0 // pred_fallthru
    _
  // Predicated region
  $region18: #{classifier_forward.1} parent=0 // pred_check
    _
  $region19: #{classifier_forward.1} parent=0 // pred_check_branch
    %21 = sbr.rel (0) target = $region21
  $region20: #{classifier_forward.1} parent=0 // pred_region
    _
  $region21: #{classifier_forward.1} parent=0 // pred_fallthru
    _
  // Predicated region
  $region22: #{classifier_forward.1} parent=0 // pred_check
    _
  $region23: #{classifier_forward.1} parent=0 // pred_check_branch
    %23 = sbr.rel (0) target = $region25
  $region24: #{classifier_forward.1} parent=0 // pred_region
    _
  $region25: #{classifier_forward.1} parent=0 // pred_fallthru
    _
  // Predicated region
  $region26: #{classifier_forward.1} parent=0 // pred_check
    _
  $region27: #{classifier_forward.1} parent=0 // pred_check_branch
    %25 = sbr.rel (0) target = $region29
  $region28: #{classifier_forward.1} parent=0 // pred_region
    _
  $region29: #{classifier_forward.1} parent=0 // pred_fallthru
    _
  %v27 = vld [vmem:[%s0] sm:$0xff]
  %v28 = vld [vmem:[%s0 + $0x8] sm:$0xf]
  %v29 = vld [vmem:[%s0 + $0xc] sm:$0xff]
  %v30 = vld [vmem:[%s0 + $0x14] sm:$0xf]
  %v31 = vld [vmem:[%s0 + $0x18] sm:$0xff]
  %v32 = vld [vmem:[%s0 + $0x20] sm:$0xf]
  %v33 = vld [vmem:[%s0 + $0x24] sm:$0xff]
  %v34 = vld [vmem:[%s0 + $0x2c] sm:$0xf]
  %v35 = vld [vmem:[%s0 + $0x30] sm:$0xff]
  %v36 = vld [vmem:[%s0 + $0x38] sm:$0xf]
  %v37 = vld [vmem:[%s0 + $0x3c] sm:$0xff]
  %v38 = vld [vmem:[%s0 + $0x44] sm:$0xf]
  %v39 = vld [vmem:[%s0 + $0x48] sm:$0xff]
  %v40 = vld [vmem:[%s0 + $0x50] sm:$0xf]
  %v41 = vld [vmem:[%s0 + $0x54] sm:$0xff]
  %v42 = vld [vmem:[%s0 + $0x5c] sm:$0xf]
  %v43 = vld [vmem:[%s0 + $0x60] sm:$0xff]
  %v44 = vld [vmem:[%s0 + $0x68] sm:$0xf]
  %v45 = vld [vmem:[%s0 + $0x6c] sm:$0xff]
  %v46 = vld [vmem:[%s0 + $0x74] sm:$0xf]
  %v47 = vld [vmem:[%s0 + $0x78] sm:$0xff]
  %v48 = vld [vmem:[%s0 + $0x80] sm:$0xf]
  %v49 = vld [vmem:[%s0 + $0x84] sm:$0xff]
  %v50 = vld [vmem:[%s0 + $0x8c] sm:$0xf]
  %v51 = vld [vmem:[%s0 + $0x90] sm:$0xff]
  %v52 = vld [vmem:[%s0 + $0x98] sm:$0xf]
  %v53 = vld [vmem:[%s0 + $0x9c] sm:$0xff]
  %v54 = vld [vmem:[%s0 + $0xa4] sm:$0xf]
  %v55 = vld [vmem:[%s0 + $0xa8] sm:$0xff]
  %v56 = vld [vmem:[%s0 + $0xb0] sm:$0xf]
  %v57 = vld [vmem:[%s0 + $0xb4] sm:$0xff]
  %v58 = vld [vmem:[%s0 + $0xbc] sm:$0xf]
  %v59 = vld [vmem:[%s0 + $0xc0] sm:$0xff]
  %v60 = vld [vmem:[%s0 + $0xc8] sm:$0xf]
  %v61 = vld [vmem:[%s0 + $0xcc] sm:$0xff]
  %v62 = vld [vmem:[%s0 + $0xd4] sm:$0xf]
  %v63 = vld [vmem:[%s0 + $0xd8] sm:$0xff]
  %v64 = vld [vmem:[%s0 + $0xe0] sm:$0xf]
  %v65 = vld [vmem:[%s0 + $0xe4] sm:$0xff]
  %v66 = vld [vmem:[%s0 + $0xec] sm:$0xf]
  %v67 = vld [vmem:[%s0 + $0xf0] sm:$0xff]
  %v68 = vld [vmem:[%s0 + $0xf8] sm:$0xf]
  %v69 = vld [vmem:[%s0 + $0xfc] sm:$0xff]
  %v70 = vld [vmem:[%s0 + $0x104] sm:$0xf]
  %v71 = vld [vmem:[%s0 + $0x108] sm:$0xff]
  %v72 = vld [vmem:[%s0 + $0x110] sm:$0xf]
  %v73 = vld [vmem:[%s0 + $0x114] sm:$0xff]
  %v74 = vld [vmem:[%s0 + $0x11c] sm:$0xf]
  %v75 = vld [vmem:[%s0 + $0x120] sm:$0xff]
  %v76 = vld [vmem:[%s0 + $0x128] sm:$0xf]
  %v77 = vld [vmem:[%s0 + $0x12c] sm:$0xff]
  %v78 = vld [vmem:[%s0 + $0x134] sm:$0xf]
  %v79 = vld [vmem:[%s0 + $0x138] sm:$0xff]
  %v80 = vld [vmem:[%s0 + $0x140] sm:$0xf]
  %v81 = vld [vmem:[%s0 + $0x144] sm:$0xff]
  %v82 = vld [vmem:[%s0 + $0x14c] sm:$0xf]
  %v83 = vld [vmem:[%s0 + $0x150] sm:$0xff]
  %v84 = vld [vmem:[%s0 + $0x158] sm:$0xf]
  %v85 = vld [vmem:[%s0 + $0x15c] sm:$0xff]
  %v86 = vld [vmem:[%s0 + $0x164] sm:$0xf]
  %v87 = vld [vmem:[%s0 + $0x168] sm:$0xff]
  %v88 = vld [vmem:[%s0 + $0x170] sm:$0xf]
  %v89 = vld [vmem:[%s0 + $0x174] sm:$0xff]
  %v90 = vld [vmem:[%s0 + $0x17c] sm:$0xf]
  %v91 = vld [vmem:[%s0 + $0x180] sm:$0xff]
  %v92 = vld [vmem:[%s0 + $0x188] sm:$0xf]
  %v93 = vld [vmem:[%s0 + $0x18c] sm:$0xff]
  %v94 = vld [vmem:[%s0 + $0x194] sm:$0xf]
  %v95 = vld [vmem:[%s0 + $0x198] sm:$0xff]
  %v96 = vld [vmem:[%s0 + $0x1a0] sm:$0xf]
  %v97 = vld [vmem:[%s0 + $0x1a4] sm:$0xff]
  %v98 = vld [vmem:[%s0 + $0x1ac] sm:$0xf]
  %v99 = vld [vmem:[%s0 + $0x1b0] sm:$0xff]
  %v100 = vld [vmem:[%s0 + $0x1b8] sm:$0xf]
  %v101 = vld [vmem:[%s0 + $0x1bc] sm:$0xff]
  %v102 = vld [vmem:[%s0 + $0x1c4] sm:$0xf]
  %v103 = vld [vmem:[%s0 + $0x1c8] sm:$0xff]
  %v104 = vld [vmem:[%s0 + $0x1d0] sm:$0xf]
  %v105 = vld [vmem:[%s0 + $0x1d4] sm:$0xff]
  %v106 = vld [vmem:[%s0 + $0x1dc] sm:$0xf]
  %v107 = vld [vmem:[%s0 + $0x1e0] sm:$0xff]
  %v108 = vld [vmem:[%s0 + $0x1e8] sm:$0xf]
  %v109 = vld [vmem:[%s0 + $0x1ec] sm:$0xff]
  %v110 = vld [vmem:[%s0 + $0x1f4] sm:$0xf]
  %v111 = vld [vmem:[%s0 + $0x1f8] sm:$0xff]
  %v112 = vld [vmem:[%s0 + $0x200] sm:$0xf]
  %v113 = vld [vmem:[%s0 + $0x204] sm:$0xff]
  %v114 = vld [vmem:[%s0 + $0x20c] sm:$0xf]
  %v115 = vld [vmem:[%s0 + $0x210] sm:$0xff]
  %v116 = vld [vmem:[%s0 + $0x218] sm:$0xf]
  %v117 = vld [vmem:[%s0 + $0x21c] sm:$0xff]
  %v118 = vld [vmem:[%s0 + $0x224] sm:$0xf]
  %v119 = vld [vmem:[%s0 + $0x228] sm:$0xff]
  %v120 = vld [vmem:[%s0 + $0x230] sm:$0xf]
  %v121 = vld [vmem:[%s0 + $0x234] sm:$0xff]
  %v122 = vld [vmem:[%s0 + $0x23c] sm:$0xf]
  %v123 = vld [vmem:[%s0 + $0x240] sm:$0xff]
  %v124 = vld [vmem:[%s0 + $0x248] sm:$0xf]
  %v125 = vld [vmem:[%s0 + $0x24c] sm:$0xff]
  %v126 = vld [vmem:[%s0 + $0x254] sm:$0xf]
  %v127 = vld [vmem:[%s0 + $0x258] sm:$0xff]
  %v128 = vld [vmem:[%s0 + $0x260] sm:$0xf]
  %v129 = vld [vmem:[%s0 + $0x264] sm:$0xff]
  %v130 = vld [vmem:[%s0 + $0x26c] sm:$0xf]
  %v131 = vld [vmem:[%s0 + $0x270] sm:$0xff]
  %v132 = vld [vmem:[%s0 + $0x278] sm:$0xf]
  %v133 = vld [vmem:[%s0 + $0x27c] sm:$0xff]
  %v134 = vld [vmem:[%s0 + $0x284] sm:$0xf]
  %v135 = vld [vmem:[%s0 + $0x288] sm:$0xff]
  %v136 = vld [vmem:[%s0 + $0x290] sm:$0xf]
  %v137 = vld [vmem:[%s0 + $0x294] sm:$0xff]
  %v138 = vld [vmem:[%s0 + $0x29c] sm:$0xf]
  %v139 = vld [vmem:[%s0 + $0x2a0] sm:$0xff]
  %v140 = vld [vmem:[%s0 + $0x2a8] sm:$0xf]
  %v141 = vld [vmem:[%s0 + $0x2ac] sm:$0xff]
  %v142 = vld [vmem:[%s0 + $0x2b4] sm:$0xf]
  %v143 = vld [vmem:[%s0 + $0x2b8] sm:$0xff]
  %v144 = vld [vmem:[%s0 + $0x2c0] sm:$0xf]
  %v145 = vld [vmem:[%s0 + $0x2c4] sm:$0xff]
  %v146 = vld [vmem:[%s0 + $0x2cc] sm:$0xf]
  %v147 = vld [vmem:[%s0 + $0x2d0] sm:$0xff]
  %v148 = vld [vmem:[%s0 + $0x2d8] sm:$0xf]
  %v149 = vld [vmem:[%s0 + $0x2dc] sm:$0xff]
  %v150 = vld [vmem:[%s0 + $0x2e4] sm:$0xf]
  %v151 = vld [vmem:[%s0 + $0x2e8] sm:$0xff]
  %v152 = vld [vmem:[%s0 + $0x2f0] sm:$0xf]
  %v153 = vld [vmem:[%s0 + $0x2f4] sm:$0xff]
  %v154 = vld [vmem:[%s0 + $0x2fc] sm:$0xf]
  %v155 = vld [vmem:[%s1] sm:$0xf]
  %v156 = vld [vmem:[%s1 + $0x4] sm:$0xf]
  %v157 = vld [vmem:[%s1 + $0x8] sm:$0xf]
  %v158 = vld [vmem:[%s1 + $0xc] sm:$0xf]
  %v159 = vld [vmem:[%s1 + $0x10] sm:$0xf]
  %v160 = vld [vmem:[%s1 + $0x14] sm:$0xf]
  %v161 = vld [vmem:[%s1 + $0x18] sm:$0xf]
  %v162 = vld [vmem:[%s1 + $0x1c] sm:$0xf]
  %v163 = vld [vmem:[%s1 + $0x20] sm:$0xf]
  %v164 = vld [vmem:[%s1 + $0x24] sm:$0xf]
  %v165 = vld [vmem:[%s1 + $0x28] sm:$0xf]
  %v166 = vld [vmem:[%s1 + $0x2c] sm:$0xf]
  %v167 = vld [vmem:[%s1 + $0x30] sm:$0xf]
  %v168 = vld [vmem:[%s1 + $0x34] sm:$0xf]
  %v169 = vld [vmem:[%s1 + $0x38] sm:$0xf]
  %v170 = vld [vmem:[%s1 + $0x3c] sm:$0xf]
  %v171 = vld [vmem:[%s1 + $0x40] sm:$0xf]
  %v172 = vld [vmem:[%s1 + $0x44] sm:$0xf]
  %v173 = vld [vmem:[%s1 + $0x48] sm:$0xf]
  %v174 = vld [vmem:[%s1 + $0x4c] sm:$0xf]
  %v175 = vld [vmem:[%s1 + $0x50] sm:$0xf]
  %v176 = vld [vmem:[%s1 + $0x54] sm:$0xf]
  %v177 = vld [vmem:[%s1 + $0x58] sm:$0xf]
  %v178 = vld [vmem:[%s1 + $0x5c] sm:$0xf]
  %v179 = vld [vmem:[%s1 + $0x60] sm:$0xf]
  %v180 = vld [vmem:[%s1 + $0x64] sm:$0xf]
  %v181 = vld [vmem:[%s1 + $0x68] sm:$0xf]
  %v182 = vld [vmem:[%s1 + $0x6c] sm:$0xf]
  %v183 = vld [vmem:[%s1 + $0x70] sm:$0xf]
  %v184 = vld [vmem:[%s1 + $0x74] sm:$0xf]
  %v185 = vld [vmem:[%s1 + $0x78] sm:$0xf]
  %v186 = vld [vmem:[%s1 + $0x7c] sm:$0xf]
  %v187 = vld [vmem:[%s1 + $0x80] sm:$0xf]
  %v188 = vld [vmem:[%s1 + $0x84] sm:$0xf]
  %v189 = vld [vmem:[%s1 + $0x88] sm:$0xf]
  %v190 = vld [vmem:[%s1 + $0x8c] sm:$0xf]
  %v191 = vld [vmem:[%s1 + $0x90] sm:$0xf]
  %v192 = vld [vmem:[%s1 + $0x94] sm:$0xf]
  %v193 = vld [vmem:[%s1 + $0x98] sm:$0xf]
  %v194 = vld [vmem:[%s1 + $0x9c] sm:$0xf]
  %v195 = vld [vmem:[%s1 + $0xa0] sm:$0xf]
  %v196 = vld [vmem:[%s1 + $0xa4] sm:$0xf]
  %v197 = vld [vmem:[%s1 + $0xa8] sm:$0xf]
  %v198 = vld [vmem:[%s1 + $0xac] sm:$0xf]
  %v199 = vld [vmem:[%s1 + $0xb0] sm:$0xf]
  %v200 = vld [vmem:[%s1 + $0xb4] sm:$0xf]
  %v201 = vld [vmem:[%s1 + $0xb8] sm:$0xf]
  %v202 = vld [vmem:[%s1 + $0xbc] sm:$0xf]
  %v203 = vld [vmem:[%s6] sm:$0x1]
  %v204 = vlaneseq
  %v205 = vshrl.u32 %v204, 7
  %v206 = vsub.s32 0, %v205
  %v207 = vrot.slane %v203, %v206
  %v336 = vunpack.c.l.b16 %v27
  %v337 = vunpack.c.h.b16 %v27
  %v338 = vunpack.c.l.b16 %v28
  %v339 = vunpack.c.l.b16 %v29
  %v340 = vunpack.c.h.b16 %v29
  %v341 = vunpack.c.l.b16 %v30
  %v342 = vunpack.c.l.b16 %v31
  %v343 = vunpack.c.h.b16 %v31
  %v344 = vunpack.c.l.b16 %v32
  %v345 = vunpack.c.l.b16 %v33
  %v346 = vunpack.c.h.b16 %v33
  %v347 = vunpack.c.l.b16 %v34
  %v348 = vunpack.c.l.b16 %v35
  %v349 = vunpack.c.h.b16 %v35
  %v350 = vunpack.c.l.b16 %v36
  %v351 = vunpack.c.l.b16 %v37
  %v352 = vunpack.c.h.b16 %v37
  %v353 = vunpack.c.l.b16 %v38
  %v354 = vunpack.c.l.b16 %v39
  %v355 = vunpack.c.h.b16 %v39
  %v356 = vunpack.c.l.b16 %v40
  %v357 = vunpack.c.l.b16 %v41
  %v358 = vunpack.c.h.b16 %v41
  %v359 = vunpack.c.l.b16 %v42
  %v360 = vunpack.c.l.b16 %v43
  %v361 = vunpack.c.h.b16 %v43
  %v362 = vunpack.c.l.b16 %v44
  %v363 = vunpack.c.l.b16 %v45
  %v364 = vunpack.c.h.b16 %v45
  %v365 = vunpack.c.l.b16 %v46
  %v366 = vunpack.c.l.b16 %v47
  %v367 = vunpack.c.h.b16 %v47
  %v368 = vunpack.c.l.b16 %v48
  %v369 = vunpack.c.l.b16 %v49
  %v370 = vunpack.c.h.b16 %v49
  %v371 = vunpack.c.l.b16 %v50
  %v372 = vunpack.c.l.b16 %v51
  %v373 = vunpack.c.h.b16 %v51
  %v374 = vunpack.c.l.b16 %v52
  %v375 = vunpack.c.l.b16 %v53
  %v376 = vunpack.c.h.b16 %v53
  %v377 = vunpack.c.l.b16 %v54
  %v378 = vunpack.c.l.b16 %v55
  %v379 = vunpack.c.h.b16 %v55
  %v380 = vunpack.c.l.b16 %v56
  %v381 = vunpack.c.l.b16 %v57
  %v382 = vunpack.c.h.b16 %v57
  %v383 = vunpack.c.l.b16 %v58
  %v384 = vunpack.c.l.b16 %v59
  %v385 = vunpack.c.h.b16 %v59
  %v386 = vunpack.c.l.b16 %v60
  %v387 = vunpack.c.l.b16 %v61
  %v388 = vunpack.c.h.b16 %v61
  %v389 = vunpack.c.l.b16 %v62
  %v390 = vunpack.c.l.b16 %v63
  %v391 = vunpack.c.h.b16 %v63
  %v392 = vunpack.c.l.b16 %v64
  %v393 = vunpack.c.l.b16 %v65
  %v394 = vunpack.c.h.b16 %v65
  %v395 = vunpack.c.l.b16 %v66
  %v396 = vunpack.c.l.b16 %v67
  %v397 = vunpack.c.h.b16 %v67
  %v398 = vunpack.c.l.b16 %v68
  %v399 = vunpack.c.l.b16 %v69
  %v400 = vunpack.c.h.b16 %v69
  %v401 = vunpack.c.l.b16 %v70
  %v402 = vunpack.c.l.b16 %v71
  %v403 = vunpack.c.h.b16 %v71
  %v404 = vunpack.c.l.b16 %v72
  %v405 = vunpack.c.l.b16 %v73
  %v406 = vunpack.c.h.b16 %v73
  %v407 = vunpack.c.l.b16 %v74
  %v408 = vunpack.c.l.b16 %v75
  %v409 = vunpack.c.h.b16 %v75
  %v410 = vunpack.c.l.b16 %v76
  %v411 = vunpack.c.l.b16 %v77
  %v412 = vunpack.c.h.b16 %v77
  %v413 = vunpack.c.l.b16 %v78
  %v414 = vunpack.c.l.b16 %v79
  %v415 = vunpack.c.h.b16 %v79
  %v416 = vunpack.c.l.b16 %v80
  %v417 = vunpack.c.l.b16 %v81
  %v418 = vunpack.c.h.b16 %v81
  %v419 = vunpack.c.l.b16 %v82
  %v420 = vunpack.c.l.b16 %v83
  %v421 = vunpack.c.h.b16 %v83
  %v422 = vunpack.c.l.b16 %v84
  %v423 = vunpack.c.l.b16 %v85
  %v424 = vunpack.c.h.b16 %v85
  %v425 = vunpack.c.l.b16 %v86
  %v426 = vunpack.c.l.b16 %v87
  %v427 = vunpack.c.h.b16 %v87
  %v428 = vunpack.c.l.b16 %v88
  %v429 = vunpack.c.l.b16 %v89
  %v430 = vunpack.c.h.b16 %v89
  %v431 = vunpack.c.l.b16 %v90
  %v432 = vunpack.c.l.b16 %v91
  %v433 = vunpack.c.h.b16 %v91
  %v434 = vunpack.c.l.b16 %v92
  %v435 = vunpack.c.l.b16 %v93
  %v436 = vunpack.c.h.b16 %v93
  %v437 = vunpack.c.l.b16 %v94
  %v438 = vunpack.c.l.b16 %v95
  %v439 = vunpack.c.h.b16 %v95
  %v440 = vunpack.c.l.b16 %v96
  %v441 = vunpack.c.l.b16 %v97
  %v442 = vunpack.c.h.b16 %v97
  %v443 = vunpack.c.l.b16 %v98
  %v444 = vunpack.c.l.b16 %v99
  %v445 = vunpack.c.h.b16 %v99
  %v446 = vunpack.c.l.b16 %v100
  %v447 = vunpack.c.l.b16 %v101
  %v448 = vunpack.c.h.b16 %v101
  %v449 = vunpack.c.l.b16 %v102
  %v450 = vunpack.c.l.b16 %v103
  %v451 = vunpack.c.h.b16 %v103
  %v452 = vunpack.c.l.b16 %v104
  %v453 = vunpack.c.l.b16 %v105
  %v454 = vunpack.c.h.b16 %v105
  %v455 = vunpack.c.l.b16 %v106
  %v456 = vunpack.c.l.b16 %v107
  %v457 = vunpack.c.h.b16 %v107
  %v458 = vunpack.c.l.b16 %v108
  %v459 = vunpack.c.l.b16 %v109
  %v460 = vunpack.c.h.b16 %v109
  %v461 = vunpack.c.l.b16 %v110
  %v462 = vunpack.c.l.b16 %v111
  %v463 = vunpack.c.h.b16 %v111
  %v464 = vunpack.c.l.b16 %v112
  %v465 = vunpack.c.l.b16 %v113
  %v466 = vunpack.c.h.b16 %v113
  %v467 = vunpack.c.l.b16 %v114
  %v468 = vunpack.c.l.b16 %v115
  %v469 = vunpack.c.h.b16 %v115
  %v470 = vunpack.c.l.b16 %v116
  %v471 = vunpack.c.l.b16 %v117
  %v472 = vunpack.c.h.b16 %v117
  %v473 = vunpack.c.l.b16 %v118
  %v474 = vunpack.c.l.b16 %v119
  %v475 = vunpack.c.h.b16 %v119
  %v476 = vunpack.c.l.b16 %v120
  %v477 = vunpack.c.l.b16 %v121
  %v478 = vunpack.c.h.b16 %v121
  %v479 = vunpack.c.l.b16 %v122
  %v480 = vunpack.c.l.b16 %v123
  %v481 = vunpack.c.h.b16 %v123
  %v482 = vunpack.c.l.b16 %v124
  %v483 = vunpack.c.l.b16 %v125
  %v484 = vunpack.c.h.b16 %v125
  %v485 = vunpack.c.l.b16 %v126
  %v486 = vunpack.c.l.b16 %v127
  %v487 = vunpack.c.h.b16 %v127
  %v488 = vunpack.c.l.b16 %v128
  %v489 = vunpack.c.l.b16 %v129
  %v490 = vunpack.c.h.b16 %v129
  %v491 = vunpack.c.l.b16 %v130
  %v492 = vunpack.c.l.b16 %v131
  %v493 = vunpack.c.h.b16 %v131
  %v494 = vunpack.c.l.b16 %v132
  %v495 = vunpack.c.l.b16 %v133
  %v496 = vunpack.c.h.b16 %v133
  %v497 = vunpack.c.l.b16 %v134
  %v498 = vunpack.c.l.b16 %v135
  %v499 = vunpack.c.h.b16 %v135
  %v500 = vunpack.c.l.b16 %v136
  %v501 = vunpack.c.l.b16 %v137
  %v502 = vunpack.c.h.b16 %v137
  %v503 = vunpack.c.l.b16 %v138
  %v504 = vunpack.c.l.b16 %v139
  %v505 = vunpack.c.h.b16 %v139
  %v506 = vunpack.c.l.b16 %v140
  %v507 = vunpack.c.l.b16 %v141
  %v508 = vunpack.c.h.b16 %v141
  %v509 = vunpack.c.l.b16 %v142
  %v510 = vunpack.c.l.b16 %v143
  %v511 = vunpack.c.h.b16 %v143
  %v512 = vunpack.c.l.b16 %v144
  %v513 = vunpack.c.l.b16 %v145
  %v514 = vunpack.c.h.b16 %v145
  %v515 = vunpack.c.l.b16 %v146
  %v516 = vunpack.c.l.b16 %v147
  %v517 = vunpack.c.h.b16 %v147
  %v518 = vunpack.c.l.b16 %v148
  %v519 = vunpack.c.l.b16 %v149
  %v520 = vunpack.c.h.b16 %v149
  %v521 = vunpack.c.l.b16 %v150
  %v522 = vunpack.c.l.b16 %v151
  %v523 = vunpack.c.h.b16 %v151
  %v524 = vunpack.c.l.b16 %v152
  %v525 = vunpack.c.l.b16 %v153
  %v526 = vunpack.c.h.b16 %v153
  %v527 = vunpack.c.l.b16 %v154
  %v528 = vpack.c.b16 %v339, %v336
  %v529 = vpack.c.b16 %v340, %v337
  %v530 = vpack.c.b16 %v341, %v338
  %v531 = vpack.c.b16 %v345, %v342
  %v532 = vpack.c.b16 %v346, %v343
  %v533 = vpack.c.b16 %v347, %v344
  %v534 = vpack.c.b16 %v351, %v348
  %v535 = vpack.c.b16 %v352, %v349
  %v536 = vpack.c.b16 %v353, %v350
  %v537 = vpack.c.b16 %v357, %v354
  %v538 = vpack.c.b16 %v358, %v355
  %v539 = vpack.c.b16 %v359, %v356
  %v540 = vpack.c.b16 %v363, %v360
  %v541 = vpack.c.b16 %v364, %v361
  %v542 = vpack.c.b16 %v365, %v362
  %v543 = vpack.c.b16 %v369, %v366
  %v544 = vpack.c.b16 %v370, %v367
  %v545 = vpack.c.b16 %v371, %v368
  %v546 = vpack.c.b16 %v375, %v372
  %v547 = vpack.c.b16 %v376, %v373
  %v548 = vpack.c.b16 %v377, %v374
  %v549 = vpack.c.b16 %v381, %v378
  %v550 = vpack.c.b16 %v382, %v379
  %v551 = vpack.c.b16 %v383, %v380
  %v552 = vpack.c.b16 %v387, %v384
  %v553 = vpack.c.b16 %v388, %v385
  %v554 = vpack.c.b16 %v389, %v386
  %v555 = vpack.c.b16 %v393, %v390
  %v556 = vpack.c.b16 %v394, %v391
  %v557 = vpack.c.b16 %v395, %v392
  %v558 = vpack.c.b16 %v399, %v396
  %v559 = vpack.c.b16 %v400, %v397
  %v560 = vpack.c.b16 %v401, %v398
  %v561 = vpack.c.b16 %v405, %v402
  %v562 = vpack.c.b16 %v406, %v403
  %v563 = vpack.c.b16 %v407, %v404
  %v564 = vpack.c.b16 %v411, %v408
  %v565 = vpack.c.b16 %v412, %v409
  %v566 = vpack.c.b16 %v413, %v410
  %v567 = vpack.c.b16 %v417, %v414
  %v568 = vpack.c.b16 %v418, %v415
  %v569 = vpack.c.b16 %v419, %v416
  %v570 = vpack.c.b16 %v423, %v420
  %v571 = vpack.c.b16 %v424, %v421
  %v572 = vpack.c.b16 %v425, %v422
  %v573 = vpack.c.b16 %v429, %v426
  %v574 = vpack.c.b16 %v430, %v427
  %v575 = vpack.c.b16 %v431, %v428
  %v576 = vpack.c.b16 %v435, %v432
  %v577 = vpack.c.b16 %v436, %v433
  %v578 = vpack.c.b16 %v437, %v434
  %v579 = vpack.c.b16 %v441, %v438
  %v580 = vpack.c.b16 %v442, %v439
  %v581 = vpack.c.b16 %v443, %v440
  %v582 = vpack.c.b16 %v447, %v444
  %v583 = vpack.c.b16 %v448, %v445
  %v584 = vpack.c.b16 %v449, %v446
  %v585 = vpack.c.b16 %v453, %v450
  %v586 = vpack.c.b16 %v454, %v451
  %v587 = vpack.c.b16 %v455, %v452
  %v588 = vpack.c.b16 %v459, %v456
  %v589 = vpack.c.b16 %v460, %v457
  %v590 = vpack.c.b16 %v461, %v458
  %v591 = vpack.c.b16 %v465, %v462
  %v592 = vpack.c.b16 %v466, %v463
  %v593 = vpack.c.b16 %v467, %v464
  %v594 = vpack.c.b16 %v471, %v468
  %v595 = vpack.c.b16 %v472, %v469
  %v596 = vpack.c.b16 %v473, %v470
  %v597 = vpack.c.b16 %v477, %v474
  %v598 = vpack.c.b16 %v478, %v475
  %v599 = vpack.c.b16 %v479, %v476
  %v600 = vpack.c.b16 %v483, %v480
  %v601 = vpack.c.b16 %v484, %v481
  %v602 = vpack.c.b16 %v485, %v482
  %v603 = vpack.c.b16 %v489, %v486
  %v604 = vpack.c.b16 %v490, %v487
  %v605 = vpack.c.b16 %v491, %v488
  %v606 = vpack.c.b16 %v495, %v492
  %v607 = vpack.c.b16 %v496, %v493
  %v608 = vpack.c.b16 %v497, %v494
  %v609 = vpack.c.b16 %v501, %v498
  %v610 = vpack.c.b16 %v502, %v499
  %v611 = vpack.c.b16 %v503, %v500
  %v612 = vpack.c.b16 %v507, %v504
  %v613 = vpack.c.b16 %v508, %v505
  %v614 = vpack.c.b16 %v509, %v506
  %v615 = vpack.c.b16 %v513, %v510
  %v616 = vpack.c.b16 %v514, %v511
  %v617 = vpack.c.b16 %v515, %v512
  %v618 = vpack.c.b16 %v519, %v516
  %v619 = vpack.c.b16 %v520, %v517
  %v620 = vpack.c.b16 %v521, %v518
  %v621 = vpack.c.b16 %v525, %v522
  %v622 = vpack.c.b16 %v526, %v523
  %v623 = vpack.c.b16 %v527, %v524
  %v768 = vunpack.c.l.b16 %v155
  %v769 = vunpack.c.l.b16 %v156
  %v770 = vunpack.c.l.b16 %v157
  %v771 = vunpack.c.l.b16 %v158
  %v772 = vunpack.c.l.b16 %v159
  %v773 = vunpack.c.l.b16 %v160
  %v774 = vunpack.c.l.b16 %v161
  %v775 = vunpack.c.l.b16 %v162
  %v776 = vunpack.c.l.b16 %v163
  %v777 = vunpack.c.l.b16 %v164
  %v778 = vunpack.c.l.b16 %v165
  %v779 = vunpack.c.l.b16 %v166
  %v780 = vunpack.c.l.b16 %v167
  %v781 = vunpack.c.l.b16 %v168
  %v782 = vunpack.c.l.b16 %v169
  %v783 = vunpack.c.l.b16 %v170
  %v784 = vunpack.c.l.b16 %v171
  %v785 = vunpack.c.l.b16 %v172
  %v786 = vunpack.c.l.b16 %v173
  %v787 = vunpack.c.l.b16 %v174
  %v788 = vunpack.c.l.b16 %v175
  %v789 = vunpack.c.l.b16 %v176
  %v790 = vunpack.c.l.b16 %v177
  %v791 = vunpack.c.l.b16 %v178
  %v792 = vunpack.c.l.b16 %v179
  %v793 = vunpack.c.l.b16 %v180
  %v794 = vunpack.c.l.b16 %v181
  %v795 = vunpack.c.l.b16 %v182
  %v796 = vunpack.c.l.b16 %v183
  %v797 = vunpack.c.l.b16 %v184
  %v798 = vunpack.c.l.b16 %v185
  %v799 = vunpack.c.l.b16 %v186
  %v800 = vunpack.c.l.b16 %v187
  %v801 = vunpack.c.l.b16 %v188
  %v802 = vunpack.c.l.b16 %v189
  %v803 = vunpack.c.l.b16 %v190
  %v804 = vunpack.c.l.b16 %v191
  %v805 = vunpack.c.l.b16 %v192
  %v806 = vunpack.c.l.b16 %v193
  %v807 = vunpack.c.l.b16 %v194
  %v808 = vunpack.c.l.b16 %v195
  %v809 = vunpack.c.l.b16 %v196
  %v810 = vunpack.c.l.b16 %v197
  %v811 = vunpack.c.l.b16 %v198
  %v812 = vunpack.c.l.b16 %v199
  %v813 = vunpack.c.l.b16 %v200
  %v814 = vunpack.c.l.b16 %v201
  %v815 = vunpack.c.l.b16 %v202
  %v816 = vpack.c.b16 %v769, %v768
  %v817 = vpack.c.b16 %v771, %v770
  %v818 = vpack.c.b16 %v773, %v772
  %v819 = vpack.c.b16 %v775, %v774
  %v820 = vpack.c.b16 %v777, %v776
  %v821 = vpack.c.b16 %v779, %v778
  %v822 = vpack.c.b16 %v781, %v780
  %v823 = vpack.c.b16 %v783, %v782
  %v824 = vpack.c.b16 %v785, %v784
  %v825 = vpack.c.b16 %v787, %v786
  %v826 = vpack.c.b16 %v789, %v788
  %v827 = vpack.c.b16 %v791, %v790
  %v828 = vpack.c.b16 %v793, %v792
  %v829 = vpack.c.b16 %v795, %v794
  %v830 = vpack.c.b16 %v797, %v796
  %v831 = vpack.c.b16 %v799, %v798
  %v832 = vpack.c.b16 %v801, %v800
  %v833 = vpack.c.b16 %v803, %v802
  %v834 = vpack.c.b16 %v805, %v804
  %v835 = vpack.c.b16 %v807, %v806
  %v836 = vpack.c.b16 %v809, %v808
  %v837 = vpack.c.b16 %v811, %v810
  %v838 = vpack.c.b16 %v813, %v812
  %v839 = vpack.c.b16 %v815, %v814
  %864 = vmatprep.subr.bf16.mxu0 0
  %865 = vmatpush1.bf16.msra.mxu0 %v816
  %866 = vmatprep.subr.bf16.mxu0 0
  %867 = vmatpush1.bf16.msra.mxu0 %v817
  %868 = vmatprep.subr.bf16.mxu0 0
  %869 = vmatpush1.bf16.msra.mxu0 %v818
  %870 = vmatprep.subr.bf16.mxu0 0
  %871 = vmatpush1.bf16.msra.mxu0 %v819
  %872 = vmatprep.subr.bf16.mxu0 0
  %873 = vmatpush1.bf16.msra.mxu0 %v820
  %874 = vmatprep.subr.bf16.mxu0 0
  %875 = vmatpush1.bf16.msra.mxu0 %v821
  %876 = vmatprep.subr.bf16.mxu0 0
  %877 = vmatpush1.bf16.msra.mxu0 %v822
  %878 = vmatprep.subr.bf16.mxu0 0
  %879 = vmatpush1.bf16.msra.mxu0 %v823
  %880 = vmatprep.subr.bf16.mxu0 0
  %881 = vmatpush1.bf16.msra.mxu0 %v824
  %882 = vmatprep.subr.bf16.mxu0 0
  %883 = vmatpush1.bf16.msra.mxu0 %v825
  %884 = vmatprep.subr.bf16.mxu0 0
  %885 = vmatpush1.bf16.msra.mxu0 %v826
  %886 = vmatprep.subr.bf16.mxu0 0
  %887 = vmatpush1.bf16.msra.mxu0 %v827
  %888 = vmatprep.subr.bf16.mxu0 0
  %889 = vmatpush1.bf16.msra.mxu0 %v828
  %890 = vmatprep.subr.bf16.mxu0 0
  %891 = vmatpush1.bf16.msra.mxu0 %v829
  %892 = vmatprep.subr.bf16.mxu0 0
  %893 = vmatpush1.bf16.msra.mxu0 %v830
  %894 = vmatprep.subr.bf16.mxu0 0
  %895 = vmatpush1.bf16.msra.mxu0 %v831
  %896 = vmatprep.mubr.bf16.mxu0 %v529
  %897 = vmatmul.mubr.bf16.gmra.mrb[0].mxu0 %v528
  %v898 = vpop.f32.mrb[0].mxu0
  %v899 = vadd.f32 %v207, %v898
  %v900 = vpop.f32.mrb[0].mxu0
  %v901 = vpop.f32.mrb[0].mxu0
  %v902 = vadd.f32 %v207, %v901
  %v903 = vpop.f32.mrb[0].mxu0
  %904 = vmatprep.mubr.bf16.mxu0 %v532
  %905 = vmatmul.mubr.bf16.gmra.mrb[0].mxu0 %v531
  %v906 = vpop.f32.mrb[0].mxu0
  %v907 = vadd.f32 %v207, %v906
  %v908 = vpop.f32.mrb[0].mxu0
  %v909 = vpop.f32.mrb[0].mxu0
  %v910 = vadd.f32 %v207, %v909
  %v911 = vpop.f32.mrb[0].mxu0
  %912 = vmatprep.mubr.bf16.mxu0 %v535
  %913 = vmatmul.mubr.bf16.gmra.mrb[0].mxu0 %v534
  %v914 = vpop.f32.mrb[0].mxu0
  %v915 = vadd.f32 %v207, %v914
  %v916 = vpop.f32.mrb[0].mxu0
  %v917 = vpop.f32.mrb[0].mxu0
  %v918 = vadd.f32 %v207, %v917
  %v919 = vpop.f32.mrb[0].mxu0
  %920 = vmatprep.mubr.bf16.mxu0 %v538
  %921 = vmatmul.mubr.bf16.gmra.mrb[0].mxu0 %v537
  %v922 = vpop.f32.mrb[0].mxu0
  %v923 = vadd.f32 %v207, %v922
  %v924 = vpop.f32.mrb[0].mxu0
  %v925 = vpop.f32.mrb[0].mxu0
  %v926 = vadd.f32 %v207, %v925
  %v927 = vpop.f32.mrb[0].mxu0
  %928 = vmatprep.mubr.bf16.mxu0 %v541
  %929 = vmatmul.mubr.bf16.gmra.mrb[0].mxu0 %v540
  %v930 = vpop.f32.mrb[0].mxu0
  %v931 = vadd.f32 %v207, %v930
  %v932 = vpop.f32.mrb[0].mxu0
  %v933 = vpop.f32.mrb[0].mxu0
  %v934 = vadd.f32 %v207, %v933
  %v935 = vpop.f32.mrb[0].mxu0
  %936 = vmatprep.mubr.bf16.mxu0 %v544
  %937 = vmatmul.mubr.bf16.gmra.mrb[0].mxu0 %v543
  %v938 = vpop.f32.mrb[0].mxu0
  %v939 = vadd.f32 %v207, %v938
  %v940 = vpop.f32.mrb[0].mxu0
  %v941 = vpop.f32.mrb[0].mxu0
  %v942 = vadd.f32 %v207, %v941
  %v943 = vpop.f32.mrb[0].mxu0
  %944 = vmatprep.mubr.bf16.mxu0 %v547
  %945 = vmatmul.mubr.bf16.gmra.mrb[0].mxu0 %v546
  %v946 = vpop.f32.mrb[0].mxu0
  %v947 = vadd.f32 %v207, %v946
  %v948 = vpop.f32.mrb[0].mxu0
  %v949 = vpop.f32.mrb[0].mxu0
  %v950 = vadd.f32 %v207, %v949
  %v951 = vpop.f32.mrb[0].mxu0
  %952 = vmatprep.mubr.bf16.mxu0 %v550
  %953 = vmatmul.mubr.bf16.gmra.mrb[0].mxu0 %v549
  %v954 = vpop.f32.mrb[0].mxu0
  %v955 = vadd.f32 %v207, %v954
  %v956 = vpop.f32.mrb[0].mxu0
  %v957 = vpop.f32.mrb[0].mxu0
  %v958 = vadd.f32 %v207, %v957
  %v959 = vpop.f32.mrb[0].mxu0
  %960 = vmatprep.mubr.bf16.mxu0 %v553
  %961 = vmatmul.mubr.bf16.gmra.mrb[0].mxu0 %v552
  %v962 = vpop.f32.mrb[0].mxu0
  %v963 = vadd.f32 %v207, %v962
  %v964 = vpop.f32.mrb[0].mxu0
  %v965 = vpop.f32.mrb[0].mxu0
  %v966 = vadd.f32 %v207, %v965
  %v967 = vpop.f32.mrb[0].mxu0
  %968 = vmatprep.mubr.bf16.mxu0 %v556
  %969 = vmatmul.mubr.bf16.gmra.mrb[0].mxu0 %v555
  %v970 = vpop.f32.mrb[0].mxu0
  %v971 = vadd.f32 %v207, %v970
  %v972 = vpop.f32.mrb[0].mxu0
  %v973 = vpop.f32.mrb[0].mxu0
  %v974 = vadd.f32 %v207, %v973
  %v975 = vpop.f32.mrb[0].mxu0
  %976 = vmatprep.mubr.bf16.mxu0 %v559
  %977 = vmatmul.mubr.bf16.gmra.mrb[0].mxu0 %v558
  %v978 = vpop.f32.mrb[0].mxu0
  %v979 = vadd.f32 %v207, %v978
  %v980 = vpop.f32.mrb[0].mxu0
  %v981 = vpop.f32.mrb[0].mxu0
  %v982 = vadd.f32 %v207, %v981
  %v983 = vpop.f32.mrb[0].mxu0
  %984 = vmatprep.mubr.bf16.mxu0 %v562
  %985 = vmatmul.mubr.bf16.gmra.mrb[0].mxu0 %v561
  %v986 = vpop.f32.mrb[0].mxu0
  %v987 = vadd.f32 %v207, %v986
  %v988 = vpop.f32.mrb[0].mxu0
  %v989 = vpop.f32.mrb[0].mxu0
  %v990 = vadd.f32 %v207, %v989
  %v991 = vpop.f32.mrb[0].mxu0
  %992 = vmatprep.mubr.bf16.mxu0 %v565
  %993 = vmatmul.mubr.bf16.gmra.mrb[0].mxu0 %v564
  %v994 = vpop.f32.mrb[0].mxu0
  %v995 = vadd.f32 %v207, %v994
  %v996 = vpop.f32.mrb[0].mxu0
  %v997 = vpop.f32.mrb[0].mxu0
  %v998 = vadd.f32 %v207, %v997
  %v999 = vpop.f32.mrb[0].mxu0
  %1000 = vmatprep.mubr.bf16.mxu0 %v568
  %1001 = vmatmul.mubr.bf16.gmra.mrb[0].mxu0 %v567
  %v1002 = vpop.f32.mrb[0].mxu0
  %v1003 = vadd.f32 %v207, %v1002
  %v1004 = vpop.f32.mrb[0].mxu0
  %v1005 = vpop.f32.mrb[0].mxu0
  %v1006 = vadd.f32 %v207, %v1005
  %v1007 = vpop.f32.mrb[0].mxu0
  %1008 = vmatprep.mubr.bf16.mxu0 %v571
  %1009 = vmatmul.mubr.bf16.gmra.mrb[0].mxu0 %v570
  %v1010 = vpop.f32.mrb[0].mxu0
  %v1011 = vadd.f32 %v207, %v1010
  %v1012 = vpop.f32.mrb[0].mxu0
  %v1013 = vpop.f32.mrb[0].mxu0
  %v1014 = vadd.f32 %v207, %v1013
  %v1015 = vpop.f32.mrb[0].mxu0
  %1016 = vmatprep.mubr.bf16.mxu0 %v574
  %1017 = vmatmul.mubr.bf16.gmra.mrb[0].mxu0 %v573
  %v1018 = vpop.f32.mrb[0].mxu0
  %v1019 = vadd.f32 %v207, %v1018
  %v1020 = vpop.f32.mrb[0].mxu0
  %v1021 = vpop.f32.mrb[0].mxu0
  %v1022 = vadd.f32 %v207, %v1021
  %v1023 = vpop.f32.mrb[0].mxu0
  %1024 = vmatprep.mubr.bf16.mxu0 %v577
  %1025 = vmatmul.mubr.bf16.gmra.mrb[0].mxu0 %v576
  %v1026 = vpop.f32.mrb[0].mxu0
  %v1027 = vadd.f32 %v207, %v1026
  %v1028 = vpop.f32.mrb[0].mxu0
  %v1029 = vpop.f32.mrb[0].mxu0
  %v1030 = vadd.f32 %v207, %v1029
  %v1031 = vpop.f32.mrb[0].mxu0
  %1032 = vmatprep.mubr.bf16.mxu0 %v580
  %1033 = vmatmul.mubr.bf16.gmra.mrb[0].mxu0 %v579
  %v1034 = vpop.f32.mrb[0].mxu0
  %v1035 = vadd.f32 %v207, %v1034
  %v1036 = vpop.f32.mrb[0].mxu0
  %v1037 = vpop.f32.mrb[0].mxu0
  %v1038 = vadd.f32 %v207, %v1037
  %v1039 = vpop.f32.mrb[0].mxu0
  %1040 = vmatprep.mubr.bf16.mxu0 %v583
  %1041 = vmatmul.mubr.bf16.gmra.mrb[0].mxu0 %v582
  %v1042 = vpop.f32.mrb[0].mxu0
  %v1043 = vadd.f32 %v207, %v1042
  %v1044 = vpop.f32.mrb[0].mxu0
  %v1045 = vpop.f32.mrb[0].mxu0
  %v1046 = vadd.f32 %v207, %v1045
  %v1047 = vpop.f32.mrb[0].mxu0
  %1048 = vmatprep.mubr.bf16.mxu0 %v586
  %1049 = vmatmul.mubr.bf16.gmra.mrb[0].mxu0 %v585
  %v1050 = vpop.f32.mrb[0].mxu0
  %v1051 = vadd.f32 %v207, %v1050
  %v1052 = vpop.f32.mrb[0].mxu0
  %v1053 = vpop.f32.mrb[0].mxu0
  %v1054 = vadd.f32 %v207, %v1053
  %v1055 = vpop.f32.mrb[0].mxu0
  %1056 = vmatprep.mubr.bf16.mxu0 %v589
  %1057 = vmatmul.mubr.bf16.gmra.mrb[0].mxu0 %v588
  %v1058 = vpop.f32.mrb[0].mxu0
  %v1059 = vadd.f32 %v207, %v1058
  %v1060 = vpop.f32.mrb[0].mxu0
  %v1061 = vpop.f32.mrb[0].mxu0
  %v1062 = vadd.f32 %v207, %v1061
  %v1063 = vpop.f32.mrb[0].mxu0
  %1064 = vmatprep.mubr.bf16.mxu0 %v592
  %1065 = vmatmul.mubr.bf16.gmra.mrb[0].mxu0 %v591
  %v1066 = vpop.f32.mrb[0].mxu0
  %v1067 = vadd.f32 %v207, %v1066
  %v1068 = vpop.f32.mrb[0].mxu0
  %v1069 = vpop.f32.mrb[0].mxu0
  %v1070 = vadd.f32 %v207, %v1069
  %v1071 = vpop.f32.mrb[0].mxu0
  %1072 = vmatprep.mubr.bf16.mxu0 %v595
  %1073 = vmatmul.mubr.bf16.gmra.mrb[0].mxu0 %v594
  %v1074 = vpop.f32.mrb[0].mxu0
  %v1075 = vadd.f32 %v207, %v1074
  %v1076 = vpop.f32.mrb[0].mxu0
  %v1077 = vpop.f32.mrb[0].mxu0
  %v1078 = vadd.f32 %v207, %v1077
  %v1079 = vpop.f32.mrb[0].mxu0
  %1080 = vmatprep.mubr.bf16.mxu0 %v598
  %1081 = vmatmul.mubr.bf16.gmra.mrb[0].mxu0 %v597
  %v1082 = vpop.f32.mrb[0].mxu0
  %v1083 = vadd.f32 %v207, %v1082
  %v1084 = vpop.f32.mrb[0].mxu0
  %v1085 = vpop.f32.mrb[0].mxu0
  %v1086 = vadd.f32 %v207, %v1085
  %v1087 = vpop.f32.mrb[0].mxu0
  %1088 = vmatprep.mubr.bf16.mxu0 %v601
  %1089 = vmatmul.mubr.bf16.gmra.mrb[0].mxu0 %v600
  %v1090 = vpop.f32.mrb[0].mxu0
  %v1091 = vadd.f32 %v207, %v1090
  %v1092 = vpop.f32.mrb[0].mxu0
  %v1093 = vpop.f32.mrb[0].mxu0
  %v1094 = vadd.f32 %v207, %v1093
  %v1095 = vpop.f32.mrb[0].mxu0
  %1096 = vmatprep.mubr.bf16.mxu0 %v604
  %1097 = vmatmul.mubr.bf16.gmra.mrb[0].mxu0 %v603
  %v1098 = vpop.f32.mrb[0].mxu0
  %v1099 = vadd.f32 %v207, %v1098
  %v1100 = vpop.f32.mrb[0].mxu0
  %v1101 = vpop.f32.mrb[0].mxu0
  %v1102 = vadd.f32 %v207, %v1101
  %v1103 = vpop.f32.mrb[0].mxu0
  %1104 = vmatprep.mubr.bf16.mxu0 %v607
  %1105 = vmatmul.mubr.bf16.gmra.mrb[0].mxu0 %v606
  %v1106 = vpop.f32.mrb[0].mxu0
  %v1107 = vadd.f32 %v207, %v1106
  %v1108 = vpop.f32.mrb[0].mxu0
  %v1109 = vpop.f32.mrb[0].mxu0
  %v1110 = vadd.f32 %v207, %v1109
  %v1111 = vpop.f32.mrb[0].mxu0
  %1112 = vmatprep.mubr.bf16.mxu0 %v610
  %1113 = vmatmul.mubr.bf16.gmra.mrb[0].mxu0 %v609
  %v1114 = vpop.f32.mrb[0].mxu0
  %v1115 = vadd.f32 %v207, %v1114
  %v1116 = vpop.f32.mrb[0].mxu0
  %v1117 = vpop.f32.mrb[0].mxu0
  %v1118 = vadd.f32 %v207, %v1117
  %v1119 = vpop.f32.mrb[0].mxu0
  %1120 = vmatprep.mubr.bf16.mxu0 %v613
  %1121 = vmatmul.mubr.bf16.gmra.mrb[0].mxu0 %v612
  %v1122 = vpop.f32.mrb[0].mxu0
  %v1123 = vadd.f32 %v207, %v1122
  %v1124 = vpop.f32.mrb[0].mxu0
  %v1125 = vpop.f32.mrb[0].mxu0
  %v1126 = vadd.f32 %v207, %v1125
  %v1127 = vpop.f32.mrb[0].mxu0
  %1128 = vmatprep.mubr.bf16.mxu0 %v616
  %1129 = vmatmul.mubr.bf16.gmra.mrb[0].mxu0 %v615
  %v1130 = vpop.f32.mrb[0].mxu0
  %v1131 = vadd.f32 %v207, %v1130
  %v1132 = vpop.f32.mrb[0].mxu0
  %v1133 = vpop.f32.mrb[0].mxu0
  %v1134 = vadd.f32 %v207, %v1133
  %v1135 = vpop.f32.mrb[0].mxu0
  %1136 = vmatprep.mubr.bf16.mxu0 %v619
  %1137 = vmatmul.mubr.bf16.gmra.mrb[0].mxu0 %v618
  %v1138 = vpop.f32.mrb[0].mxu0
  %v1139 = vadd.f32 %v207, %v1138
  %v1140 = vpop.f32.mrb[0].mxu0
  %v1141 = vpop.f32.mrb[0].mxu0
  %v1142 = vadd.f32 %v207, %v1141
  %v1143 = vpop.f32.mrb[0].mxu0
  %1144 = vmatprep.mubr.bf16.mxu0 %v622
  %1145 = vmatmul.mubr.bf16.gmra.mrb[0].mxu0 %v621
  %v1146 = vpop.f32.mrb[0].mxu0
  %v1147 = vadd.f32 %v207, %v1146
  %v1148 = vpop.f32.mrb[0].mxu0
  %v1149 = vpop.f32.mrb[0].mxu0
  %v1150 = vadd.f32 %v207, %v1149
  %v1151 = vpop.f32.mrb[0].mxu0
  %1152 = vdwg.mxu0
  %1153 = vmatprep.subr.bf16.mxu0 0
  %1154 = vmatpush1.bf16.msra.mxu0 %v832
  %1155 = vmatprep.subr.bf16.mxu0 0
  %1156 = vmatpush1.bf16.msra.mxu0 %v833
  %1157 = vmatprep.subr.bf16.mxu0 0
  %1158 = vmatpush1.bf16.msra.mxu0 %v834
  %1159 = vmatprep.subr.bf16.mxu0 0
  %1160 = vmatpush1.bf16.msra.mxu0 %v835
  %1161 = vmatprep.subr.bf16.mxu0 0
  %1162 = vmatpush1.bf16.msra.mxu0 %v836
  %1163 = vmatprep.subr.bf16.mxu0 0
  %1164 = vmatpush1.bf16.msra.mxu0 %v837
  %1165 = vmatprep.subr.bf16.mxu0 0
  %1166 = vmatpush1.bf16.msra.mxu0 %v838
  %1167 = vmatprep.subr.bf16.mxu0 0
  %1168 = vmatpush1.bf16.msra.mxu0 %v839
  %1169 = vmatprep.subr.bf16.mxu0 0
  %1170 = vmatpush1.bf16.msra.mxu0 0
  %1171 = vmatprep.subr.bf16.mxu0 0
  %1172 = vmatpush1.bf16.msra.mxu0 0
  %1173 = vmatprep.subr.bf16.mxu0 0
  %1174 = vmatpush1.bf16.msra.mxu0 0
  %1175 = vmatprep.subr.bf16.mxu0 0
  %1176 = vmatpush1.bf16.msra.mxu0 0
  %1177 = vmatprep.subr.bf16.mxu0 0
  %1178 = vmatpush1.bf16.msra.mxu0 0
  %1179 = vmatprep.subr.bf16.mxu0 0
  %1180 = vmatpush1.bf16.msra.mxu0 0
  %1181 = vmatprep.subr.bf16.mxu0 0
  %1182 = vmatpush1.bf16.msra.mxu0 0
  %1183 = vmatprep.subr.bf16.mxu0 0
  %1184 = vmatpush1.bf16.msra.mxu0 0
  %1185 = vmatprep.mubr.bf16.mxu0 0
  %1186 = vmatmul.mubr.bf16.gmra.mrb[0].mxu0 %v530
  %v1187 = vpop.f32.mrb[0].mxu0
  %v1188 = vadd.f32 %v899, %v1187
  %v1189 = vpop.f32.mrb[0].mxu0
  %v1190 = vpop.f32.mrb[0].mxu0
  %v1191 = vadd.f32 %v902, %v1190
  %v1192 = vpop.f32.mrb[0].mxu0
  %1193 = vmatprep.mubr.bf16.mxu0 0
  %1194 = vmatmul.mubr.bf16.gmra.mrb[0].mxu0 %v533
  %v1195 = vpop.f32.mrb[0].mxu0
  %v1196 = vadd.f32 %v907, %v1195
  %v1197 = vpop.f32.mrb[0].mxu0
  %v1198 = vpop.f32.mrb[0].mxu0
  %v1199 = vadd.f32 %v910, %v1198
  %v1200 = vpop.f32.mrb[0].mxu0
  %1201 = vmatprep.mubr.bf16.mxu0 0
  %1202 = vmatmul.mubr.bf16.gmra.mrb[0].mxu0 %v536
  %v1203 = vpop.f32.mrb[0].mxu0
  %v1204 = vadd.f32 %v915, %v1203
  %v1205 = vpop.f32.mrb[0].mxu0
  %v1206 = vpop.f32.mrb[0].mxu0
  %v1207 = vadd.f32 %v918, %v1206
  %v1208 = vpop.f32.mrb[0].mxu0
  %1209 = vmatprep.mubr.bf16.mxu0 0
  %1210 = vmatmul.mubr.bf16.gmra.mrb[0].mxu0 %v539
  %v1211 = vpop.f32.mrb[0].mxu0
  %v1212 = vadd.f32 %v923, %v1211
  %v1213 = vpop.f32.mrb[0].mxu0
  %v1214 = vpop.f32.mrb[0].mxu0
  %v1215 = vadd.f32 %v926, %v1214
  %v1216 = vpop.f32.mrb[0].mxu0
  %1217 = vmatprep.mubr.bf16.mxu0 0
  %1218 = vmatmul.mubr.bf16.gmra.mrb[0].mxu0 %v542
  %v1219 = vpop.f32.mrb[0].mxu0
  %v1220 = vadd.f32 %v931, %v1219
  %v1221 = vpop.f32.mrb[0].mxu0
  %v1222 = vpop.f32.mrb[0].mxu0
  %v1223 = vadd.f32 %v934, %v1222
  %v1224 = vpop.f32.mrb[0].mxu0
  %1225 = vmatprep.mubr.bf16.mxu0 0
  %1226 = vmatmul.mubr.bf16.gmra.mrb[0].mxu0 %v545
  %v1227 = vpop.f32.mrb[0].mxu0
  %v1228 = vadd.f32 %v939, %v1227
  %v1229 = vpop.f32.mrb[0].mxu0
  %v1230 = vpop.f32.mrb[0].mxu0
  %v1231 = vadd.f32 %v942, %v1230
  %v1232 = vpop.f32.mrb[0].mxu0
  %1233 = vmatprep.mubr.bf16.mxu0 0
  %1234 = vmatmul.mubr.bf16.gmra.mrb[0].mxu0 %v548
  %v1235 = vpop.f32.mrb[0].mxu0
  %v1236 = vadd.f32 %v947, %v1235
  %v1237 = vpop.f32.mrb[0].mxu0
  %v1238 = vpop.f32.mrb[0].mxu0
  %v1239 = vadd.f32 %v950, %v1238
  %v1240 = vpop.f32.mrb[0].mxu0
  %1241 = vmatprep.mubr.bf16.mxu0 0
  %1242 = vmatmul.mubr.bf16.gmra.mrb[0].mxu0 %v551
  %v1243 = vpop.f32.mrb[0].mxu0
  %v1244 = vadd.f32 %v955, %v1243
  %v1245 = vpop.f32.mrb[0].mxu0
  %v1246 = vpop.f32.mrb[0].mxu0
  %v1247 = vadd.f32 %v958, %v1246
  %v1248 = vpop.f32.mrb[0].mxu0
  %1249 = vmatprep.mubr.bf16.mxu0 0
  %1250 = vmatmul.mubr.bf16.gmra.mrb[0].mxu0 %v554
  %v1251 = vpop.f32.mrb[0].mxu0
  %v1252 = vadd.f32 %v963, %v1251
  %v1253 = vpop.f32.mrb[0].mxu0
  %v1254 = vpop.f32.mrb[0].mxu0
  %v1255 = vadd.f32 %v966, %v1254
  %v1256 = vpop.f32.mrb[0].mxu0
  %1257 = vmatprep.mubr.bf16.mxu0 0
  %1258 = vmatmul.mubr.bf16.gmra.mrb[0].mxu0 %v557
  %v1259 = vpop.f32.mrb[0].mxu0
  %v1260 = vadd.f32 %v971, %v1259
  %v1261 = vpop.f32.mrb[0].mxu0
  %v1262 = vpop.f32.mrb[0].mxu0
  %v1263 = vadd.f32 %v974, %v1262
  %v1264 = vpop.f32.mrb[0].mxu0
  %1265 = vmatprep.mubr.bf16.mxu0 0
  %1266 = vmatmul.mubr.bf16.gmra.mrb[0].mxu0 %v560
  %v1267 = vpop.f32.mrb[0].mxu0
  %v1268 = vadd.f32 %v979, %v1267
  %v1269 = vpop.f32.mrb[0].mxu0
  %v1270 = vpop.f32.mrb[0].mxu0
  %v1271 = vadd.f32 %v982, %v1270
  %v1272 = vpop.f32.mrb[0].mxu0
  %1273 = vmatprep.mubr.bf16.mxu0 0
  %1274 = vmatmul.mubr.bf16.gmra.mrb[0].mxu0 %v563
  %v1275 = vpop.f32.mrb[0].mxu0
  %v1276 = vadd.f32 %v987, %v1275
  %v1277 = vpop.f32.mrb[0].mxu0
  %v1278 = vpop.f32.mrb[0].mxu0
  %v1279 = vadd.f32 %v990, %v1278
  %v1280 = vpop.f32.mrb[0].mxu0
  %1281 = vmatprep.mubr.bf16.mxu0 0
  %1282 = vmatmul.mubr.bf16.gmra.mrb[0].mxu0 %v566
  %v1283 = vpop.f32.mrb[0].mxu0
  %v1284 = vadd.f32 %v995, %v1283
  %v1285 = vpop.f32.mrb[0].mxu0
  %v1286 = vpop.f32.mrb[0].mxu0
  %v1287 = vadd.f32 %v998, %v1286
  %v1288 = vpop.f32.mrb[0].mxu0
  %1289 = vmatprep.mubr.bf16.mxu0 0
  %1290 = vmatmul.mubr.bf16.gmra.mrb[0].mxu0 %v569
  %v1291 = vpop.f32.mrb[0].mxu0
  %v1292 = vadd.f32 %v1003, %v1291
  %v1293 = vpop.f32.mrb[0].mxu0
  %v1294 = vpop.f32.mrb[0].mxu0
  %v1295 = vadd.f32 %v1006, %v1294
  %v1296 = vpop.f32.mrb[0].mxu0
  %1297 = vmatprep.mubr.bf16.mxu0 0
  %1298 = vmatmul.mubr.bf16.gmra.mrb[0].mxu0 %v572
  %v1299 = vpop.f32.mrb[0].mxu0
  %v1300 = vadd.f32 %v1011, %v1299
  %v1301 = vpop.f32.mrb[0].mxu0
  %v1302 = vpop.f32.mrb[0].mxu0
  %v1303 = vadd.f32 %v1014, %v1302
  %v1304 = vpop.f32.mrb[0].mxu0
  %1305 = vmatprep.mubr.bf16.mxu0 0
  %1306 = vmatmul.mubr.bf16.gmra.mrb[0].mxu0 %v575
  %v1307 = vpop.f32.mrb[0].mxu0
  %v1308 = vadd.f32 %v1019, %v1307
  %v1309 = vpop.f32.mrb[0].mxu0
  %v1310 = vpop.f32.mrb[0].mxu0
  %v1311 = vadd.f32 %v1022, %v1310
  %v1312 = vpop.f32.mrb[0].mxu0
  %1313 = vmatprep.mubr.bf16.mxu0 0
  %1314 = vmatmul.mubr.bf16.gmra.mrb[0].mxu0 %v578
  %v1315 = vpop.f32.mrb[0].mxu0
  %v1316 = vadd.f32 %v1027, %v1315
  %v1317 = vpop.f32.mrb[0].mxu0
  %v1318 = vpop.f32.mrb[0].mxu0
  %v1319 = vadd.f32 %v1030, %v1318
  %v1320 = vpop.f32.mrb[0].mxu0
  %1321 = vmatprep.mubr.bf16.mxu0 0
  %1322 = vmatmul.mubr.bf16.gmra.mrb[0].mxu0 %v581
  %v1323 = vpop.f32.mrb[0].mxu0
  %v1324 = vadd.f32 %v1035, %v1323
  %v1325 = vpop.f32.mrb[0].mxu0
  %v1326 = vpop.f32.mrb[0].mxu0
  %v1327 = vadd.f32 %v1038, %v1326
  %v1328 = vpop.f32.mrb[0].mxu0
  %1329 = vmatprep.mubr.bf16.mxu0 0
  %1330 = vmatmul.mubr.bf16.gmra.mrb[0].mxu0 %v584
  %v1331 = vpop.f32.mrb[0].mxu0
  %v1332 = vadd.f32 %v1043, %v1331
  %v1333 = vpop.f32.mrb[0].mxu0
  %v1334 = vpop.f32.mrb[0].mxu0
  %v1335 = vadd.f32 %v1046, %v1334
  %v1336 = vpop.f32.mrb[0].mxu0
  %1337 = vmatprep.mubr.bf16.mxu0 0
  %1338 = vmatmul.mubr.bf16.gmra.mrb[0].mxu0 %v587
  %v1339 = vpop.f32.mrb[0].mxu0
  %v1340 = vadd.f32 %v1051, %v1339
  %v1341 = vpop.f32.mrb[0].mxu0
  %v1342 = vpop.f32.mrb[0].mxu0
  %v1343 = vadd.f32 %v1054, %v1342
  %v1344 = vpop.f32.mrb[0].mxu0
  %1345 = vmatprep.mubr.bf16.mxu0 0
  %1346 = vmatmul.mubr.bf16.gmra.mrb[0].mxu0 %v590
  %v1347 = vpop.f32.mrb[0].mxu0
  %v1348 = vadd.f32 %v1059, %v1347
  %v1349 = vpop.f32.mrb[0].mxu0
  %v1350 = vpop.f32.mrb[0].mxu0
  %v1351 = vadd.f32 %v1062, %v1350
  %v1352 = vpop.f32.mrb[0].mxu0
  %1353 = vmatprep.mubr.bf16.mxu0 0
  %1354 = vmatmul.mubr.bf16.gmra.mrb[0].mxu0 %v593
  %v1355 = vpop.f32.mrb[0].mxu0
  %v1356 = vadd.f32 %v1067, %v1355
  %v1357 = vpop.f32.mrb[0].mxu0
  %v1358 = vpop.f32.mrb[0].mxu0
  %v1359 = vadd.f32 %v1070, %v1358
  %v1360 = vpop.f32.mrb[0].mxu0
  %1361 = vmatprep.mubr.bf16.mxu0 0
  %1362 = vmatmul.mubr.bf16.gmra.mrb[0].mxu0 %v596
  %v1363 = vpop.f32.mrb[0].mxu0
  %v1364 = vadd.f32 %v1075, %v1363
  %v1365 = vpop.f32.mrb[0].mxu0
  %v1366 = vpop.f32.mrb[0].mxu0
  %v1367 = vadd.f32 %v1078, %v1366
  %v1368 = vpop.f32.mrb[0].mxu0
  %1369 = vmatprep.mubr.bf16.mxu0 0
  %1370 = vmatmul.mubr.bf16.gmra.mrb[0].mxu0 %v599
  %v1371 = vpop.f32.mrb[0].mxu0
  %v1372 = vadd.f32 %v1083, %v1371
  %v1373 = vpop.f32.mrb[0].mxu0
  %v1374 = vpop.f32.mrb[0].mxu0
  %v1375 = vadd.f32 %v1086, %v1374
  %v1376 = vpop.f32.mrb[0].mxu0
  %1377 = vmatprep.mubr.bf16.mxu0 0
  %1378 = vmatmul.mubr.bf16.gmra.mrb[0].mxu0 %v602
  %v1379 = vpop.f32.mrb[0].mxu0
  %v1380 = vadd.f32 %v1091, %v1379
  %v1381 = vpop.f32.mrb[0].mxu0
  %v1382 = vpop.f32.mrb[0].mxu0
  %v1383 = vadd.f32 %v1094, %v1382
  %v1384 = vpop.f32.mrb[0].mxu0
  %1385 = vmatprep.mubr.bf16.mxu0 0
  %1386 = vmatmul.mubr.bf16.gmra.mrb[0].mxu0 %v605
  %v1387 = vpop.f32.mrb[0].mxu0
  %v1388 = vadd.f32 %v1099, %v1387
  %v1389 = vpop.f32.mrb[0].mxu0
  %v1390 = vpop.f32.mrb[0].mxu0
  %v1391 = vadd.f32 %v1102, %v1390
  %v1392 = vpop.f32.mrb[0].mxu0
  %1393 = vmatprep.mubr.bf16.mxu0 0
  %1394 = vmatmul.mubr.bf16.gmra.mrb[0].mxu0 %v608
  %v1395 = vpop.f32.mrb[0].mxu0
  %v1396 = vadd.f32 %v1107, %v1395
  %v1397 = vpop.f32.mrb[0].mxu0
  %v1398 = vpop.f32.mrb[0].mxu0
  %v1399 = vadd.f32 %v1110, %v1398
  %v1400 = vpop.f32.mrb[0].mxu0
  %1401 = vmatprep.mubr.bf16.mxu0 0
  %1402 = vmatmul.mubr.bf16.gmra.mrb[0].mxu0 %v611
  %v1403 = vpop.f32.mrb[0].mxu0
  %v1404 = vadd.f32 %v1115, %v1403
  %v1405 = vpop.f32.mrb[0].mxu0
  %v1406 = vpop.f32.mrb[0].mxu0
  %v1407 = vadd.f32 %v1118, %v1406
  %v1408 = vpop.f32.mrb[0].mxu0
  %1409 = vmatprep.mubr.bf16.mxu0 0
  %1410 = vmatmul.mubr.bf16.gmra.mrb[0].mxu0 %v614
  %v1411 = vpop.f32.mrb[0].mxu0
  %v1412 = vadd.f32 %v1123, %v1411
  %v1413 = vpop.f32.mrb[0].mxu0
  %v1414 = vpop.f32.mrb[0].mxu0
  %v1415 = vadd.f32 %v1126, %v1414
  %v1416 = vpop.f32.mrb[0].mxu0
  %1417 = vmatprep.mubr.bf16.mxu0 0
  %1418 = vmatmul.mubr.bf16.gmra.mrb[0].mxu0 %v617
  %v1419 = vpop.f32.mrb[0].mxu0
  %v1420 = vadd.f32 %v1131, %v1419
  %v1421 = vpop.f32.mrb[0].mxu0
  %v1422 = vpop.f32.mrb[0].mxu0
  %v1423 = vadd.f32 %v1134, %v1422
  %v1424 = vpop.f32.mrb[0].mxu0
  %1425 = vmatprep.mubr.bf16.mxu0 0
  %1426 = vmatmul.mubr.bf16.gmra.mrb[0].mxu0 %v620
  %v1427 = vpop.f32.mrb[0].mxu0
  %v1428 = vadd.f32 %v1139, %v1427
  %v1429 = vpop.f32.mrb[0].mxu0
  %v1430 = vpop.f32.mrb[0].mxu0
  %v1431 = vadd.f32 %v1142, %v1430
  %v1432 = vpop.f32.mrb[0].mxu0
  %1433 = vmatprep.mubr.bf16.mxu0 0
  %1434 = vmatmul.mubr.bf16.gmra.mrb[0].mxu0 %v623
  %v1435 = vpop.f32.mrb[0].mxu0
  %v1436 = vadd.f32 %v1147, %v1435
  %v1437 = vpop.f32.mrb[0].mxu0
  %v1438 = vpop.f32.mrb[0].mxu0
  %v1439 = vadd.f32 %v1150, %v1438
  %v1440 = vpop.f32.mrb[0].mxu0
  %1441 = vdwg.mxu0
  %v1442 = vpack.c.bf16 %v1191, %v1188
  %v1443 = vpack.c.bf16 %v1199, %v1196
  %v1444 = vpack.c.bf16 %v1207, %v1204
  %v1445 = vpack.c.bf16 %v1215, %v1212
  %v1446 = vpack.c.bf16 %v1223, %v1220
  %v1447 = vpack.c.bf16 %v1231, %v1228
  %v1448 = vpack.c.bf16 %v1239, %v1236
  %v1449 = vpack.c.bf16 %v1247, %v1244
  %v1450 = vpack.c.bf16 %v1255, %v1252
  %v1451 = vpack.c.bf16 %v1263, %v1260
  %v1452 = vpack.c.bf16 %v1271, %v1268
  %v1453 = vpack.c.bf16 %v1279, %v1276
  %v1454 = vpack.c.bf16 %v1287, %v1284
  %v1455 = vpack.c.bf16 %v1295, %v1292
  %v1456 = vpack.c.bf16 %v1303, %v1300
  %v1457 = vpack.c.bf16 %v1311, %v1308
  %v1458 = vpack.c.bf16 %v1319, %v1316
  %v1459 = vpack.c.bf16 %v1327, %v1324
  %v1460 = vpack.c.bf16 %v1335, %v1332
  %v1461 = vpack.c.bf16 %v1343, %v1340
  %v1462 = vpack.c.bf16 %v1351, %v1348
  %v1463 = vpack.c.bf16 %v1359, %v1356
  %v1464 = vpack.c.bf16 %v1367, %v1364
  %v1465 = vpack.c.bf16 %v1375, %v1372
  %v1466 = vpack.c.bf16 %v1383, %v1380
  %v1467 = vpack.c.bf16 %v1391, %v1388
  %v1468 = vpack.c.bf16 %v1399, %v1396
  %v1469 = vpack.c.bf16 %v1407, %v1404
  %v1470 = vpack.c.bf16 %v1415, %v1412
  %v1471 = vpack.c.bf16 %v1423, %v1420
  %v1472 = vpack.c.bf16 %v1431, %v1428
  %v1473 = vpack.c.bf16 %v1439, %v1436
  %v1474 = vld [vmem:[%s2] sm:$0xf]
  %v1475 = vld [vmem:[%s2 + $0x4] sm:$0xf]
  %v1476 = vld [vmem:[%s2 + $0x8] sm:$0xf]
  %v1477 = vld [vmem:[%s2 + $0xc] sm:$0xf]
  %v1478 = vld [vmem:[%s2 + $0x10] sm:$0xf]
  %v1479 = vld [vmem:[%s2 + $0x14] sm:$0xf]
  %v1480 = vld [vmem:[%s2 + $0x18] sm:$0xf]
  %v1481 = vld [vmem:[%s2 + $0x1c] sm:$0xf]
  %v1482 = vld [vmem:[%s2 + $0x20] sm:$0xf]
  %v1483 = vld [vmem:[%s2 + $0x24] sm:$0xf]
  %v1484 = vld [vmem:[%s2 + $0x28] sm:$0xf]
  %v1485 = vld [vmem:[%s2 + $0x2c] sm:$0xf]
  %v1486 = vld [vmem:[%s2 + $0x30] sm:$0xf]
  %v1487 = vld [vmem:[%s2 + $0x34] sm:$0xf]
  %v1488 = vld [vmem:[%s2 + $0x38] sm:$0xf]
  %v1489 = vld [vmem:[%s2 + $0x3c] sm:$0xf]
  %v1490 = vld [vmem:[%s6 + $0x1] sm:$0x1]
  %v1491 = vlaneseq
  %v1492 = vshrl.u32 %v1491, 7
  %v1493 = vsub.s32 0, %v1492
  %v1494 = vrot.slane %v1490, %v1493
  %v1511 = vunpack.c.l.b16 %v1474
  %v1512 = vunpack.c.l.b16 %v1475
  %v1513 = vunpack.c.l.b16 %v1476
  %v1514 = vunpack.c.l.b16 %v1477
  %v1515 = vunpack.c.l.b16 %v1478
  %v1516 = vunpack.c.l.b16 %v1479
  %v1517 = vunpack.c.l.b16 %v1480
  %v1518 = vunpack.c.l.b16 %v1481
  %v1519 = vunpack.c.l.b16 %v1482
  %v1520 = vunpack.c.l.b16 %v1483
  %v1521 = vunpack.c.l.b16 %v1484
  %v1522 = vunpack.c.l.b16 %v1485
  %v1523 = vunpack.c.l.b16 %v1486
  %v1524 = vunpack.c.l.b16 %v1487
  %v1525 = vunpack.c.l.b16 %v1488
  %v1526 = vunpack.c.l.b16 %v1489
  %v1527 = vpack.c.b16 %v1512, %v1511
  %v1528 = vpack.c.b16 %v1514, %v1513
  %v1529 = vpack.c.b16 %v1516, %v1515
  %v1530 = vpack.c.b16 %v1518, %v1517
  %v1531 = vpack.c.b16 %v1520, %v1519
  %v1532 = vpack.c.b16 %v1522, %v1521
  %v1533 = vpack.c.b16 %v1524, %v1523
  %v1534 = vpack.c.b16 %v1526, %v1525
  %1543 = vmatprep.subr.bf16.mxu0 0
  %1544 = vmatpush1.bf16.msra.mxu0 %v1527
  %1545 = vmatprep.subr.bf16.mxu0 0
  %1546 = vmatpush1.bf16.msra.mxu0 %v1528
  %1547 = vmatprep.subr.bf16.mxu0 0
  %1548 = vmatpush1.bf16.msra.mxu0 %v1529
  %1549 = vmatprep.subr.bf16.mxu0 0
  %1550 = vmatpush1.bf16.msra.mxu0 %v1530
  %1551 = vmatprep.subr.bf16.mxu0 0
  %1552 = vmatpush1.bf16.msra.mxu0 %v1531
  %1553 = vmatprep.subr.bf16.mxu0 0
  %1554 = vmatpush1.bf16.msra.mxu0 %v1532
  %1555 = vmatprep.subr.bf16.mxu0 0
  %1556 = vmatpush1.bf16.msra.mxu0 %v1533
  %1557 = vmatprep.subr.bf16.mxu0 0
  %1558 = vmatpush1.bf16.msra.mxu0 %v1534
  %1559 = vmatprep.subr.bf16.mxu0 0
  %1560 = vmatpush1.bf16.msra.mxu0 0
  %1561 = vmatprep.subr.bf16.mxu0 0
  %1562 = vmatpush1.bf16.msra.mxu0 0
  %1563 = vmatprep.subr.bf16.mxu0 0
  %1564 = vmatpush1.bf16.msra.mxu0 0
  %1565 = vmatprep.subr.bf16.mxu0 0
  %1566 = vmatpush1.bf16.msra.mxu0 0
  %1567 = vmatprep.subr.bf16.mxu0 0
  %1568 = vmatpush1.bf16.msra.mxu0 0
  %1569 = vmatprep.subr.bf16.mxu0 0
  %1570 = vmatpush1.bf16.msra.mxu0 0
  %1571 = vmatprep.subr.bf16.mxu0 0
  %1572 = vmatpush1.bf16.msra.mxu0 0
  %1573 = vmatprep.subr.bf16.mxu0 0
  %1574 = vmatpush1.bf16.msra.mxu0 0
  %1575 = vmatprep.mubr.bf16.mxu0 0
  %1576 = vmatmul.mubr.bf16.gmra.mrb[0].mxu0 %v1442
  %v1577 = vpop.f32.mrb[0].mxu0
  %v1578 = vadd.f32 %v1494, %v1577
  %v1579 = vpop.f32.mrb[0].mxu0
  %v1580 = vpop.f32.mrb[0].mxu0
  %v1581 = vadd.f32 %v1494, %v1580
  %v1582 = vpop.f32.mrb[0].mxu0
  %1583 = vmatprep.mubr.bf16.mxu0 0
  %1584 = vmatmul.mubr.bf16.gmra.mrb[0].mxu0 %v1443
  %v1585 = vpop.f32.mrb[0].mxu0
  %v1586 = vadd.f32 %v1494, %v1585
  %v1587 = vpop.f32.mrb[0].mxu0
  %v1588 = vpop.f32.mrb[0].mxu0
  %v1589 = vadd.f32 %v1494, %v1588
  %v1590 = vpop.f32.mrb[0].mxu0
  %1591 = vmatprep.mubr.bf16.mxu0 0
  %1592 = vmatmul.mubr.bf16.gmra.mrb[0].mxu0 %v1444
  %v1593 = vpop.f32.mrb[0].mxu0
  %v1594 = vadd.f32 %v1494, %v1593
  %v1595 = vpop.f32.mrb[0].mxu0
  %v1596 = vpop.f32.mrb[0].mxu0
  %v1597 = vadd.f32 %v1494, %v1596
  %v1598 = vpop.f32.mrb[0].mxu0
  %1599 = vmatprep.mubr.bf16.mxu0 0
  %1600 = vmatmul.mubr.bf16.gmra.mrb[0].mxu0 %v1445
  %v1601 = vpop.f32.mrb[0].mxu0
  %v1602 = vadd.f32 %v1494, %v1601
  %v1603 = vpop.f32.mrb[0].mxu0
  %v1604 = vpop.f32.mrb[0].mxu0
  %v1605 = vadd.f32 %v1494, %v1604
  %v1606 = vpop.f32.mrb[0].mxu0
  %1607 = vmatprep.mubr.bf16.mxu0 0
  %1608 = vmatmul.mubr.bf16.gmra.mrb[0].mxu0 %v1446
  %v1609 = vpop.f32.mrb[0].mxu0
  %v1610 = vadd.f32 %v1494, %v1609
  %v1611 = vpop.f32.mrb[0].mxu0
  %v1612 = vpop.f32.mrb[0].mxu0
  %v1613 = vadd.f32 %v1494, %v1612
  %v1614 = vpop.f32.mrb[0].mxu0
  %1615 = vmatprep.mubr.bf16.mxu0 0
  %1616 = vmatmul.mubr.bf16.gmra.mrb[0].mxu0 %v1447
  %v1617 = vpop.f32.mrb[0].mxu0
  %v1618 = vadd.f32 %v1494, %v1617
  %v1619 = vpop.f32.mrb[0].mxu0
  %v1620 = vpop.f32.mrb[0].mxu0
  %v1621 = vadd.f32 %v1494, %v1620
  %v1622 = vpop.f32.mrb[0].mxu0
  %1623 = vmatprep.mubr.bf16.mxu0 0
  %1624 = vmatmul.mubr.bf16.gmra.mrb[0].mxu0 %v1448
  %v1625 = vpop.f32.mrb[0].mxu0
  %v1626 = vadd.f32 %v1494, %v1625
  %v1627 = vpop.f32.mrb[0].mxu0
  %v1628 = vpop.f32.mrb[0].mxu0
  %v1629 = vadd.f32 %v1494, %v1628
  %v1630 = vpop.f32.mrb[0].mxu0
  %1631 = vmatprep.mubr.bf16.mxu0 0
  %1632 = vmatmul.mubr.bf16.gmra.mrb[0].mxu0 %v1449
  %v1633 = vpop.f32.mrb[0].mxu0
  %v1634 = vadd.f32 %v1494, %v1633
  %v1635 = vpop.f32.mrb[0].mxu0
  %v1636 = vpop.f32.mrb[0].mxu0
  %v1637 = vadd.f32 %v1494, %v1636
  %v1638 = vpop.f32.mrb[0].mxu0
  %1639 = vmatprep.mubr.bf16.mxu0 0
  %1640 = vmatmul.mubr.bf16.gmra.mrb[0].mxu0 %v1450
  %v1641 = vpop.f32.mrb[0].mxu0
  %v1642 = vadd.f32 %v1494, %v1641
  %v1643 = vpop.f32.mrb[0].mxu0
  %v1644 = vpop.f32.mrb[0].mxu0
  %v1645 = vadd.f32 %v1494, %v1644
  %v1646 = vpop.f32.mrb[0].mxu0
  %1647 = vmatprep.mubr.bf16.mxu0 0
  %1648 = vmatmul.mubr.bf16.gmra.mrb[0].mxu0 %v1451
  %v1649 = vpop.f32.mrb[0].mxu0
  %v1650 = vadd.f32 %v1494, %v1649
  %v1651 = vpop.f32.mrb[0].mxu0
  %v1652 = vpop.f32.mrb[0].mxu0
  %v1653 = vadd.f32 %v1494, %v1652
  %v1654 = vpop.f32.mrb[0].mxu0
  %1655 = vmatprep.mubr.bf16.mxu0 0
  %1656 = vmatmul.mubr.bf16.gmra.mrb[0].mxu0 %v1452
  %v1657 = vpop.f32.mrb[0].mxu0
  %v1658 = vadd.f32 %v1494, %v1657
  %v1659 = vpop.f32.mrb[0].mxu0
  %v1660 = vpop.f32.mrb[0].mxu0
  %v1661 = vadd.f32 %v1494, %v1660
  %v1662 = vpop.f32.mrb[0].mxu0
  %1663 = vmatprep.mubr.bf16.mxu0 0
  %1664 = vmatmul.mubr.bf16.gmra.mrb[0].mxu0 %v1453
  %v1665 = vpop.f32.mrb[0].mxu0
  %v1666 = vadd.f32 %v1494, %v1665
  %v1667 = vpop.f32.mrb[0].mxu0
  %v1668 = vpop.f32.mrb[0].mxu0
  %v1669 = vadd.f32 %v1494, %v1668
  %v1670 = vpop.f32.mrb[0].mxu0
  %1671 = vmatprep.mubr.bf16.mxu0 0
  %1672 = vmatmul.mubr.bf16.gmra.mrb[0].mxu0 %v1454
  %v1673 = vpop.f32.mrb[0].mxu0
  %v1674 = vadd.f32 %v1494, %v1673
  %v1675 = vpop.f32.mrb[0].mxu0
  %v1676 = vpop.f32.mrb[0].mxu0
  %v1677 = vadd.f32 %v1494, %v1676
  %v1678 = vpop.f32.mrb[0].mxu0
  %1679 = vmatprep.mubr.bf16.mxu0 0
  %1680 = vmatmul.mubr.bf16.gmra.mrb[0].mxu0 %v1455
  %v1681 = vpop.f32.mrb[0].mxu0
  %v1682 = vadd.f32 %v1494, %v1681
  %v1683 = vpop.f32.mrb[0].mxu0
  %v1684 = vpop.f32.mrb[0].mxu0
  %v1685 = vadd.f32 %v1494, %v1684
  %v1686 = vpop.f32.mrb[0].mxu0
  %1687 = vmatprep.mubr.bf16.mxu0 0
  %1688 = vmatmul.mubr.bf16.gmra.mrb[0].mxu0 %v1456
  %v1689 = vpop.f32.mrb[0].mxu0
  %v1690 = vadd.f32 %v1494, %v1689
  %v1691 = vpop.f32.mrb[0].mxu0
  %v1692 = vpop.f32.mrb[0].mxu0
  %v1693 = vadd.f32 %v1494, %v1692
  %v1694 = vpop.f32.mrb[0].mxu0
  %1695 = vmatprep.mubr.bf16.mxu0 0
  %1696 = vmatmul.mubr.bf16.gmra.mrb[0].mxu0 %v1457
  %v1697 = vpop.f32.mrb[0].mxu0
  %v1698 = vadd.f32 %v1494, %v1697
  %v1699 = vpop.f32.mrb[0].mxu0
  %v1700 = vpop.f32.mrb[0].mxu0
  %v1701 = vadd.f32 %v1494, %v1700
  %v1702 = vpop.f32.mrb[0].mxu0
  %1703 = vmatprep.mubr.bf16.mxu0 0
  %1704 = vmatmul.mubr.bf16.gmra.mrb[0].mxu0 %v1458
  %v1705 = vpop.f32.mrb[0].mxu0
  %v1706 = vadd.f32 %v1494, %v1705
  %v1707 = vpop.f32.mrb[0].mxu0
  %v1708 = vpop.f32.mrb[0].mxu0
  %v1709 = vadd.f32 %v1494, %v1708
  %v1710 = vpop.f32.mrb[0].mxu0
  %1711 = vmatprep.mubr.bf16.mxu0 0
  %1712 = vmatmul.mubr.bf16.gmra.mrb[0].mxu0 %v1459
  %v1713 = vpop.f32.mrb[0].mxu0
  %v1714 = vadd.f32 %v1494, %v1713
  %v1715 = vpop.f32.mrb[0].mxu0
  %v1716 = vpop.f32.mrb[0].mxu0
  %v1717 = vadd.f32 %v1494, %v1716
  %v1718 = vpop.f32.mrb[0].mxu0
  %1719 = vmatprep.mubr.bf16.mxu0 0
  %1720 = vmatmul.mubr.bf16.gmra.mrb[0].mxu0 %v1460
  %v1721 = vpop.f32.mrb[0].mxu0
  %v1722 = vadd.f32 %v1494, %v1721
  %v1723 = vpop.f32.mrb[0].mxu0
  %v1724 = vpop.f32.mrb[0].mxu0
  %v1725 = vadd.f32 %v1494, %v1724
  %v1726 = vpop.f32.mrb[0].mxu0
  %1727 = vmatprep.mubr.bf16.mxu0 0
  %1728 = vmatmul.mubr.bf16.gmra.mrb[0].mxu0 %v1461
  %v1729 = vpop.f32.mrb[0].mxu0
  %v1730 = vadd.f32 %v1494, %v1729
  %v1731 = vpop.f32.mrb[0].mxu0
  %v1732 = vpop.f32.mrb[0].mxu0
  %v1733 = vadd.f32 %v1494, %v1732
  %v1734 = vpop.f32.mrb[0].mxu0
  %1735 = vmatprep.mubr.bf16.mxu0 0
  %1736 = vmatmul.mubr.bf16.gmra.mrb[0].mxu0 %v1462
  %v1737 = vpop.f32.mrb[0].mxu0
  %v1738 = vadd.f32 %v1494, %v1737
  %v1739 = vpop.f32.mrb[0].mxu0
  %v1740 = vpop.f32.mrb[0].mxu0
  %v1741 = vadd.f32 %v1494, %v1740
  %v1742 = vpop.f32.mrb[0].mxu0
  %1743 = vmatprep.mubr.bf16.mxu0 0
  %1744 = vmatmul.mubr.bf16.gmra.mrb[0].mxu0 %v1463
  %v1745 = vpop.f32.mrb[0].mxu0
  %v1746 = vadd.f32 %v1494, %v1745
  %v1747 = vpop.f32.mrb[0].mxu0
  %v1748 = vpop.f32.mrb[0].mxu0
  %v1749 = vadd.f32 %v1494, %v1748
  %v1750 = vpop.f32.mrb[0].mxu0
  %1751 = vmatprep.mubr.bf16.mxu0 0
  %1752 = vmatmul.mubr.bf16.gmra.mrb[0].mxu0 %v1464
  %v1753 = vpop.f32.mrb[0].mxu0
  %v1754 = vadd.f32 %v1494, %v1753
  %v1755 = vpop.f32.mrb[0].mxu0
  %v1756 = vpop.f32.mrb[0].mxu0
  %v1757 = vadd.f32 %v1494, %v1756
  %v1758 = vpop.f32.mrb[0].mxu0
  %1759 = vmatprep.mubr.bf16.mxu0 0
  %1760 = vmatmul.mubr.bf16.gmra.mrb[0].mxu0 %v1465
  %v1761 = vpop.f32.mrb[0].mxu0
  %v1762 = vadd.f32 %v1494, %v1761
  %v1763 = vpop.f32.mrb[0].mxu0
  %v1764 = vpop.f32.mrb[0].mxu0
  %v1765 = vadd.f32 %v1494, %v1764
  %v1766 = vpop.f32.mrb[0].mxu0
  %1767 = vmatprep.mubr.bf16.mxu0 0
  %1768 = vmatmul.mubr.bf16.gmra.mrb[0].mxu0 %v1466
  %v1769 = vpop.f32.mrb[0].mxu0
  %v1770 = vadd.f32 %v1494, %v1769
  %v1771 = vpop.f32.mrb[0].mxu0
  %v1772 = vpop.f32.mrb[0].mxu0
  %v1773 = vadd.f32 %v1494, %v1772
  %v1774 = vpop.f32.mrb[0].mxu0
  %1775 = vmatprep.mubr.bf16.mxu0 0
  %1776 = vmatmul.mubr.bf16.gmra.mrb[0].mxu0 %v1467
  %v1777 = vpop.f32.mrb[0].mxu0
  %v1778 = vadd.f32 %v1494, %v1777
  %v1779 = vpop.f32.mrb[0].mxu0
  %v1780 = vpop.f32.mrb[0].mxu0
  %v1781 = vadd.f32 %v1494, %v1780
  %v1782 = vpop.f32.mrb[0].mxu0
  %1783 = vmatprep.mubr.bf16.mxu0 0
  %1784 = vmatmul.mubr.bf16.gmra.mrb[0].mxu0 %v1468
  %v1785 = vpop.f32.mrb[0].mxu0
  %v1786 = vadd.f32 %v1494, %v1785
  %v1787 = vpop.f32.mrb[0].mxu0
  %v1788 = vpop.f32.mrb[0].mxu0
  %v1789 = vadd.f32 %v1494, %v1788
  %v1790 = vpop.f32.mrb[0].mxu0
  %1791 = vmatprep.mubr.bf16.mxu0 0
  %1792 = vmatmul.mubr.bf16.gmra.mrb[0].mxu0 %v1469
  %v1793 = vpop.f32.mrb[0].mxu0
  %v1794 = vadd.f32 %v1494, %v1793
  %v1795 = vpop.f32.mrb[0].mxu0
  %v1796 = vpop.f32.mrb[0].mxu0
  %v1797 = vadd.f32 %v1494, %v1796
  %v1798 = vpop.f32.mrb[0].mxu0
  %1799 = vmatprep.mubr.bf16.mxu0 0
  %1800 = vmatmul.mubr.bf16.gmra.mrb[0].mxu0 %v1470
  %v1801 = vpop.f32.mrb[0].mxu0
  %v1802 = vadd.f32 %v1494, %v1801
  %v1803 = vpop.f32.mrb[0].mxu0
  %v1804 = vpop.f32.mrb[0].mxu0
  %v1805 = vadd.f32 %v1494, %v1804
  %v1806 = vpop.f32.mrb[0].mxu0
  %1807 = vmatprep.mubr.bf16.mxu0 0
  %1808 = vmatmul.mubr.bf16.gmra.mrb[0].mxu0 %v1471
  %v1809 = vpop.f32.mrb[0].mxu0
  %v1810 = vadd.f32 %v1494, %v1809
  %v1811 = vpop.f32.mrb[0].mxu0
  %v1812 = vpop.f32.mrb[0].mxu0
  %v1813 = vadd.f32 %v1494, %v1812
  %v1814 = vpop.f32.mrb[0].mxu0
  %1815 = vmatprep.mubr.bf16.mxu0 0
  %1816 = vmatmul.mubr.bf16.gmra.mrb[0].mxu0 %v1472
  %v1817 = vpop.f32.mrb[0].mxu0
  %v1818 = vadd.f32 %v1494, %v1817
  %v1819 = vpop.f32.mrb[0].mxu0
  %v1820 = vpop.f32.mrb[0].mxu0
  %v1821 = vadd.f32 %v1494, %v1820
  %v1822 = vpop.f32.mrb[0].mxu0
  %1823 = vmatprep.mubr.bf16.mxu0 0
  %1824 = vmatmul.mubr.bf16.gmra.mrb[0].mxu0 %v1473
  %v1825 = vpop.f32.mrb[0].mxu0
  %v1826 = vadd.f32 %v1494, %v1825
  %v1827 = vpop.f32.mrb[0].mxu0
  %v1828 = vpop.f32.mrb[0].mxu0
  %v1829 = vadd.f32 %v1494, %v1828
  %v1830 = vpop.f32.mrb[0].mxu0
  %1831 = vdwg.mxu0
  %vm1832 = vcmp.gt.f32.partialorder %v1578, 0.0
  %vm1833 = vcmp.gt.f32.partialorder %v1581, 0.0
  %vm1834 = vcmp.gt.f32.partialorder %v1586, 0.0
  %vm1835 = vcmp.gt.f32.partialorder %v1589, 0.0
  %vm1836 = vcmp.gt.f32.partialorder %v1594, 0.0
  %vm1837 = vcmp.gt.f32.partialorder %v1597, 0.0
  %vm1838 = vcmp.gt.f32.partialorder %v1602, 0.0
  %vm1839 = vcmp.gt.f32.partialorder %v1605, 0.0
  %vm1840 = vcmp.gt.f32.partialorder %v1610, 0.0
  %vm1841 = vcmp.gt.f32.partialorder %v1613, 0.0
  %vm1842 = vcmp.gt.f32.partialorder %v1618, 0.0
  %vm1843 = vcmp.gt.f32.partialorder %v1621, 0.0
  %vm1844 = vcmp.gt.f32.partialorder %v1626, 0.0
  %vm1845 = vcmp.gt.f32.partialorder %v1629, 0.0
  %vm1846 = vcmp.gt.f32.partialorder %v1634, 0.0
  %vm1847 = vcmp.gt.f32.partialorder %v1637, 0.0
  %vm1848 = vcmp.gt.f32.partialorder %v1642, 0.0
  %vm1849 = vcmp.gt.f32.partialorder %v1645, 0.0
  %vm1850 = vcmp.gt.f32.partialorder %v1650, 0.0
  %vm1851 = vcmp.gt.f32.partialorder %v1653, 0.0
  %vm1852 = vcmp.gt.f32.partialorder %v1658, 0.0
  %vm1853 = vcmp.gt.f32.partialorder %v1661, 0.0
  %vm1854 = vcmp.gt.f32.partialorder %v1666, 0.0
  %vm1855 = vcmp.gt.f32.partialorder %v1669, 0.0
  %vm1856 = vcmp.gt.f32.partialorder %v1674, 0.0
  %vm1857 = vcmp.gt.f32.partialorder %v1677, 0.0
  %vm1858 = vcmp.gt.f32.partialorder %v1682, 0.0
  %vm1859 = vcmp.gt.f32.partialorder %v1685, 0.0
  %vm1860 = vcmp.gt.f32.partialorder %v1690, 0.0
  %vm1861 = vcmp.gt.f32.partialorder %v1693, 0.0
  %vm1862 = vcmp.gt.f32.partialorder %v1698, 0.0
  %vm1863 = vcmp.gt.f32.partialorder %v1701, 0.0
  %vm1864 = vcmp.gt.f32.partialorder %v1706, 0.0
  %vm1865 = vcmp.gt.f32.partialorder %v1709, 0.0
  %vm1866 = vcmp.gt.f32.partialorder %v1714, 0.0
  %vm1867 = vcmp.gt.f32.partialorder %v1717, 0.0
  %vm1868 = vcmp.gt.f32.partialorder %v1722, 0.0
  %vm1869 = vcmp.gt.f32.partialorder %v1725, 0.0
  %vm1870 = vcmp.gt.f32.partialorder %v1730, 0.0
  %vm1871 = vcmp.gt.f32.partialorder %v1733, 0.0
  %vm1872 = vcmp.gt.f32.partialorder %v1738, 0.0
  %vm1873 = vcmp.gt.f32.partialorder %v1741, 0.0
  %vm1874 = vcmp.gt.f32.partialorder %v1746, 0.0
  %vm1875 = vcmp.gt.f32.partialorder %v1749, 0.0
  %vm1876 = vcmp.gt.f32.partialorder %v1754, 0.0
  %vm1877 = vcmp.gt.f32.partialorder %v1757, 0.0
  %vm1878 = vcmp.gt.f32.partialorder %v1762, 0.0
  %vm1879 = vcmp.gt.f32.partialorder %v1765, 0.0
  %vm1880 = vcmp.gt.f32.partialorder %v1770, 0.0
  %vm1881 = vcmp.gt.f32.partialorder %v1773, 0.0
  %vm1882 = vcmp.gt.f32.partialorder %v1778, 0.0
  %vm1883 = vcmp.gt.f32.partialorder %v1781, 0.0
  %vm1884 = vcmp.gt.f32.partialorder %v1786, 0.0
  %vm1885 = vcmp.gt.f32.partialorder %v1789, 0.0
  %vm1886 = vcmp.gt.f32.partialorder %v1794, 0.0
  %vm1887 = vcmp.gt.f32.partialorder %v1797, 0.0
  %vm1888 = vcmp.gt.f32.partialorder %v1802, 0.0
  %vm1889 = vcmp.gt.f32.partialorder %v1805, 0.0
  %vm1890 = vcmp.gt.f32.partialorder %v1810, 0.0
  %vm1891 = vcmp.gt.f32.partialorder %v1813, 0.0
  %vm1892 = vcmp.gt.f32.partialorder %v1818, 0.0
  %vm1893 = vcmp.gt.f32.partialorder %v1821, 0.0
  %vm1894 = vcmp.gt.f32.partialorder %v1826, 0.0
  %vm1895 = vcmp.gt.f32.partialorder %v1829, 0.0
  %v1896 = vmul.f32 %v1578, 0.01
  %v1897 = vmul.f32 %v1581, 0.01
  %v1898 = vmul.f32 %v1586, 0.01
  %v1899 = vmul.f32 %v1589, 0.01
  %v1900 = vmul.f32 %v1594, 0.01
  %v1901 = vmul.f32 %v1597, 0.01
  %v1902 = vmul.f32 %v1602, 0.01
  %v1903 = vmul.f32 %v1605, 0.01
  %v1904 = vmul.f32 %v1610, 0.01
  %v1905 = vmul.f32 %v1613, 0.01
  %v1906 = vmul.f32 %v1618, 0.01
  %v1907 = vmul.f32 %v1621, 0.01
  %v1908 = vmul.f32 %v1626, 0.01
  %v1909 = vmul.f32 %v1629, 0.01
  %v1910 = vmul.f32 %v1634, 0.01
  %v1911 = vmul.f32 %v1637, 0.01
  %v1912 = vmul.f32 %v1642, 0.01
  %v1913 = vmul.f32 %v1645, 0.01
  %v1914 = vmul.f32 %v1650, 0.01
  %v1915 = vmul.f32 %v1653, 0.01
  %v1916 = vmul.f32 %v1658, 0.01
  %v1917 = vmul.f32 %v1661, 0.01
  %v1918 = vmul.f32 %v1666, 0.01
  %v1919 = vmul.f32 %v1669, 0.01
  %v1920 = vmul.f32 %v1674, 0.01
  %v1921 = vmul.f32 %v1677, 0.01
  %v1922 = vmul.f32 %v1682, 0.01
  %v1923 = vmul.f32 %v1685, 0.01
  %v1924 = vmul.f32 %v1690, 0.01
  %v1925 = vmul.f32 %v1693, 0.01
  %v1926 = vmul.f32 %v1698, 0.01
  %v1927 = vmul.f32 %v1701, 0.01
  %v1928 = vmul.f32 %v1706, 0.01
  %v1929 = vmul.f32 %v1709, 0.01
  %v1930 = vmul.f32 %v1714, 0.01
  %v1931 = vmul.f32 %v1717, 0.01
  %v1932 = vmul.f32 %v1722, 0.01
  %v1933 = vmul.f32 %v1725, 0.01
  %v1934 = vmul.f32 %v1730, 0.01
  %v1935 = vmul.f32 %v1733, 0.01
  %v1936 = vmul.f32 %v1738, 0.01
  %v1937 = vmul.f32 %v1741, 0.01
  %v1938 = vmul.f32 %v1746, 0.01
  %v1939 = vmul.f32 %v1749, 0.01
  %v1940 = vmul.f32 %v1754, 0.01
  %v1941 = vmul.f32 %v1757, 0.01
  %v1942 = vmul.f32 %v1762, 0.01
  %v1943 = vmul.f32 %v1765, 0.01
  %v1944 = vmul.f32 %v1770, 0.01
  %v1945 = vmul.f32 %v1773, 0.01
  %v1946 = vmul.f32 %v1778, 0.01
  %v1947 = vmul.f32 %v1781, 0.01
  %v1948 = vmul.f32 %v1786, 0.01
  %v1949 = vmul.f32 %v1789, 0.01
  %v1950 = vmul.f32 %v1794, 0.01
  %v1951 = vmul.f32 %v1797, 0.01
  %v1952 = vmul.f32 %v1802, 0.01
  %v1953 = vmul.f32 %v1805, 0.01
  %v1954 = vmul.f32 %v1810, 0.01
  %v1955 = vmul.f32 %v1813, 0.01
  %v1956 = vmul.f32 %v1818, 0.01
  %v1957 = vmul.f32 %v1821, 0.01
  %v1958 = vmul.f32 %v1826, 0.01
  %v1959 = vmul.f32 %v1829, 0.01
  %v1960 = vsel %vm1832, %v1578, %v1896
  %v1961 = vsel %vm1833, %v1581, %v1897
  %v1962 = vsel %vm1834, %v1586, %v1898
  %v1963 = vsel %vm1835, %v1589, %v1899
  %v1964 = vsel %vm1836, %v1594, %v1900
  %v1965 = vsel %vm1837, %v1597, %v1901
  %v1966 = vsel %vm1838, %v1602, %v1902
  %v1967 = vsel %vm1839, %v1605, %v1903
  %v1968 = vsel %vm1840, %v1610, %v1904
  %v1969 = vsel %vm1841, %v1613, %v1905
  %v1970 = vsel %vm1842, %v1618, %v1906
  %v1971 = vsel %vm1843, %v1621, %v1907
  %v1972 = vsel %vm1844, %v1626, %v1908
  %v1973 = vsel %vm1845, %v1629, %v1909
  %v1974 = vsel %vm1846, %v1634, %v1910
  %v1975 = vsel %vm1847, %v1637, %v1911
  %v1976 = vsel %vm1848, %v1642, %v1912
  %v1977 = vsel %vm1849, %v1645, %v1913
  %v1978 = vsel %vm1850, %v1650, %v1914
  %v1979 = vsel %vm1851, %v1653, %v1915
  %v1980 = vsel %vm1852, %v1658, %v1916
  %v1981 = vsel %vm1853, %v1661, %v1917
  %v1982 = vsel %vm1854, %v1666, %v1918
  %v1983 = vsel %vm1855, %v1669, %v1919
  %v1984 = vsel %vm1856, %v1674, %v1920
  %v1985 = vsel %vm1857, %v1677, %v1921
  %v1986 = vsel %vm1858, %v1682, %v1922
  %v1987 = vsel %vm1859, %v1685, %v1923
  %v1988 = vsel %vm1860, %v1690, %v1924
  %v1989 = vsel %vm1861, %v1693, %v1925
  %v1990 = vsel %vm1862, %v1698, %v1926
  %v1991 = vsel %vm1863, %v1701, %v1927
  %v1992 = vsel %vm1864, %v1706, %v1928
  %v1993 = vsel %vm1865, %v1709, %v1929
  %v1994 = vsel %vm1866, %v1714, %v1930
  %v1995 = vsel %vm1867, %v1717, %v1931
  %v1996 = vsel %vm1868, %v1722, %v1932
  %v1997 = vsel %vm1869, %v1725, %v1933
  %v1998 = vsel %vm1870, %v1730, %v1934
  %v1999 = vsel %vm1871, %v1733, %v1935
  %v2000 = vsel %vm1872, %v1738, %v1936
  %v2001 = vsel %vm1873, %v1741, %v1937
  %v2002 = vsel %vm1874, %v1746, %v1938
  %v2003 = vsel %vm1875, %v1749, %v1939
  %v2004 = vsel %vm1876, %v1754, %v1940
  %v2005 = vsel %vm1877, %v1757, %v1941
  %v2006 = vsel %vm1878, %v1762, %v1942
  %v2007 = vsel %vm1879, %v1765, %v1943
  %v2008 = vsel %vm1880, %v1770, %v1944
  %v2009 = vsel %vm1881, %v1773, %v1945
  %v2010 = vsel %vm1882, %v1778, %v1946
  %v2011 = vsel %vm1883, %v1781, %v1947
  %v2012 = vsel %vm1884, %v1786, %v1948
  %v2013 = vsel %vm1885, %v1789, %v1949
  %v2014 = vsel %vm1886, %v1794, %v1950
  %v2015 = vsel %vm1887, %v1797, %v1951
  %v2016 = vsel %vm1888, %v1802, %v1952
  %v2017 = vsel %vm1889, %v1805, %v1953
  %v2018 = vsel %vm1890, %v1810, %v1954
  %v2019 = vsel %vm1891, %v1813, %v1955
  %v2020 = vsel %vm1892, %v1818, %v1956
  %v2021 = vsel %vm1893, %v1821, %v1957
  %v2022 = vsel %vm1894, %v1826, %v1958
  %v2023 = vsel %vm1895, %v1829, %v1959
  %v2024 = vpack.c.bf16 %v1961, %v1960
  %v2025 = vpack.c.bf16 %v1963, %v1962
  %v2026 = vpack.c.bf16 %v1965, %v1964
  %v2027 = vpack.c.bf16 %v1967, %v1966
  %v2028 = vpack.c.bf16 %v1969, %v1968
  %v2029 = vpack.c.bf16 %v1971, %v1970
  %v2030 = vpack.c.bf16 %v1973, %v1972
  %v2031 = vpack.c.bf16 %v1975, %v1974
  %v2032 = vpack.c.bf16 %v1977, %v1976
  %v2033 = vpack.c.bf16 %v1979, %v1978
  %v2034 = vpack.c.bf16 %v1981, %v1980
  %v2035 = vpack.c.bf16 %v1983, %v1982
  %v2036 = vpack.c.bf16 %v1985, %v1984
  %v2037 = vpack.c.bf16 %v1987, %v1986
  %v2038 = vpack.c.bf16 %v1989, %v1988
  %v2039 = vpack.c.bf16 %v1991, %v1990
  %v2040 = vpack.c.bf16 %v1993, %v1992
  %v2041 = vpack.c.bf16 %v1995, %v1994
  %v2042 = vpack.c.bf16 %v1997, %v1996
  %v2043 = vpack.c.bf16 %v1999, %v1998
  %v2044 = vpack.c.bf16 %v2001, %v2000
  %v2045 = vpack.c.bf16 %v2003, %v2002
  %v2046 = vpack.c.bf16 %v2005, %v2004
  %v2047 = vpack.c.bf16 %v2007, %v2006
  %v2048 = vpack.c.bf16 %v2009, %v2008
  %v2049 = vpack.c.bf16 %v2011, %v2010
  %v2050 = vpack.c.bf16 %v2013, %v2012
  %v2051 = vpack.c.bf16 %v2015, %v2014
  %v2052 = vpack.c.bf16 %v2017, %v2016
  %v2053 = vpack.c.bf16 %v2019, %v2018
  %v2054 = vpack.c.bf16 %v2021, %v2020
  %v2055 = vpack.c.bf16 %v2023, %v2022
  %v2056 = vld [vmem:[%s3] sm:$0xf]
  %v2057 = vld [vmem:[%s3 + $0x4] sm:$0xf]
  %v2058 = vld [vmem:[%s3 + $0x8] sm:$0xf]
  %v2059 = vld [vmem:[%s3 + $0xc] sm:$0xf]
  %v2060 = vld [vmem:[%s3 + $0x10] sm:$0xf]
  %v2061 = vld [vmem:[%s3 + $0x14] sm:$0xf]
  %v2062 = vld [vmem:[%s3 + $0x18] sm:$0xf]
  %v2063 = vld [vmem:[%s3 + $0x1c] sm:$0xf]
  %v2064 = vld [vmem:[%s3 + $0x20] sm:$0xf]
  %v2065 = vld [vmem:[%s3 + $0x24] sm:$0xf]
  %v2066 = vld [vmem:[%s3 + $0x28] sm:$0xf]
  %v2067 = vld [vmem:[%s3 + $0x2c] sm:$0xf]
  %v2068 = vld [vmem:[%s3 + $0x30] sm:$0xf]
  %v2069 = vld [vmem:[%s3 + $0x34] sm:$0xf]
  %v2070 = vld [vmem:[%s3 + $0x38] sm:$0xf]
  %v2071 = vld [vmem:[%s3 + $0x3c] sm:$0xf]
  %v2072 = vld [vmem:[%s6 + $0x2] sm:$0x1]
  %v2073 = vlaneseq
  %v2074 = vshrl.u32 %v2073, 7
  %v2075 = vsub.s32 0, %v2074
  %v2076 = vrot.slane %v2072, %v2075
  %v2093 = vunpack.c.l.b16 %v2056
  %v2094 = vunpack.c.l.b16 %v2057
  %v2095 = vunpack.c.l.b16 %v2058
  %v2096 = vunpack.c.l.b16 %v2059
  %v2097 = vunpack.c.l.b16 %v2060
  %v2098 = vunpack.c.l.b16 %v2061
  %v2099 = vunpack.c.l.b16 %v2062
  %v2100 = vunpack.c.l.b16 %v2063
  %v2101 = vunpack.c.l.b16 %v2064
  %v2102 = vunpack.c.l.b16 %v2065
  %v2103 = vunpack.c.l.b16 %v2066
  %v2104 = vunpack.c.l.b16 %v2067
  %v2105 = vunpack.c.l.b16 %v2068
  %v2106 = vunpack.c.l.b16 %v2069
  %v2107 = vunpack.c.l.b16 %v2070
  %v2108 = vunpack.c.l.b16 %v2071
  %v2109 = vpack.c.b16 %v2094, %v2093
  %v2110 = vpack.c.b16 %v2096, %v2095
  %v2111 = vpack.c.b16 %v2098, %v2097
  %v2112 = vpack.c.b16 %v2100, %v2099
  %v2113 = vpack.c.b16 %v2102, %v2101
  %v2114 = vpack.c.b16 %v2104, %v2103
  %v2115 = vpack.c.b16 %v2106, %v2105
  %v2116 = vpack.c.b16 %v2108, %v2107
  %2125 = vmatprep.subr.bf16.mxu0 0
  %2126 = vmatpush1.bf16.msra.mxu0 %v2109
  %2127 = vmatprep.subr.bf16.mxu0 0
  %2128 = vmatpush1.bf16.msra.mxu0 %v2110
  %2129 = vmatprep.subr.bf16.mxu0 0
  %2130 = vmatpush1.bf16.msra.mxu0 %v2111
  %2131 = vmatprep.subr.bf16.mxu0 0
  %2132 = vmatpush1.bf16.msra.mxu0 %v2112
  %2133 = vmatprep.subr.bf16.mxu0 0
  %2134 = vmatpush1.bf16.msra.mxu0 %v2113
  %2135 = vmatprep.subr.bf16.mxu0 0
  %2136 = vmatpush1.bf16.msra.mxu0 %v2114
  %2137 = vmatprep.subr.bf16.mxu0 0
  %2138 = vmatpush1.bf16.msra.mxu0 %v2115
  %2139 = vmatprep.subr.bf16.mxu0 0
  %2140 = vmatpush1.bf16.msra.mxu0 %v2116
  %2141 = vmatprep.subr.bf16.mxu0 0
  %2142 = vmatpush1.bf16.msra.mxu0 0
  %2143 = vmatprep.subr.bf16.mxu0 0
  %2144 = vmatpush1.bf16.msra.mxu0 0
  %2145 = vmatprep.subr.bf16.mxu0 0
  %2146 = vmatpush1.bf16.msra.mxu0 0
  %2147 = vmatprep.subr.bf16.mxu0 0
  %2148 = vmatpush1.bf16.msra.mxu0 0
  %2149 = vmatprep.subr.bf16.mxu0 0
  %2150 = vmatpush1.bf16.msra.mxu0 0
  %2151 = vmatprep.subr.bf16.mxu0 0
  %2152 = vmatpush1.bf16.msra.mxu0 0
  %2153 = vmatprep.subr.bf16.mxu0 0
  %2154 = vmatpush1.bf16.msra.mxu0 0
  %2155 = vmatprep.subr.bf16.mxu0 0
  %2156 = vmatpush1.bf16.msra.mxu0 0
  %2157 = vmatprep.mubr.bf16.mxu0 0
  %2158 = vmatmul.mubr.bf16.gmra.mrb[0].mxu0 %v2024
  %v2159 = vpop.f32.mrb[0].mxu0
  %v2160 = vadd.f32 %v2076, %v2159
  %v2161 = vpop.f32.mrb[0].mxu0
  %v2162 = vpop.f32.mrb[0].mxu0
  %v2163 = vadd.f32 %v2076, %v2162
  %v2164 = vpop.f32.mrb[0].mxu0
  %2165 = vmatprep.mubr.bf16.mxu0 0
  %2166 = vmatmul.mubr.bf16.gmra.mrb[0].mxu0 %v2025
  %v2167 = vpop.f32.mrb[0].mxu0
  %v2168 = vadd.f32 %v2076, %v2167
  %v2169 = vpop.f32.mrb[0].mxu0
  %v2170 = vpop.f32.mrb[0].mxu0
  %v2171 = vadd.f32 %v2076, %v2170
  %v2172 = vpop.f32.mrb[0].mxu0
  %2173 = vmatprep.mubr.bf16.mxu0 0
  %2174 = vmatmul.mubr.bf16.gmra.mrb[0].mxu0 %v2026
  %v2175 = vpop.f32.mrb[0].mxu0
  %v2176 = vadd.f32 %v2076, %v2175
  %v2177 = vpop.f32.mrb[0].mxu0
  %v2178 = vpop.f32.mrb[0].mxu0
  %v2179 = vadd.f32 %v2076, %v2178
  %v2180 = vpop.f32.mrb[0].mxu0
  %2181 = vmatprep.mubr.bf16.mxu0 0
  %2182 = vmatmul.mubr.bf16.gmra.mrb[0].mxu0 %v2027
  %v2183 = vpop.f32.mrb[0].mxu0
  %v2184 = vadd.f32 %v2076, %v2183
  %v2185 = vpop.f32.mrb[0].mxu0
  %v2186 = vpop.f32.mrb[0].mxu0
  %v2187 = vadd.f32 %v2076, %v2186
  %v2188 = vpop.f32.mrb[0].mxu0
  %2189 = vmatprep.mubr.bf16.mxu0 0
  %2190 = vmatmul.mubr.bf16.gmra.mrb[0].mxu0 %v2028
  %v2191 = vpop.f32.mrb[0].mxu0
  %v2192 = vadd.f32 %v2076, %v2191
  %v2193 = vpop.f32.mrb[0].mxu0
  %v2194 = vpop.f32.mrb[0].mxu0
  %v2195 = vadd.f32 %v2076, %v2194
  %v2196 = vpop.f32.mrb[0].mxu0
  %2197 = vmatprep.mubr.bf16.mxu0 0
  %2198 = vmatmul.mubr.bf16.gmra.mrb[0].mxu0 %v2029
  %v2199 = vpop.f32.mrb[0].mxu0
  %v2200 = vadd.f32 %v2076, %v2199
  %v2201 = vpop.f32.mrb[0].mxu0
  %v2202 = vpop.f32.mrb[0].mxu0
  %v2203 = vadd.f32 %v2076, %v2202
  %v2204 = vpop.f32.mrb[0].mxu0
  %2205 = vmatprep.mubr.bf16.mxu0 0
  %2206 = vmatmul.mubr.bf16.gmra.mrb[0].mxu0 %v2030
  %v2207 = vpop.f32.mrb[0].mxu0
  %v2208 = vadd.f32 %v2076, %v2207
  %v2209 = vpop.f32.mrb[0].mxu0
  %v2210 = vpop.f32.mrb[0].mxu0
  %v2211 = vadd.f32 %v2076, %v2210
  %v2212 = vpop.f32.mrb[0].mxu0
  %2213 = vmatprep.mubr.bf16.mxu0 0
  %2214 = vmatmul.mubr.bf16.gmra.mrb[0].mxu0 %v2031
  %v2215 = vpop.f32.mrb[0].mxu0
  %v2216 = vadd.f32 %v2076, %v2215
  %v2217 = vpop.f32.mrb[0].mxu0
  %v2218 = vpop.f32.mrb[0].mxu0
  %v2219 = vadd.f32 %v2076, %v2218
  %v2220 = vpop.f32.mrb[0].mxu0
  %2221 = vmatprep.mubr.bf16.mxu0 0
  %2222 = vmatmul.mubr.bf16.gmra.mrb[0].mxu0 %v2032
  %v2223 = vpop.f32.mrb[0].mxu0
  %v2224 = vadd.f32 %v2076, %v2223
  %v2225 = vpop.f32.mrb[0].mxu0
  %v2226 = vpop.f32.mrb[0].mxu0
  %v2227 = vadd.f32 %v2076, %v2226
  %v2228 = vpop.f32.mrb[0].mxu0
  %2229 = vmatprep.mubr.bf16.mxu0 0
  %2230 = vmatmul.mubr.bf16.gmra.mrb[0].mxu0 %v2033
  %v2231 = vpop.f32.mrb[0].mxu0
  %v2232 = vadd.f32 %v2076, %v2231
  %v2233 = vpop.f32.mrb[0].mxu0
  %v2234 = vpop.f32.mrb[0].mxu0
  %v2235 = vadd.f32 %v2076, %v2234
  %v2236 = vpop.f32.mrb[0].mxu0
  %2237 = vmatprep.mubr.bf16.mxu0 0
  %2238 = vmatmul.mubr.bf16.gmra.mrb[0].mxu0 %v2034
  %v2239 = vpop.f32.mrb[0].mxu0
  %v2240 = vadd.f32 %v2076, %v2239
  %v2241 = vpop.f32.mrb[0].mxu0
  %v2242 = vpop.f32.mrb[0].mxu0
  %v2243 = vadd.f32 %v2076, %v2242
  %v2244 = vpop.f32.mrb[0].mxu0
  %2245 = vmatprep.mubr.bf16.mxu0 0
  %2246 = vmatmul.mubr.bf16.gmra.mrb[0].mxu0 %v2035
  %v2247 = vpop.f32.mrb[0].mxu0
  %v2248 = vadd.f32 %v2076, %v2247
  %v2249 = vpop.f32.mrb[0].mxu0
  %v2250 = vpop.f32.mrb[0].mxu0
  %v2251 = vadd.f32 %v2076, %v2250
  %v2252 = vpop.f32.mrb[0].mxu0
  %2253 = vmatprep.mubr.bf16.mxu0 0
  %2254 = vmatmul.mubr.bf16.gmra.mrb[0].mxu0 %v2036
  %v2255 = vpop.f32.mrb[0].mxu0
  %v2256 = vadd.f32 %v2076, %v2255
  %v2257 = vpop.f32.mrb[0].mxu0
  %v2258 = vpop.f32.mrb[0].mxu0
  %v2259 = vadd.f32 %v2076, %v2258
  %v2260 = vpop.f32.mrb[0].mxu0
  %2261 = vmatprep.mubr.bf16.mxu0 0
  %2262 = vmatmul.mubr.bf16.gmra.mrb[0].mxu0 %v2037
  %v2263 = vpop.f32.mrb[0].mxu0
  %v2264 = vadd.f32 %v2076, %v2263
  %v2265 = vpop.f32.mrb[0].mxu0
  %v2266 = vpop.f32.mrb[0].mxu0
  %v2267 = vadd.f32 %v2076, %v2266
  %v2268 = vpop.f32.mrb[0].mxu0
  %2269 = vmatprep.mubr.bf16.mxu0 0
  %2270 = vmatmul.mubr.bf16.gmra.mrb[0].mxu0 %v2038
  %v2271 = vpop.f32.mrb[0].mxu0
  %v2272 = vadd.f32 %v2076, %v2271
  %v2273 = vpop.f32.mrb[0].mxu0
  %v2274 = vpop.f32.mrb[0].mxu0
  %v2275 = vadd.f32 %v2076, %v2274
  %v2276 = vpop.f32.mrb[0].mxu0
  %2277 = vmatprep.mubr.bf16.mxu0 0
  %2278 = vmatmul.mubr.bf16.gmra.mrb[0].mxu0 %v2039
  %v2279 = vpop.f32.mrb[0].mxu0
  %v2280 = vadd.f32 %v2076, %v2279
  %v2281 = vpop.f32.mrb[0].mxu0
  %v2282 = vpop.f32.mrb[0].mxu0
  %v2283 = vadd.f32 %v2076, %v2282
  %v2284 = vpop.f32.mrb[0].mxu0
  %2285 = vmatprep.mubr.bf16.mxu0 0
  %2286 = vmatmul.mubr.bf16.gmra.mrb[0].mxu0 %v2040
  %v2287 = vpop.f32.mrb[0].mxu0
  %v2288 = vadd.f32 %v2076, %v2287
  %v2289 = vpop.f32.mrb[0].mxu0
  %v2290 = vpop.f32.mrb[0].mxu0
  %v2291 = vadd.f32 %v2076, %v2290
  %v2292 = vpop.f32.mrb[0].mxu0
  %2293 = vmatprep.mubr.bf16.mxu0 0
  %2294 = vmatmul.mubr.bf16.gmra.mrb[0].mxu0 %v2041
  %v2295 = vpop.f32.mrb[0].mxu0
  %v2296 = vadd.f32 %v2076, %v2295
  %v2297 = vpop.f32.mrb[0].mxu0
  %v2298 = vpop.f32.mrb[0].mxu0
  %v2299 = vadd.f32 %v2076, %v2298
  %v2300 = vpop.f32.mrb[0].mxu0
  %2301 = vmatprep.mubr.bf16.mxu0 0
  %2302 = vmatmul.mubr.bf16.gmra.mrb[0].mxu0 %v2042
  %v2303 = vpop.f32.mrb[0].mxu0
  %v2304 = vadd.f32 %v2076, %v2303
  %v2305 = vpop.f32.mrb[0].mxu0
  %v2306 = vpop.f32.mrb[0].mxu0
  %v2307 = vadd.f32 %v2076, %v2306
  %v2308 = vpop.f32.mrb[0].mxu0
  %2309 = vmatprep.mubr.bf16.mxu0 0
  %2310 = vmatmul.mubr.bf16.gmra.mrb[0].mxu0 %v2043
  %v2311 = vpop.f32.mrb[0].mxu0
  %v2312 = vadd.f32 %v2076, %v2311
  %v2313 = vpop.f32.mrb[0].mxu0
  %v2314 = vpop.f32.mrb[0].mxu0
  %v2315 = vadd.f32 %v2076, %v2314
  %v2316 = vpop.f32.mrb[0].mxu0
  %2317 = vmatprep.mubr.bf16.mxu0 0
  %2318 = vmatmul.mubr.bf16.gmra.mrb[0].mxu0 %v2044
  %v2319 = vpop.f32.mrb[0].mxu0
  %v2320 = vadd.f32 %v2076, %v2319
  %v2321 = vpop.f32.mrb[0].mxu0
  %v2322 = vpop.f32.mrb[0].mxu0
  %v2323 = vadd.f32 %v2076, %v2322
  %v2324 = vpop.f32.mrb[0].mxu0
  %2325 = vmatprep.mubr.bf16.mxu0 0
  %2326 = vmatmul.mubr.bf16.gmra.mrb[0].mxu0 %v2045
  %v2327 = vpop.f32.mrb[0].mxu0
  %v2328 = vadd.f32 %v2076, %v2327
  %v2329 = vpop.f32.mrb[0].mxu0
  %v2330 = vpop.f32.mrb[0].mxu0
  %v2331 = vadd.f32 %v2076, %v2330
  %v2332 = vpop.f32.mrb[0].mxu0
  %2333 = vmatprep.mubr.bf16.mxu0 0
  %2334 = vmatmul.mubr.bf16.gmra.mrb[0].mxu0 %v2046
  %v2335 = vpop.f32.mrb[0].mxu0
  %v2336 = vadd.f32 %v2076, %v2335
  %v2337 = vpop.f32.mrb[0].mxu0
  %v2338 = vpop.f32.mrb[0].mxu0
  %v2339 = vadd.f32 %v2076, %v2338
  %v2340 = vpop.f32.mrb[0].mxu0
  %2341 = vmatprep.mubr.bf16.mxu0 0
  %2342 = vmatmul.mubr.bf16.gmra.mrb[0].mxu0 %v2047
  %v2343 = vpop.f32.mrb[0].mxu0
  %v2344 = vadd.f32 %v2076, %v2343
  %v2345 = vpop.f32.mrb[0].mxu0
  %v2346 = vpop.f32.mrb[0].mxu0
  %v2347 = vadd.f32 %v2076, %v2346
  %v2348 = vpop.f32.mrb[0].mxu0
  %2349 = vmatprep.mubr.bf16.mxu0 0
  %2350 = vmatmul.mubr.bf16.gmra.mrb[0].mxu0 %v2048
  %v2351 = vpop.f32.mrb[0].mxu0
  %v2352 = vadd.f32 %v2076, %v2351
  %v2353 = vpop.f32.mrb[0].mxu0
  %v2354 = vpop.f32.mrb[0].mxu0
  %v2355 = vadd.f32 %v2076, %v2354
  %v2356 = vpop.f32.mrb[0].mxu0
  %2357 = vmatprep.mubr.bf16.mxu0 0
  %2358 = vmatmul.mubr.bf16.gmra.mrb[0].mxu0 %v2049
  %v2359 = vpop.f32.mrb[0].mxu0
  %v2360 = vadd.f32 %v2076, %v2359
  %v2361 = vpop.f32.mrb[0].mxu0
  %v2362 = vpop.f32.mrb[0].mxu0
  %v2363 = vadd.f32 %v2076, %v2362
  %v2364 = vpop.f32.mrb[0].mxu0
  %2365 = vmatprep.mubr.bf16.mxu0 0
  %2366 = vmatmul.mubr.bf16.gmra.mrb[0].mxu0 %v2050
  %v2367 = vpop.f32.mrb[0].mxu0
  %v2368 = vadd.f32 %v2076, %v2367
  %v2369 = vpop.f32.mrb[0].mxu0
  %v2370 = vpop.f32.mrb[0].mxu0
  %v2371 = vadd.f32 %v2076, %v2370
  %v2372 = vpop.f32.mrb[0].mxu0
  %2373 = vmatprep.mubr.bf16.mxu0 0
  %2374 = vmatmul.mubr.bf16.gmra.mrb[0].mxu0 %v2051
  %v2375 = vpop.f32.mrb[0].mxu0
  %v2376 = vadd.f32 %v2076, %v2375
  %v2377 = vpop.f32.mrb[0].mxu0
  %v2378 = vpop.f32.mrb[0].mxu0
  %v2379 = vadd.f32 %v2076, %v2378
  %v2380 = vpop.f32.mrb[0].mxu0
  %2381 = vmatprep.mubr.bf16.mxu0 0
  %2382 = vmatmul.mubr.bf16.gmra.mrb[0].mxu0 %v2052
  %v2383 = vpop.f32.mrb[0].mxu0
  %v2384 = vadd.f32 %v2076, %v2383
  %v2385 = vpop.f32.mrb[0].mxu0
  %v2386 = vpop.f32.mrb[0].mxu0
  %v2387 = vadd.f32 %v2076, %v2386
  %v2388 = vpop.f32.mrb[0].mxu0
  %2389 = vmatprep.mubr.bf16.mxu0 0
  %2390 = vmatmul.mubr.bf16.gmra.mrb[0].mxu0 %v2053
  %v2391 = vpop.f32.mrb[0].mxu0
  %v2392 = vadd.f32 %v2076, %v2391
  %v2393 = vpop.f32.mrb[0].mxu0
  %v2394 = vpop.f32.mrb[0].mxu0
  %v2395 = vadd.f32 %v2076, %v2394
  %v2396 = vpop.f32.mrb[0].mxu0
  %2397 = vmatprep.mubr.bf16.mxu0 0
  %2398 = vmatmul.mubr.bf16.gmra.mrb[0].mxu0 %v2054
  %v2399 = vpop.f32.mrb[0].mxu0
  %v2400 = vadd.f32 %v2076, %v2399
  %v2401 = vpop.f32.mrb[0].mxu0
  %v2402 = vpop.f32.mrb[0].mxu0
  %v2403 = vadd.f32 %v2076, %v2402
  %v2404 = vpop.f32.mrb[0].mxu0
  %2405 = vmatprep.mubr.bf16.mxu0 0
  %2406 = vmatmul.mubr.bf16.gmra.mrb[0].mxu0 %v2055
  %v2407 = vpop.f32.mrb[0].mxu0
  %v2408 = vadd.f32 %v2076, %v2407
  %v2409 = vpop.f32.mrb[0].mxu0
  %v2410 = vpop.f32.mrb[0].mxu0
  %v2411 = vadd.f32 %v2076, %v2410
  %v2412 = vpop.f32.mrb[0].mxu0
  %2413 = vdwg.mxu0
  %vm2414 = vcmp.gt.f32.partialorder %v2160, 0.0
  %vm2415 = vcmp.gt.f32.partialorder %v2163, 0.0
  %vm2416 = vcmp.gt.f32.partialorder %v2168, 0.0
  %vm2417 = vcmp.gt.f32.partialorder %v2171, 0.0
  %vm2418 = vcmp.gt.f32.partialorder %v2176, 0.0
  %vm2419 = vcmp.gt.f32.partialorder %v2179, 0.0
  %vm2420 = vcmp.gt.f32.partialorder %v2184, 0.0
  %vm2421 = vcmp.gt.f32.partialorder %v2187, 0.0
  %vm2422 = vcmp.gt.f32.partialorder %v2192, 0.0
  %vm2423 = vcmp.gt.f32.partialorder %v2195, 0.0
  %vm2424 = vcmp.gt.f32.partialorder %v2200, 0.0
  %vm2425 = vcmp.gt.f32.partialorder %v2203, 0.0
  %vm2426 = vcmp.gt.f32.partialorder %v2208, 0.0
  %vm2427 = vcmp.gt.f32.partialorder %v2211, 0.0
  %vm2428 = vcmp.gt.f32.partialorder %v2216, 0.0
  %vm2429 = vcmp.gt.f32.partialorder %v2219, 0.0
  %vm2430 = vcmp.gt.f32.partialorder %v2224, 0.0
  %vm2431 = vcmp.gt.f32.partialorder %v2227, 0.0
  %vm2432 = vcmp.gt.f32.partialorder %v2232, 0.0
  %vm2433 = vcmp.gt.f32.partialorder %v2235, 0.0
  %vm2434 = vcmp.gt.f32.partialorder %v2240, 0.0
  %vm2435 = vcmp.gt.f32.partialorder %v2243, 0.0
  %vm2436 = vcmp.gt.f32.partialorder %v2248, 0.0
  %vm2437 = vcmp.gt.f32.partialorder %v2251, 0.0
  %vm2438 = vcmp.gt.f32.partialorder %v2256, 0.0
  %vm2439 = vcmp.gt.f32.partialorder %v2259, 0.0
  %vm2440 = vcmp.gt.f32.partialorder %v2264, 0.0
  %vm2441 = vcmp.gt.f32.partialorder %v2267, 0.0
  %vm2442 = vcmp.gt.f32.partialorder %v2272, 0.0
  %vm2443 = vcmp.gt.f32.partialorder %v2275, 0.0
  %vm2444 = vcmp.gt.f32.partialorder %v2280, 0.0
  %vm2445 = vcmp.gt.f32.partialorder %v2283, 0.0
  %vm2446 = vcmp.gt.f32.partialorder %v2288, 0.0
  %vm2447 = vcmp.gt.f32.partialorder %v2291, 0.0
  %vm2448 = vcmp.gt.f32.partialorder %v2296, 0.0
  %vm2449 = vcmp.gt.f32.partialorder %v2299, 0.0
  %vm2450 = vcmp.gt.f32.partialorder %v2304, 0.0
  %vm2451 = vcmp.gt.f32.partialorder %v2307, 0.0
  %vm2452 = vcmp.gt.f32.partialorder %v2312, 0.0
  %vm2453 = vcmp.gt.f32.partialorder %v2315, 0.0
  %vm2454 = vcmp.gt.f32.partialorder %v2320, 0.0
  %vm2455 = vcmp.gt.f32.partialorder %v2323, 0.0
  %vm2456 = vcmp.gt.f32.partialorder %v2328, 0.0
  %vm2457 = vcmp.gt.f32.partialorder %v2331, 0.0
  %vm2458 = vcmp.gt.f32.partialorder %v2336, 0.0
  %vm2459 = vcmp.gt.f32.partialorder %v2339, 0.0
  %vm2460 = vcmp.gt.f32.partialorder %v2344, 0.0
  %vm2461 = vcmp.gt.f32.partialorder %v2347, 0.0
  %vm2462 = vcmp.gt.f32.partialorder %v2352, 0.0
  %vm2463 = vcmp.gt.f32.partialorder %v2355, 0.0
  %vm2464 = vcmp.gt.f32.partialorder %v2360, 0.0
  %vm2465 = vcmp.gt.f32.partialorder %v2363, 0.0
  %vm2466 = vcmp.gt.f32.partialorder %v2368, 0.0
  %vm2467 = vcmp.gt.f32.partialorder %v2371, 0.0
  %vm2468 = vcmp.gt.f32.partialorder %v2376, 0.0
  %vm2469 = vcmp.gt.f32.partialorder %v2379, 0.0
  %vm2470 = vcmp.gt.f32.partialorder %v2384, 0.0
  %vm2471 = vcmp.gt.f32.partialorder %v2387, 0.0
  %vm2472 = vcmp.gt.f32.partialorder %v2392, 0.0
  %vm2473 = vcmp.gt.f32.partialorder %v2395, 0.0
  %vm2474 = vcmp.gt.f32.partialorder %v2400, 0.0
  %vm2475 = vcmp.gt.f32.partialorder %v2403, 0.0
  %vm2476 = vcmp.gt.f32.partialorder %v2408, 0.0
  %vm2477 = vcmp.gt.f32.partialorder %v2411, 0.0
  %v2478 = vmul.f32 %v2160, 0.01
  %v2479 = vmul.f32 %v2163, 0.01
  %v2480 = vmul.f32 %v2168, 0.01
  %v2481 = vmul.f32 %v2171, 0.01
  %v2482 = vmul.f32 %v2176, 0.01
  %v2483 = vmul.f32 %v2179, 0.01
  %v2484 = vmul.f32 %v2184, 0.01
  %v2485 = vmul.f32 %v2187, 0.01
  %v2486 = vmul.f32 %v2192, 0.01
  %v2487 = vmul.f32 %v2195, 0.01
  %v2488 = vmul.f32 %v2200, 0.01
  %v2489 = vmul.f32 %v2203, 0.01
  %v2490 = vmul.f32 %v2208, 0.01
  %v2491 = vmul.f32 %v2211, 0.01
  %v2492 = vmul.f32 %v2216, 0.01
  %v2493 = vmul.f32 %v2219, 0.01
  %v2494 = vmul.f32 %v2224, 0.01
  %v2495 = vmul.f32 %v2227, 0.01
  %v2496 = vmul.f32 %v2232, 0.01
  %v2497 = vmul.f32 %v2235, 0.01
  %v2498 = vmul.f32 %v2240, 0.01
  %v2499 = vmul.f32 %v2243, 0.01
  %v2500 = vmul.f32 %v2248, 0.01
  %v2501 = vmul.f32 %v2251, 0.01
  %v2502 = vmul.f32 %v2256, 0.01
  %v2503 = vmul.f32 %v2259, 0.01
  %v2504 = vmul.f32 %v2264, 0.01
  %v2505 = vmul.f32 %v2267, 0.01
  %v2506 = vmul.f32 %v2272, 0.01
  %v2507 = vmul.f32 %v2275, 0.01
  %v2508 = vmul.f32 %v2280, 0.01
  %v2509 = vmul.f32 %v2283, 0.01
  %v2510 = vmul.f32 %v2288, 0.01
  %v2511 = vmul.f32 %v2291, 0.01
  %v2512 = vmul.f32 %v2296, 0.01
  %v2513 = vmul.f32 %v2299, 0.01
  %v2514 = vmul.f32 %v2304, 0.01
  %v2515 = vmul.f32 %v2307, 0.01
  %v2516 = vmul.f32 %v2312, 0.01
  %v2517 = vmul.f32 %v2315, 0.01
  %v2518 = vmul.f32 %v2320, 0.01
  %v2519 = vmul.f32 %v2323, 0.01
  %v2520 = vmul.f32 %v2328, 0.01
  %v2521 = vmul.f32 %v2331, 0.01
  %v2522 = vmul.f32 %v2336, 0.01
  %v2523 = vmul.f32 %v2339, 0.01
  %v2524 = vmul.f32 %v2344, 0.01
  %v2525 = vmul.f32 %v2347, 0.01
  %v2526 = vmul.f32 %v2352, 0.01
  %v2527 = vmul.f32 %v2355, 0.01
  %v2528 = vmul.f32 %v2360, 0.01
  %v2529 = vmul.f32 %v2363, 0.01
  %v2530 = vmul.f32 %v2368, 0.01
  %v2531 = vmul.f32 %v2371, 0.01
  %v2532 = vmul.f32 %v2376, 0.01
  %v2533 = vmul.f32 %v2379, 0.01
  %v2534 = vmul.f32 %v2384, 0.01
  %v2535 = vmul.f32 %v2387, 0.01
  %v2536 = vmul.f32 %v2392, 0.01
  %v2537 = vmul.f32 %v2395, 0.01
  %v2538 = vmul.f32 %v2400, 0.01
  %v2539 = vmul.f32 %v2403, 0.01
  %v2540 = vmul.f32 %v2408, 0.01
  %v2541 = vmul.f32 %v2411, 0.01
  %v2542 = vsel %vm2414, %v2160, %v2478
  %v2543 = vsel %vm2415, %v2163, %v2479
  %v2544 = vsel %vm2416, %v2168, %v2480
  %v2545 = vsel %vm2417, %v2171, %v2481
  %v2546 = vsel %vm2418, %v2176, %v2482
  %v2547 = vsel %vm2419, %v2179, %v2483
  %v2548 = vsel %vm2420, %v2184, %v2484
  %v2549 = vsel %vm2421, %v2187, %v2485
  %v2550 = vsel %vm2422, %v2192, %v2486
  %v2551 = vsel %vm2423, %v2195, %v2487
  %v2552 = vsel %vm2424, %v2200, %v2488
  %v2553 = vsel %vm2425, %v2203, %v2489
  %v2554 = vsel %vm2426, %v2208, %v2490
  %v2555 = vsel %vm2427, %v2211, %v2491
  %v2556 = vsel %vm2428, %v2216, %v2492
  %v2557 = vsel %vm2429, %v2219, %v2493
  %v2558 = vsel %vm2430, %v2224, %v2494
  %v2559 = vsel %vm2431, %v2227, %v2495
  %v2560 = vsel %vm2432, %v2232, %v2496
  %v2561 = vsel %vm2433, %v2235, %v2497
  %v2562 = vsel %vm2434, %v2240, %v2498
  %v2563 = vsel %vm2435, %v2243, %v2499
  %v2564 = vsel %vm2436, %v2248, %v2500
  %v2565 = vsel %vm2437, %v2251, %v2501
  %v2566 = vsel %vm2438, %v2256, %v2502
  %v2567 = vsel %vm2439, %v2259, %v2503
  %v2568 = vsel %vm2440, %v2264, %v2504
  %v2569 = vsel %vm2441, %v2267, %v2505
  %v2570 = vsel %vm2442, %v2272, %v2506
  %v2571 = vsel %vm2443, %v2275, %v2507
  %v2572 = vsel %vm2444, %v2280, %v2508
  %v2573 = vsel %vm2445, %v2283, %v2509
  %v2574 = vsel %vm2446, %v2288, %v2510
  %v2575 = vsel %vm2447, %v2291, %v2511
  %v2576 = vsel %vm2448, %v2296, %v2512
  %v2577 = vsel %vm2449, %v2299, %v2513
  %v2578 = vsel %vm2450, %v2304, %v2514
  %v2579 = vsel %vm2451, %v2307, %v2515
  %v2580 = vsel %vm2452, %v2312, %v2516
  %v2581 = vsel %vm2453, %v2315, %v2517
  %v2582 = vsel %vm2454, %v2320, %v2518
  %v2583 = vsel %vm2455, %v2323, %v2519
  %v2584 = vsel %vm2456, %v2328, %v2520
  %v2585 = vsel %vm2457, %v2331, %v2521
  %v2586 = vsel %vm2458, %v2336, %v2522
  %v2587 = vsel %vm2459, %v2339, %v2523
  %v2588 = vsel %vm2460, %v2344, %v2524
  %v2589 = vsel %vm2461, %v2347, %v2525
  %v2590 = vsel %vm2462, %v2352, %v2526
  %v2591 = vsel %vm2463, %v2355, %v2527
  %v2592 = vsel %vm2464, %v2360, %v2528
  %v2593 = vsel %vm2465, %v2363, %v2529
  %v2594 = vsel %vm2466, %v2368, %v2530
  %v2595 = vsel %vm2467, %v2371, %v2531
  %v2596 = vsel %vm2468, %v2376, %v2532
  %v2597 = vsel %vm2469, %v2379, %v2533
  %v2598 = vsel %vm2470, %v2384, %v2534
  %v2599 = vsel %vm2471, %v2387, %v2535
  %v2600 = vsel %vm2472, %v2392, %v2536
  %v2601 = vsel %vm2473, %v2395, %v2537
  %v2602 = vsel %vm2474, %v2400, %v2538
  %v2603 = vsel %vm2475, %v2403, %v2539
  %v2604 = vsel %vm2476, %v2408, %v2540
  %v2605 = vsel %vm2477, %v2411, %v2541
  %v2606 = vpack.c.bf16 %v2543, %v2542
  %v2607 = vpack.c.bf16 %v2545, %v2544
  %v2608 = vpack.c.bf16 %v2547, %v2546
  %v2609 = vpack.c.bf16 %v2549, %v2548
  %v2610 = vpack.c.bf16 %v2551, %v2550
  %v2611 = vpack.c.bf16 %v2553, %v2552
  %v2612 = vpack.c.bf16 %v2555, %v2554
  %v2613 = vpack.c.bf16 %v2557, %v2556
  %v2614 = vpack.c.bf16 %v2559, %v2558
  %v2615 = vpack.c.bf16 %v2561, %v2560
  %v2616 = vpack.c.bf16 %v2563, %v2562
  %v2617 = vpack.c.bf16 %v2565, %v2564
  %v2618 = vpack.c.bf16 %v2567, %v2566
  %v2619 = vpack.c.bf16 %v2569, %v2568
  %v2620 = vpack.c.bf16 %v2571, %v2570
  %v2621 = vpack.c.bf16 %v2573, %v2572
  %v2622 = vpack.c.bf16 %v2575, %v2574
  %v2623 = vpack.c.bf16 %v2577, %v2576
  %v2624 = vpack.c.bf16 %v2579, %v2578
  %v2625 = vpack.c.bf16 %v2581, %v2580
  %v2626 = vpack.c.bf16 %v2583, %v2582
  %v2627 = vpack.c.bf16 %v2585, %v2584
  %v2628 = vpack.c.bf16 %v2587, %v2586
  %v2629 = vpack.c.bf16 %v2589, %v2588
  %v2630 = vpack.c.bf16 %v2591, %v2590
  %v2631 = vpack.c.bf16 %v2593, %v2592
  %v2632 = vpack.c.bf16 %v2595, %v2594
  %v2633 = vpack.c.bf16 %v2597, %v2596
  %v2634 = vpack.c.bf16 %v2599, %v2598
  %v2635 = vpack.c.bf16 %v2601, %v2600
  %v2636 = vpack.c.bf16 %v2603, %v2602
  %v2637 = vpack.c.bf16 %v2605, %v2604
  %v2638 = vld [vmem:[%s4] sm:$0xf]
  %v2639 = vld [vmem:[%s4 + $0x4] sm:$0xf]
  %v2640 = vld [vmem:[%s4 + $0x8] sm:$0xf]
  %v2641 = vld [vmem:[%s4 + $0xc] sm:$0xf]
  %v2642 = vld [vmem:[%s4 + $0x10] sm:$0xf]
  %v2643 = vld [vmem:[%s4 + $0x14] sm:$0xf]
  %v2644 = vld [vmem:[%s4 + $0x18] sm:$0xf]
  %v2645 = vld [vmem:[%s4 + $0x1c] sm:$0xf]
  %v2646 = vld [vmem:[%s4 + $0x20] sm:$0xf]
  %v2647 = vld [vmem:[%s4 + $0x24] sm:$0xf]
  %v2648 = vld [vmem:[%s4 + $0x28] sm:$0xf]
  %v2649 = vld [vmem:[%s4 + $0x2c] sm:$0xf]
  %v2650 = vld [vmem:[%s4 + $0x30] sm:$0xf]
  %v2651 = vld [vmem:[%s4 + $0x34] sm:$0xf]
  %v2652 = vld [vmem:[%s4 + $0x38] sm:$0xf]
  %v2653 = vld [vmem:[%s4 + $0x3c] sm:$0xf]
  %v2654 = vld [vmem:[%s6 + $0x3] sm:$0x1]
  %v2655 = vlaneseq
  %v2656 = vshrl.u32 %v2655, 7
  %v2657 = vsub.s32 0, %v2656
  %v2658 = vrot.slane %v2654, %v2657
  %v2675 = vunpack.c.l.b16 %v2638
  %v2676 = vunpack.c.l.b16 %v2639
  %v2677 = vunpack.c.l.b16 %v2640
  %v2678 = vunpack.c.l.b16 %v2641
  %v2679 = vunpack.c.l.b16 %v2642
  %v2680 = vunpack.c.l.b16 %v2643
  %v2681 = vunpack.c.l.b16 %v2644
  %v2682 = vunpack.c.l.b16 %v2645
  %v2683 = vunpack.c.l.b16 %v2646
  %v2684 = vunpack.c.l.b16 %v2647
  %v2685 = vunpack.c.l.b16 %v2648
  %v2686 = vunpack.c.l.b16 %v2649
  %v2687 = vunpack.c.l.b16 %v2650
  %v2688 = vunpack.c.l.b16 %v2651
  %v2689 = vunpack.c.l.b16 %v2652
  %v2690 = vunpack.c.l.b16 %v2653
  %v2691 = vpack.c.b16 %v2676, %v2675
  %v2692 = vpack.c.b16 %v2678, %v2677
  %v2693 = vpack.c.b16 %v2680, %v2679
  %v2694 = vpack.c.b16 %v2682, %v2681
  %v2695 = vpack.c.b16 %v2684, %v2683
  %v2696 = vpack.c.b16 %v2686, %v2685
  %v2697 = vpack.c.b16 %v2688, %v2687
  %v2698 = vpack.c.b16 %v2690, %v2689
  %2707 = vmatprep.subr.bf16.mxu0 0
  %2708 = vmatpush1.bf16.msra.mxu0 %v2691
  %2709 = vmatprep.subr.bf16.mxu0 0
  %2710 = vmatpush1.bf16.msra.mxu0 %v2692
  %2711 = vmatprep.subr.bf16.mxu0 0
  %2712 = vmatpush1.bf16.msra.mxu0 %v2693
  %2713 = vmatprep.subr.bf16.mxu0 0
  %2714 = vmatpush1.bf16.msra.mxu0 %v2694
  %2715 = vmatprep.subr.bf16.mxu0 0
  %2716 = vmatpush1.bf16.msra.mxu0 %v2695
  %2717 = vmatprep.subr.bf16.mxu0 0
  %2718 = vmatpush1.bf16.msra.mxu0 %v2696
  %2719 = vmatprep.subr.bf16.mxu0 0
  %2720 = vmatpush1.bf16.msra.mxu0 %v2697
  %2721 = vmatprep.subr.bf16.mxu0 0
  %2722 = vmatpush1.bf16.msra.mxu0 %v2698
  %2723 = vmatprep.subr.bf16.mxu0 0
  %2724 = vmatpush1.bf16.msra.mxu0 0
  %2725 = vmatprep.subr.bf16.mxu0 0
  %2726 = vmatpush1.bf16.msra.mxu0 0
  %2727 = vmatprep.subr.bf16.mxu0 0
  %2728 = vmatpush1.bf16.msra.mxu0 0
  %2729 = vmatprep.subr.bf16.mxu0 0
  %2730 = vmatpush1.bf16.msra.mxu0 0
  %2731 = vmatprep.subr.bf16.mxu0 0
  %2732 = vmatpush1.bf16.msra.mxu0 0
  %2733 = vmatprep.subr.bf16.mxu0 0
  %2734 = vmatpush1.bf16.msra.mxu0 0
  %2735 = vmatprep.subr.bf16.mxu0 0
  %2736 = vmatpush1.bf16.msra.mxu0 0
  %2737 = vmatprep.subr.bf16.mxu0 0
  %2738 = vmatpush1.bf16.msra.mxu0 0
  %2739 = vmatprep.mubr.bf16.mxu0 0
  %2740 = vmatmul.mubr.bf16.gmra.mrb[0].mxu0 %v2606
  %v2741 = vpop.f32.mrb[0].mxu0
  %v2742 = vadd.f32 %v2658, %v2741
  %v2743 = vpop.f32.mrb[0].mxu0
  %v2744 = vpop.f32.mrb[0].mxu0
  %v2745 = vadd.f32 %v2658, %v2744
  %v2746 = vpop.f32.mrb[0].mxu0
  %2747 = vmatprep.mubr.bf16.mxu0 0
  %2748 = vmatmul.mubr.bf16.gmra.mrb[0].mxu0 %v2607
  %v2749 = vpop.f32.mrb[0].mxu0
  %v2750 = vadd.f32 %v2658, %v2749
  %v2751 = vpop.f32.mrb[0].mxu0
  %v2752 = vpop.f32.mrb[0].mxu0
  %v2753 = vadd.f32 %v2658, %v2752
  %v2754 = vpop.f32.mrb[0].mxu0
  %2755 = vmatprep.mubr.bf16.mxu0 0
  %2756 = vmatmul.mubr.bf16.gmra.mrb[0].mxu0 %v2608
  %v2757 = vpop.f32.mrb[0].mxu0
  %v2758 = vadd.f32 %v2658, %v2757
  %v2759 = vpop.f32.mrb[0].mxu0
  %v2760 = vpop.f32.mrb[0].mxu0
  %v2761 = vadd.f32 %v2658, %v2760
  %v2762 = vpop.f32.mrb[0].mxu0
  %2763 = vmatprep.mubr.bf16.mxu0 0
  %2764 = vmatmul.mubr.bf16.gmra.mrb[0].mxu0 %v2609
  %v2765 = vpop.f32.mrb[0].mxu0
  %v2766 = vadd.f32 %v2658, %v2765
  %v2767 = vpop.f32.mrb[0].mxu0
  %v2768 = vpop.f32.mrb[0].mxu0
  %v2769 = vadd.f32 %v2658, %v2768
  %v2770 = vpop.f32.mrb[0].mxu0
  %2771 = vmatprep.mubr.bf16.mxu0 0
  %2772 = vmatmul.mubr.bf16.gmra.mrb[0].mxu0 %v2610
  %v2773 = vpop.f32.mrb[0].mxu0
  %v2774 = vadd.f32 %v2658, %v2773
  %v2775 = vpop.f32.mrb[0].mxu0
  %v2776 = vpop.f32.mrb[0].mxu0
  %v2777 = vadd.f32 %v2658, %v2776
  %v2778 = vpop.f32.mrb[0].mxu0
  %2779 = vmatprep.mubr.bf16.mxu0 0
  %2780 = vmatmul.mubr.bf16.gmra.mrb[0].mxu0 %v2611
  %v2781 = vpop.f32.mrb[0].mxu0
  %v2782 = vadd.f32 %v2658, %v2781
  %v2783 = vpop.f32.mrb[0].mxu0
  %v2784 = vpop.f32.mrb[0].mxu0
  %v2785 = vadd.f32 %v2658, %v2784
  %v2786 = vpop.f32.mrb[0].mxu0
  %2787 = vmatprep.mubr.bf16.mxu0 0
  %2788 = vmatmul.mubr.bf16.gmra.mrb[0].mxu0 %v2612
  %v2789 = vpop.f32.mrb[0].mxu0
  %v2790 = vadd.f32 %v2658, %v2789
  %v2791 = vpop.f32.mrb[0].mxu0
  %v2792 = vpop.f32.mrb[0].mxu0
  %v2793 = vadd.f32 %v2658, %v2792
  %v2794 = vpop.f32.mrb[0].mxu0
  %2795 = vmatprep.mubr.bf16.mxu0 0
  %2796 = vmatmul.mubr.bf16.gmra.mrb[0].mxu0 %v2613
  %v2797 = vpop.f32.mrb[0].mxu0
  %v2798 = vadd.f32 %v2658, %v2797
  %v2799 = vpop.f32.mrb[0].mxu0
  %v2800 = vpop.f32.mrb[0].mxu0
  %v2801 = vadd.f32 %v2658, %v2800
  %v2802 = vpop.f32.mrb[0].mxu0
  %2803 = vmatprep.mubr.bf16.mxu0 0
  %2804 = vmatmul.mubr.bf16.gmra.mrb[0].mxu0 %v2614
  %v2805 = vpop.f32.mrb[0].mxu0
  %v2806 = vadd.f32 %v2658, %v2805
  %v2807 = vpop.f32.mrb[0].mxu0
  %v2808 = vpop.f32.mrb[0].mxu0
  %v2809 = vadd.f32 %v2658, %v2808
  %v2810 = vpop.f32.mrb[0].mxu0
  %2811 = vmatprep.mubr.bf16.mxu0 0
  %2812 = vmatmul.mubr.bf16.gmra.mrb[0].mxu0 %v2615
  %v2813 = vpop.f32.mrb[0].mxu0
  %v2814 = vadd.f32 %v2658, %v2813
  %v2815 = vpop.f32.mrb[0].mxu0
  %v2816 = vpop.f32.mrb[0].mxu0
  %v2817 = vadd.f32 %v2658, %v2816
  %v2818 = vpop.f32.mrb[0].mxu0
  %2819 = vmatprep.mubr.bf16.mxu0 0
  %2820 = vmatmul.mubr.bf16.gmra.mrb[0].mxu0 %v2616
  %v2821 = vpop.f32.mrb[0].mxu0
  %v2822 = vadd.f32 %v2658, %v2821
  %v2823 = vpop.f32.mrb[0].mxu0
  %v2824 = vpop.f32.mrb[0].mxu0
  %v2825 = vadd.f32 %v2658, %v2824
  %v2826 = vpop.f32.mrb[0].mxu0
  %2827 = vmatprep.mubr.bf16.mxu0 0
  %2828 = vmatmul.mubr.bf16.gmra.mrb[0].mxu0 %v2617
  %v2829 = vpop.f32.mrb[0].mxu0
  %v2830 = vadd.f32 %v2658, %v2829
  %v2831 = vpop.f32.mrb[0].mxu0
  %v2832 = vpop.f32.mrb[0].mxu0
  %v2833 = vadd.f32 %v2658, %v2832
  %v2834 = vpop.f32.mrb[0].mxu0
  %2835 = vmatprep.mubr.bf16.mxu0 0
  %2836 = vmatmul.mubr.bf16.gmra.mrb[0].mxu0 %v2618
  %v2837 = vpop.f32.mrb[0].mxu0
  %v2838 = vadd.f32 %v2658, %v2837
  %v2839 = vpop.f32.mrb[0].mxu0
  %v2840 = vpop.f32.mrb[0].mxu0
  %v2841 = vadd.f32 %v2658, %v2840
  %v2842 = vpop.f32.mrb[0].mxu0
  %2843 = vmatprep.mubr.bf16.mxu0 0
  %2844 = vmatmul.mubr.bf16.gmra.mrb[0].mxu0 %v2619
  %v2845 = vpop.f32.mrb[0].mxu0
  %v2846 = vadd.f32 %v2658, %v2845
  %v2847 = vpop.f32.mrb[0].mxu0
  %v2848 = vpop.f32.mrb[0].mxu0
  %v2849 = vadd.f32 %v2658, %v2848
  %v2850 = vpop.f32.mrb[0].mxu0
  %2851 = vmatprep.mubr.bf16.mxu0 0
  %2852 = vmatmul.mubr.bf16.gmra.mrb[0].mxu0 %v2620
  %v2853 = vpop.f32.mrb[0].mxu0
  %v2854 = vadd.f32 %v2658, %v2853
  %v2855 = vpop.f32.mrb[0].mxu0
  %v2856 = vpop.f32.mrb[0].mxu0
  %v2857 = vadd.f32 %v2658, %v2856
  %v2858 = vpop.f32.mrb[0].mxu0
  %2859 = vmatprep.mubr.bf16.mxu0 0
  %2860 = vmatmul.mubr.bf16.gmra.mrb[0].mxu0 %v2621
  %v2861 = vpop.f32.mrb[0].mxu0
  %v2862 = vadd.f32 %v2658, %v2861
  %v2863 = vpop.f32.mrb[0].mxu0
  %v2864 = vpop.f32.mrb[0].mxu0
  %v2865 = vadd.f32 %v2658, %v2864
  %v2866 = vpop.f32.mrb[0].mxu0
  %2867 = vmatprep.mubr.bf16.mxu0 0
  %2868 = vmatmul.mubr.bf16.gmra.mrb[0].mxu0 %v2622
  %v2869 = vpop.f32.mrb[0].mxu0
  %v2870 = vadd.f32 %v2658, %v2869
  %v2871 = vpop.f32.mrb[0].mxu0
  %v2872 = vpop.f32.mrb[0].mxu0
  %v2873 = vadd.f32 %v2658, %v2872
  %v2874 = vpop.f32.mrb[0].mxu0
  %2875 = vmatprep.mubr.bf16.mxu0 0
  %2876 = vmatmul.mubr.bf16.gmra.mrb[0].mxu0 %v2623
  %v2877 = vpop.f32.mrb[0].mxu0
  %v2878 = vadd.f32 %v2658, %v2877
  %v2879 = vpop.f32.mrb[0].mxu0
  %v2880 = vpop.f32.mrb[0].mxu0
  %v2881 = vadd.f32 %v2658, %v2880
  %v2882 = vpop.f32.mrb[0].mxu0
  %2883 = vmatprep.mubr.bf16.mxu0 0
  %2884 = vmatmul.mubr.bf16.gmra.mrb[0].mxu0 %v2624
  %v2885 = vpop.f32.mrb[0].mxu0
  %v2886 = vadd.f32 %v2658, %v2885
  %v2887 = vpop.f32.mrb[0].mxu0
  %v2888 = vpop.f32.mrb[0].mxu0
  %v2889 = vadd.f32 %v2658, %v2888
  %v2890 = vpop.f32.mrb[0].mxu0
  %2891 = vmatprep.mubr.bf16.mxu0 0
  %2892 = vmatmul.mubr.bf16.gmra.mrb[0].mxu0 %v2625
  %v2893 = vpop.f32.mrb[0].mxu0
  %v2894 = vadd.f32 %v2658, %v2893
  %v2895 = vpop.f32.mrb[0].mxu0
  %v2896 = vpop.f32.mrb[0].mxu0
  %v2897 = vadd.f32 %v2658, %v2896
  %v2898 = vpop.f32.mrb[0].mxu0
  %2899 = vmatprep.mubr.bf16.mxu0 0
  %2900 = vmatmul.mubr.bf16.gmra.mrb[0].mxu0 %v2626
  %v2901 = vpop.f32.mrb[0].mxu0
  %v2902 = vadd.f32 %v2658, %v2901
  %v2903 = vpop.f32.mrb[0].mxu0
  %v2904 = vpop.f32.mrb[0].mxu0
  %v2905 = vadd.f32 %v2658, %v2904
  %v2906 = vpop.f32.mrb[0].mxu0
  %2907 = vmatprep.mubr.bf16.mxu0 0
  %2908 = vmatmul.mubr.bf16.gmra.mrb[0].mxu0 %v2627
  %v2909 = vpop.f32.mrb[0].mxu0
  %v2910 = vadd.f32 %v2658, %v2909
  %v2911 = vpop.f32.mrb[0].mxu0
  %v2912 = vpop.f32.mrb[0].mxu0
  %v2913 = vadd.f32 %v2658, %v2912
  %v2914 = vpop.f32.mrb[0].mxu0
  %2915 = vmatprep.mubr.bf16.mxu0 0
  %2916 = vmatmul.mubr.bf16.gmra.mrb[0].mxu0 %v2628
  %v2917 = vpop.f32.mrb[0].mxu0
  %v2918 = vadd.f32 %v2658, %v2917
  %v2919 = vpop.f32.mrb[0].mxu0
  %v2920 = vpop.f32.mrb[0].mxu0
  %v2921 = vadd.f32 %v2658, %v2920
  %v2922 = vpop.f32.mrb[0].mxu0
  %2923 = vmatprep.mubr.bf16.mxu0 0
  %2924 = vmatmul.mubr.bf16.gmra.mrb[0].mxu0 %v2629
  %v2925 = vpop.f32.mrb[0].mxu0
  %v2926 = vadd.f32 %v2658, %v2925
  %v2927 = vpop.f32.mrb[0].mxu0
  %v2928 = vpop.f32.mrb[0].mxu0
  %v2929 = vadd.f32 %v2658, %v2928
  %v2930 = vpop.f32.mrb[0].mxu0
  %2931 = vmatprep.mubr.bf16.mxu0 0
  %2932 = vmatmul.mubr.bf16.gmra.mrb[0].mxu0 %v2630
  %v2933 = vpop.f32.mrb[0].mxu0
  %v2934 = vadd.f32 %v2658, %v2933
  %v2935 = vpop.f32.mrb[0].mxu0
  %v2936 = vpop.f32.mrb[0].mxu0
  %v2937 = vadd.f32 %v2658, %v2936
  %v2938 = vpop.f32.mrb[0].mxu0
  %2939 = vmatprep.mubr.bf16.mxu0 0
  %2940 = vmatmul.mubr.bf16.gmra.mrb[0].mxu0 %v2631
  %v2941 = vpop.f32.mrb[0].mxu0
  %v2942 = vadd.f32 %v2658, %v2941
  %v2943 = vpop.f32.mrb[0].mxu0
  %v2944 = vpop.f32.mrb[0].mxu0
  %v2945 = vadd.f32 %v2658, %v2944
  %v2946 = vpop.f32.mrb[0].mxu0
  %2947 = vmatprep.mubr.bf16.mxu0 0
  %2948 = vmatmul.mubr.bf16.gmra.mrb[0].mxu0 %v2632
  %v2949 = vpop.f32.mrb[0].mxu0
  %v2950 = vadd.f32 %v2658, %v2949
  %v2951 = vpop.f32.mrb[0].mxu0
  %v2952 = vpop.f32.mrb[0].mxu0
  %v2953 = vadd.f32 %v2658, %v2952
  %v2954 = vpop.f32.mrb[0].mxu0
  %2955 = vmatprep.mubr.bf16.mxu0 0
  %2956 = vmatmul.mubr.bf16.gmra.mrb[0].mxu0 %v2633
  %v2957 = vpop.f32.mrb[0].mxu0
  %v2958 = vadd.f32 %v2658, %v2957
  %v2959 = vpop.f32.mrb[0].mxu0
  %v2960 = vpop.f32.mrb[0].mxu0
  %v2961 = vadd.f32 %v2658, %v2960
  %v2962 = vpop.f32.mrb[0].mxu0
  %2963 = vmatprep.mubr.bf16.mxu0 0
  %2964 = vmatmul.mubr.bf16.gmra.mrb[0].mxu0 %v2634
  %v2965 = vpop.f32.mrb[0].mxu0
  %v2966 = vadd.f32 %v2658, %v2965
  %v2967 = vpop.f32.mrb[0].mxu0
  %v2968 = vpop.f32.mrb[0].mxu0
  %v2969 = vadd.f32 %v2658, %v2968
  %v2970 = vpop.f32.mrb[0].mxu0
  %2971 = vmatprep.mubr.bf16.mxu0 0
  %2972 = vmatmul.mubr.bf16.gmra.mrb[0].mxu0 %v2635
  %v2973 = vpop.f32.mrb[0].mxu0
  %v2974 = vadd.f32 %v2658, %v2973
  %v2975 = vpop.f32.mrb[0].mxu0
  %v2976 = vpop.f32.mrb[0].mxu0
  %v2977 = vadd.f32 %v2658, %v2976
  %v2978 = vpop.f32.mrb[0].mxu0
  %2979 = vmatprep.mubr.bf16.mxu0 0
  %2980 = vmatmul.mubr.bf16.gmra.mrb[0].mxu0 %v2636
  %v2981 = vpop.f32.mrb[0].mxu0
  %v2982 = vadd.f32 %v2658, %v2981
  %v2983 = vpop.f32.mrb[0].mxu0
  %v2984 = vpop.f32.mrb[0].mxu0
  %v2985 = vadd.f32 %v2658, %v2984
  %v2986 = vpop.f32.mrb[0].mxu0
  %2987 = vmatprep.mubr.bf16.mxu0 0
  %2988 = vmatmul.mubr.bf16.gmra.mrb[0].mxu0 %v2637
  %v2989 = vpop.f32.mrb[0].mxu0
  %v2990 = vadd.f32 %v2658, %v2989
  %v2991 = vpop.f32.mrb[0].mxu0
  %v2992 = vpop.f32.mrb[0].mxu0
  %v2993 = vadd.f32 %v2658, %v2992
  %v2994 = vpop.f32.mrb[0].mxu0
  %2995 = vdwg.mxu0
  %vm2996 = vcmp.gt.f32.partialorder %v2742, 0.0
  %vm2997 = vcmp.gt.f32.partialorder %v2745, 0.0
  %vm2998 = vcmp.gt.f32.partialorder %v2750, 0.0
  %vm2999 = vcmp.gt.f32.partialorder %v2753, 0.0
  %vm3000 = vcmp.gt.f32.partialorder %v2758, 0.0
  %vm3001 = vcmp.gt.f32.partialorder %v2761, 0.0
  %vm3002 = vcmp.gt.f32.partialorder %v2766, 0.0
  %vm3003 = vcmp.gt.f32.partialorder %v2769, 0.0
  %vm3004 = vcmp.gt.f32.partialorder %v2774, 0.0
  %vm3005 = vcmp.gt.f32.partialorder %v2777, 0.0
  %vm3006 = vcmp.gt.f32.partialorder %v2782, 0.0
  %vm3007 = vcmp.gt.f32.partialorder %v2785, 0.0
  %vm3008 = vcmp.gt.f32.partialorder %v2790, 0.0
  %vm3009 = vcmp.gt.f32.partialorder %v2793, 0.0
  %vm3010 = vcmp.gt.f32.partialorder %v2798, 0.0
  %vm3011 = vcmp.gt.f32.partialorder %v2801, 0.0
  %vm3012 = vcmp.gt.f32.partialorder %v2806, 0.0
  %vm3013 = vcmp.gt.f32.partialorder %v2809, 0.0
  %vm3014 = vcmp.gt.f32.partialorder %v2814, 0.0
  %vm3015 = vcmp.gt.f32.partialorder %v2817, 0.0
  %vm3016 = vcmp.gt.f32.partialorder %v2822, 0.0
  %vm3017 = vcmp.gt.f32.partialorder %v2825, 0.0
  %vm3018 = vcmp.gt.f32.partialorder %v2830, 0.0
  %vm3019 = vcmp.gt.f32.partialorder %v2833, 0.0
  %vm3020 = vcmp.gt.f32.partialorder %v2838, 0.0
  %vm3021 = vcmp.gt.f32.partialorder %v2841, 0.0
  %vm3022 = vcmp.gt.f32.partialorder %v2846, 0.0
  %vm3023 = vcmp.gt.f32.partialorder %v2849, 0.0
  %vm3024 = vcmp.gt.f32.partialorder %v2854, 0.0
  %vm3025 = vcmp.gt.f32.partialorder %v2857, 0.0
  %vm3026 = vcmp.gt.f32.partialorder %v2862, 0.0
  %vm3027 = vcmp.gt.f32.partialorder %v2865, 0.0
  %vm3028 = vcmp.gt.f32.partialorder %v2870, 0.0
  %vm3029 = vcmp.gt.f32.partialorder %v2873, 0.0
  %vm3030 = vcmp.gt.f32.partialorder %v2878, 0.0
  %vm3031 = vcmp.gt.f32.partialorder %v2881, 0.0
  %vm3032 = vcmp.gt.f32.partialorder %v2886, 0.0
  %vm3033 = vcmp.gt.f32.partialorder %v2889, 0.0
  %vm3034 = vcmp.gt.f32.partialorder %v2894, 0.0
  %vm3035 = vcmp.gt.f32.partialorder %v2897, 0.0
  %vm3036 = vcmp.gt.f32.partialorder %v2902, 0.0
  %vm3037 = vcmp.gt.f32.partialorder %v2905, 0.0
  %vm3038 = vcmp.gt.f32.partialorder %v2910, 0.0
  %vm3039 = vcmp.gt.f32.partialorder %v2913, 0.0
  %vm3040 = vcmp.gt.f32.partialorder %v2918, 0.0
  %vm3041 = vcmp.gt.f32.partialorder %v2921, 0.0
  %vm3042 = vcmp.gt.f32.partialorder %v2926, 0.0
  %vm3043 = vcmp.gt.f32.partialorder %v2929, 0.0
  %vm3044 = vcmp.gt.f32.partialorder %v2934, 0.0
  %vm3045 = vcmp.gt.f32.partialorder %v2937, 0.0
  %vm3046 = vcmp.gt.f32.partialorder %v2942, 0.0
  %vm3047 = vcmp.gt.f32.partialorder %v2945, 0.0
  %vm3048 = vcmp.gt.f32.partialorder %v2950, 0.0
  %vm3049 = vcmp.gt.f32.partialorder %v2953, 0.0
  %vm3050 = vcmp.gt.f32.partialorder %v2958, 0.0
  %vm3051 = vcmp.gt.f32.partialorder %v2961, 0.0
  %vm3052 = vcmp.gt.f32.partialorder %v2966, 0.0
  %vm3053 = vcmp.gt.f32.partialorder %v2969, 0.0
  %vm3054 = vcmp.gt.f32.partialorder %v2974, 0.0
  %vm3055 = vcmp.gt.f32.partialorder %v2977, 0.0
  %vm3056 = vcmp.gt.f32.partialorder %v2982, 0.0
  %vm3057 = vcmp.gt.f32.partialorder %v2985, 0.0
  %vm3058 = vcmp.gt.f32.partialorder %v2990, 0.0
  %vm3059 = vcmp.gt.f32.partialorder %v2993, 0.0
  %v3060 = vmul.f32 %v2742, 0.01
  %v3061 = vmul.f32 %v2745, 0.01
  %v3062 = vmul.f32 %v2750, 0.01
  %v3063 = vmul.f32 %v2753, 0.01
  %v3064 = vmul.f32 %v2758, 0.01
  %v3065 = vmul.f32 %v2761, 0.01
  %v3066 = vmul.f32 %v2766, 0.01
  %v3067 = vmul.f32 %v2769, 0.01
  %v3068 = vmul.f32 %v2774, 0.01
  %v3069 = vmul.f32 %v2777, 0.01
  %v3070 = vmul.f32 %v2782, 0.01
  %v3071 = vmul.f32 %v2785, 0.01
  %v3072 = vmul.f32 %v2790, 0.01
  %v3073 = vmul.f32 %v2793, 0.01
  %v3074 = vmul.f32 %v2798, 0.01
  %v3075 = vmul.f32 %v2801, 0.01
  %v3076 = vmul.f32 %v2806, 0.01
  %v3077 = vmul.f32 %v2809, 0.01
  %v3078 = vmul.f32 %v2814, 0.01
  %v3079 = vmul.f32 %v2817, 0.01
  %v3080 = vmul.f32 %v2822, 0.01
  %v3081 = vmul.f32 %v2825, 0.01
  %v3082 = vmul.f32 %v2830, 0.01
  %v3083 = vmul.f32 %v2833, 0.01
  %v3084 = vmul.f32 %v2838, 0.01
  %v3085 = vmul.f32 %v2841, 0.01
  %v3086 = vmul.f32 %v2846, 0.01
  %v3087 = vmul.f32 %v2849, 0.01
  %v3088 = vmul.f32 %v2854, 0.01
  %v3089 = vmul.f32 %v2857, 0.01
  %v3090 = vmul.f32 %v2862, 0.01
  %v3091 = vmul.f32 %v2865, 0.01
  %v3092 = vmul.f32 %v2870, 0.01
  %v3093 = vmul.f32 %v2873, 0.01
  %v3094 = vmul.f32 %v2878, 0.01
  %v3095 = vmul.f32 %v2881, 0.01
  %v3096 = vmul.f32 %v2886, 0.01
  %v3097 = vmul.f32 %v2889, 0.01
  %v3098 = vmul.f32 %v2894, 0.01
  %v3099 = vmul.f32 %v2897, 0.01
  %v3100 = vmul.f32 %v2902, 0.01
  %v3101 = vmul.f32 %v2905, 0.01
  %v3102 = vmul.f32 %v2910, 0.01
  %v3103 = vmul.f32 %v2913, 0.01
  %v3104 = vmul.f32 %v2918, 0.01
  %v3105 = vmul.f32 %v2921, 0.01
  %v3106 = vmul.f32 %v2926, 0.01
  %v3107 = vmul.f32 %v2929, 0.01
  %v3108 = vmul.f32 %v2934, 0.01
  %v3109 = vmul.f32 %v2937, 0.01
  %v3110 = vmul.f32 %v2942, 0.01
  %v3111 = vmul.f32 %v2945, 0.01
  %v3112 = vmul.f32 %v2950, 0.01
  %v3113 = vmul.f32 %v2953, 0.01
  %v3114 = vmul.f32 %v2958, 0.01
  %v3115 = vmul.f32 %v2961, 0.01
  %v3116 = vmul.f32 %v2966, 0.01
  %v3117 = vmul.f32 %v2969, 0.01
  %v3118 = vmul.f32 %v2974, 0.01
  %v3119 = vmul.f32 %v2977, 0.01
  %v3120 = vmul.f32 %v2982, 0.01
  %v3121 = vmul.f32 %v2985, 0.01
  %v3122 = vmul.f32 %v2990, 0.01
  %v3123 = vmul.f32 %v2993, 0.01
  %v3124 = vsel %vm2996, %v2742, %v3060
  %v3125 = vsel %vm2997, %v2745, %v3061
  %v3126 = vsel %vm2998, %v2750, %v3062
  %v3127 = vsel %vm2999, %v2753, %v3063
  %v3128 = vsel %vm3000, %v2758, %v3064
  %v3129 = vsel %vm3001, %v2761, %v3065
  %v3130 = vsel %vm3002, %v2766, %v3066
  %v3131 = vsel %vm3003, %v2769, %v3067
  %v3132 = vsel %vm3004, %v2774, %v3068
  %v3133 = vsel %vm3005, %v2777, %v3069
  %v3134 = vsel %vm3006, %v2782, %v3070
  %v3135 = vsel %vm3007, %v2785, %v3071
  %v3136 = vsel %vm3008, %v2790, %v3072
  %v3137 = vsel %vm3009, %v2793, %v3073
  %v3138 = vsel %vm3010, %v2798, %v3074
  %v3139 = vsel %vm3011, %v2801, %v3075
  %v3140 = vsel %vm3012, %v2806, %v3076
  %v3141 = vsel %vm3013, %v2809, %v3077
  %v3142 = vsel %vm3014, %v2814, %v3078
  %v3143 = vsel %vm3015, %v2817, %v3079
  %v3144 = vsel %vm3016, %v2822, %v3080
  %v3145 = vsel %vm3017, %v2825, %v3081
  %v3146 = vsel %vm3018, %v2830, %v3082
  %v3147 = vsel %vm3019, %v2833, %v3083
  %v3148 = vsel %vm3020, %v2838, %v3084
  %v3149 = vsel %vm3021, %v2841, %v3085
  %v3150 = vsel %vm3022, %v2846, %v3086
  %v3151 = vsel %vm3023, %v2849, %v3087
  %v3152 = vsel %vm3024, %v2854, %v3088
  %v3153 = vsel %vm3025, %v2857, %v3089
  %v3154 = vsel %vm3026, %v2862, %v3090
  %v3155 = vsel %vm3027, %v2865, %v3091
  %v3156 = vsel %vm3028, %v2870, %v3092
  %v3157 = vsel %vm3029, %v2873, %v3093
  %v3158 = vsel %vm3030, %v2878, %v3094
  %v3159 = vsel %vm3031, %v2881, %v3095
  %v3160 = vsel %vm3032, %v2886, %v3096
  %v3161 = vsel %vm3033, %v2889, %v3097
  %v3162 = vsel %vm3034, %v2894, %v3098
  %v3163 = vsel %vm3035, %v2897, %v3099
  %v3164 = vsel %vm3036, %v2902, %v3100
  %v3165 = vsel %vm3037, %v2905, %v3101
  %v3166 = vsel %vm3038, %v2910, %v3102
  %v3167 = vsel %vm3039, %v2913, %v3103
  %v3168 = vsel %vm3040, %v2918, %v3104
  %v3169 = vsel %vm3041, %v2921, %v3105
  %v3170 = vsel %vm3042, %v2926, %v3106
  %v3171 = vsel %vm3043, %v2929, %v3107
  %v3172 = vsel %vm3044, %v2934, %v3108
  %v3173 = vsel %vm3045, %v2937, %v3109
  %v3174 = vsel %vm3046, %v2942, %v3110
  %v3175 = vsel %vm3047, %v2945, %v3111
  %v3176 = vsel %vm3048, %v2950, %v3112
  %v3177 = vsel %vm3049, %v2953, %v3113
  %v3178 = vsel %vm3050, %v2958, %v3114
  %v3179 = vsel %vm3051, %v2961, %v3115
  %v3180 = vsel %vm3052, %v2966, %v3116
  %v3181 = vsel %vm3053, %v2969, %v3117
  %v3182 = vsel %vm3054, %v2974, %v3118
  %v3183 = vsel %vm3055, %v2977, %v3119
  %v3184 = vsel %vm3056, %v2982, %v3120
  %v3185 = vsel %vm3057, %v2985, %v3121
  %v3186 = vsel %vm3058, %v2990, %v3122
  %v3187 = vsel %vm3059, %v2993, %v3123
  %v3188 = vadd.f32 %v3124, %v1188
  %v3189 = vadd.f32 %v3125, %v1191
  %v3190 = vadd.f32 %v3126, %v1196
  %v3191 = vadd.f32 %v3127, %v1199
  %v3192 = vadd.f32 %v3128, %v1204
  %v3193 = vadd.f32 %v3129, %v1207
  %v3194 = vadd.f32 %v3130, %v1212
  %v3195 = vadd.f32 %v3131, %v1215
  %v3196 = vadd.f32 %v3132, %v1220
  %v3197 = vadd.f32 %v3133, %v1223
  %v3198 = vadd.f32 %v3134, %v1228
  %v3199 = vadd.f32 %v3135, %v1231
  %v3200 = vadd.f32 %v3136, %v1236
  %v3201 = vadd.f32 %v3137, %v1239
  %v3202 = vadd.f32 %v3138, %v1244
  %v3203 = vadd.f32 %v3139, %v1247
  %v3204 = vadd.f32 %v3140, %v1252
  %v3205 = vadd.f32 %v3141, %v1255
  %v3206 = vadd.f32 %v3142, %v1260
  %v3207 = vadd.f32 %v3143, %v1263
  %v3208 = vadd.f32 %v3144, %v1268
  %v3209 = vadd.f32 %v3145, %v1271
  %v3210 = vadd.f32 %v3146, %v1276
  %v3211 = vadd.f32 %v3147, %v1279
  %v3212 = vadd.f32 %v3148, %v1284
  %v3213 = vadd.f32 %v3149, %v1287
  %v3214 = vadd.f32 %v3150, %v1292
  %v3215 = vadd.f32 %v3151, %v1295
  %v3216 = vadd.f32 %v3152, %v1300
  %v3217 = vadd.f32 %v3153, %v1303
  %v3218 = vadd.f32 %v3154, %v1308
  %v3219 = vadd.f32 %v3155, %v1311
  %v3220 = vadd.f32 %v3156, %v1316
  %v3221 = vadd.f32 %v3157, %v1319
  %v3222 = vadd.f32 %v3158, %v1324
  %v3223 = vadd.f32 %v3159, %v1327
  %v3224 = vadd.f32 %v3160, %v1332
  %v3225 = vadd.f32 %v3161, %v1335
  %v3226 = vadd.f32 %v3162, %v1340
  %v3227 = vadd.f32 %v3163, %v1343
  %v3228 = vadd.f32 %v3164, %v1348
  %v3229 = vadd.f32 %v3165, %v1351
  %v3230 = vadd.f32 %v3166, %v1356
  %v3231 = vadd.f32 %v3167, %v1359
  %v3232 = vadd.f32 %v3168, %v1364
  %v3233 = vadd.f32 %v3169, %v1367
  %v3234 = vadd.f32 %v3170, %v1372
  %v3235 = vadd.f32 %v3171, %v1375
  %v3236 = vadd.f32 %v3172, %v1380
  %v3237 = vadd.f32 %v3173, %v1383
  %v3238 = vadd.f32 %v3174, %v1388
  %v3239 = vadd.f32 %v3175, %v1391
  %v3240 = vadd.f32 %v3176, %v1396
  %v3241 = vadd.f32 %v3177, %v1399
  %v3242 = vadd.f32 %v3178, %v1404
  %v3243 = vadd.f32 %v3179, %v1407
  %v3244 = vadd.f32 %v3180, %v1412
  %v3245 = vadd.f32 %v3181, %v1415
  %v3246 = vadd.f32 %v3182, %v1420
  %v3247 = vadd.f32 %v3183, %v1423
  %v3248 = vadd.f32 %v3184, %v1428
  %v3249 = vadd.f32 %v3185, %v1431
  %v3250 = vadd.f32 %v3186, %v1436
  %v3251 = vadd.f32 %v3187, %v1439
  %vm3252 = vcmp.gt.f32.partialorder %v3188, 0.0
  %vm3253 = vcmp.gt.f32.partialorder %v3189, 0.0
  %vm3254 = vcmp.gt.f32.partialorder %v3190, 0.0
  %vm3255 = vcmp.gt.f32.partialorder %v3191, 0.0
  %vm3256 = vcmp.gt.f32.partialorder %v3192, 0.0
  %vm3257 = vcmp.gt.f32.partialorder %v3193, 0.0
  %vm3258 = vcmp.gt.f32.partialorder %v3194, 0.0
  %vm3259 = vcmp.gt.f32.partialorder %v3195, 0.0
  %vm3260 = vcmp.gt.f32.partialorder %v3196, 0.0
  %vm3261 = vcmp.gt.f32.partialorder %v3197, 0.0
  %vm3262 = vcmp.gt.f32.partialorder %v3198, 0.0
  %vm3263 = vcmp.gt.f32.partialorder %v3199, 0.0
  %vm3264 = vcmp.gt.f32.partialorder %v3200, 0.0
  %vm3265 = vcmp.gt.f32.partialorder %v3201, 0.0
  %vm3266 = vcmp.gt.f32.partialorder %v3202, 0.0
  %vm3267 = vcmp.gt.f32.partialorder %v3203, 0.0
  %vm3268 = vcmp.gt.f32.partialorder %v3204, 0.0
  %vm3269 = vcmp.gt.f32.partialorder %v3205, 0.0
  %vm3270 = vcmp.gt.f32.partialorder %v3206, 0.0
  %vm3271 = vcmp.gt.f32.partialorder %v3207, 0.0
  %vm3272 = vcmp.gt.f32.partialorder %v3208, 0.0
  %vm3273 = vcmp.gt.f32.partialorder %v3209, 0.0
  %vm3274 = vcmp.gt.f32.partialorder %v3210, 0.0
  %vm3275 = vcmp.gt.f32.partialorder %v3211, 0.0
  %vm3276 = vcmp.gt.f32.partialorder %v3212, 0.0
  %vm3277 = vcmp.gt.f32.partialorder %v3213, 0.0
  %vm3278 = vcmp.gt.f32.partialorder %v3214, 0.0
  %vm3279 = vcmp.gt.f32.partialorder %v3215, 0.0
  %vm3280 = vcmp.gt.f32.partialorder %v3216, 0.0
  %vm3281 = vcmp.gt.f32.partialorder %v3217, 0.0
  %vm3282 = vcmp.gt.f32.partialorder %v3218, 0.0
  %vm3283 = vcmp.gt.f32.partialorder %v3219, 0.0
  %vm3284 = vcmp.gt.f32.partialorder %v3220, 0.0
  %vm3285 = vcmp.gt.f32.partialorder %v3221, 0.0
  %vm3286 = vcmp.gt.f32.partialorder %v3222, 0.0
  %vm3287 = vcmp.gt.f32.partialorder %v3223, 0.0
  %vm3288 = vcmp.gt.f32.partialorder %v3224, 0.0
  %vm3289 = vcmp.gt.f32.partialorder %v3225, 0.0
  %vm3290 = vcmp.gt.f32.partialorder %v3226, 0.0
  %vm3291 = vcmp.gt.f32.partialorder %v3227, 0.0
  %vm3292 = vcmp.gt.f32.partialorder %v3228, 0.0
  %vm3293 = vcmp.gt.f32.partialorder %v3229, 0.0
  %vm3294 = vcmp.gt.f32.partialorder %v3230, 0.0
  %vm3295 = vcmp.gt.f32.partialorder %v3231, 0.0
  %vm3296 = vcmp.gt.f32.partialorder %v3232, 0.0
  %vm3297 = vcmp.gt.f32.partialorder %v3233, 0.0
  %vm3298 = vcmp.gt.f32.partialorder %v3234, 0.0
  %vm3299 = vcmp.gt.f32.partialorder %v3235, 0.0
  %vm3300 = vcmp.gt.f32.partialorder %v3236, 0.0
  %vm3301 = vcmp.gt.f32.partialorder %v3237, 0.0
  %vm3302 = vcmp.gt.f32.partialorder %v3238, 0.0
  %vm3303 = vcmp.gt.f32.partialorder %v3239, 0.0
  %vm3304 = vcmp.gt.f32.partialorder %v3240, 0.0
  %vm3305 = vcmp.gt.f32.partialorder %v3241, 0.0
  %vm3306 = vcmp.gt.f32.partialorder %v3242, 0.0
  %vm3307 = vcmp.gt.f32.partialorder %v3243, 0.0
  %vm3308 = vcmp.gt.f32.partialorder %v3244, 0.0
  %vm3309 = vcmp.gt.f32.partialorder %v3245, 0.0
  %vm3310 = vcmp.gt.f32.partialorder %v3246, 0.0
  %vm3311 = vcmp.gt.f32.partialorder %v3247, 0.0
  %vm3312 = vcmp.gt.f32.partialorder %v3248, 0.0
  %vm3313 = vcmp.gt.f32.partialorder %v3249, 0.0
  %vm3314 = vcmp.gt.f32.partialorder %v3250, 0.0
  %vm3315 = vcmp.gt.f32.partialorder %v3251, 0.0
  %v3316 = vmul.f32 %v3188, 0.01
  %v3317 = vmul.f32 %v3189, 0.01
  %v3318 = vmul.f32 %v3190, 0.01
  %v3319 = vmul.f32 %v3191, 0.01
  %v3320 = vmul.f32 %v3192, 0.01
  %v3321 = vmul.f32 %v3193, 0.01
  %v3322 = vmul.f32 %v3194, 0.01
  %v3323 = vmul.f32 %v3195, 0.01
  %v3324 = vmul.f32 %v3196, 0.01
  %v3325 = vmul.f32 %v3197, 0.01
  %v3326 = vmul.f32 %v3198, 0.01
  %v3327 = vmul.f32 %v3199, 0.01
  %v3328 = vmul.f32 %v3200, 0.01
  %v3329 = vmul.f32 %v3201, 0.01
  %v3330 = vmul.f32 %v3202, 0.01
  %v3331 = vmul.f32 %v3203, 0.01
  %v3332 = vmul.f32 %v3204, 0.01
  %v3333 = vmul.f32 %v3205, 0.01
  %v3334 = vmul.f32 %v3206, 0.01
  %v3335 = vmul.f32 %v3207, 0.01
  %v3336 = vmul.f32 %v3208, 0.01
  %v3337 = vmul.f32 %v3209, 0.01
  %v3338 = vmul.f32 %v3210, 0.01
  %v3339 = vmul.f32 %v3211, 0.01
  %v3340 = vmul.f32 %v3212, 0.01
  %v3341 = vmul.f32 %v3213, 0.01
  %v3342 = vmul.f32 %v3214, 0.01
  %v3343 = vmul.f32 %v3215, 0.01
  %v3344 = vmul.f32 %v3216, 0.01
  %v3345 = vmul.f32 %v3217, 0.01
  %v3346 = vmul.f32 %v3218, 0.01
  %v3347 = vmul.f32 %v3219, 0.01
  %v3348 = vmul.f32 %v3220, 0.01
  %v3349 = vmul.f32 %v3221, 0.01
  %v3350 = vmul.f32 %v3222, 0.01
  %v3351 = vmul.f32 %v3223, 0.01
  %v3352 = vmul.f32 %v3224, 0.01
  %v3353 = vmul.f32 %v3225, 0.01
  %v3354 = vmul.f32 %v3226, 0.01
  %v3355 = vmul.f32 %v3227, 0.01
  %v3356 = vmul.f32 %v3228, 0.01
  %v3357 = vmul.f32 %v3229, 0.01
  %v3358 = vmul.f32 %v3230, 0.01
  %v3359 = vmul.f32 %v3231, 0.01
  %v3360 = vmul.f32 %v3232, 0.01
  %v3361 = vmul.f32 %v3233, 0.01
  %v3362 = vmul.f32 %v3234, 0.01
  %v3363 = vmul.f32 %v3235, 0.01
  %v3364 = vmul.f32 %v3236, 0.01
  %v3365 = vmul.f32 %v3237, 0.01
  %v3366 = vmul.f32 %v3238, 0.01
  %v3367 = vmul.f32 %v3239, 0.01
  %v3368 = vmul.f32 %v3240, 0.01
  %v3369 = vmul.f32 %v3241, 0.01
  %v3370 = vmul.f32 %v3242, 0.01
  %v3371 = vmul.f32 %v3243, 0.01
  %v3372 = vmul.f32 %v3244, 0.01
  %v3373 = vmul.f32 %v3245, 0.01
  %v3374 = vmul.f32 %v3246, 0.01
  %v3375 = vmul.f32 %v3247, 0.01
  %v3376 = vmul.f32 %v3248, 0.01
  %v3377 = vmul.f32 %v3249, 0.01
  %v3378 = vmul.f32 %v3250, 0.01
  %v3379 = vmul.f32 %v3251, 0.01
  %v3380 = vsel %vm3252, %v3188, %v3316
  %v3381 = vsel %vm3253, %v3189, %v3317
  %v3382 = vsel %vm3254, %v3190, %v3318
  %v3383 = vsel %vm3255, %v3191, %v3319
  %v3384 = vsel %vm3256, %v3192, %v3320
  %v3385 = vsel %vm3257, %v3193, %v3321
  %v3386 = vsel %vm3258, %v3194, %v3322
  %v3387 = vsel %vm3259, %v3195, %v3323
  %v3388 = vsel %vm3260, %v3196, %v3324
  %v3389 = vsel %vm3261, %v3197, %v3325
  %v3390 = vsel %vm3262, %v3198, %v3326
  %v3391 = vsel %vm3263, %v3199, %v3327
  %v3392 = vsel %vm3264, %v3200, %v3328
  %v3393 = vsel %vm3265, %v3201, %v3329
  %v3394 = vsel %vm3266, %v3202, %v3330
  %v3395 = vsel %vm3267, %v3203, %v3331
  %v3396 = vsel %vm3268, %v3204, %v3332
  %v3397 = vsel %vm3269, %v3205, %v3333
  %v3398 = vsel %vm3270, %v3206, %v3334
  %v3399 = vsel %vm3271, %v3207, %v3335
  %v3400 = vsel %vm3272, %v3208, %v3336
  %v3401 = vsel %vm3273, %v3209, %v3337
  %v3402 = vsel %vm3274, %v3210, %v3338
  %v3403 = vsel %vm3275, %v3211, %v3339
  %v3404 = vsel %vm3276, %v3212, %v3340
  %v3405 = vsel %vm3277, %v3213, %v3341
  %v3406 = vsel %vm3278, %v3214, %v3342
  %v3407 = vsel %vm3279, %v3215, %v3343
  %v3408 = vsel %vm3280, %v3216, %v3344
  %v3409 = vsel %vm3281, %v3217, %v3345
  %v3410 = vsel %vm3282, %v3218, %v3346
  %v3411 = vsel %vm3283, %v3219, %v3347
  %v3412 = vsel %vm3284, %v3220, %v3348
  %v3413 = vsel %vm3285, %v3221, %v3349
  %v3414 = vsel %vm3286, %v3222, %v3350
  %v3415 = vsel %vm3287, %v3223, %v3351
  %v3416 = vsel %vm3288, %v3224, %v3352
  %v3417 = vsel %vm3289, %v3225, %v3353
  %v3418 = vsel %vm3290, %v3226, %v3354
  %v3419 = vsel %vm3291, %v3227, %v3355
  %v3420 = vsel %vm3292, %v3228, %v3356
  %v3421 = vsel %vm3293, %v3229, %v3357
  %v3422 = vsel %vm3294, %v3230, %v3358
  %v3423 = vsel %vm3295, %v3231, %v3359
  %v3424 = vsel %vm3296, %v3232, %v3360
  %v3425 = vsel %vm3297, %v3233, %v3361
  %v3426 = vsel %vm3298, %v3234, %v3362
  %v3427 = vsel %vm3299, %v3235, %v3363
  %v3428 = vsel %vm3300, %v3236, %v3364
  %v3429 = vsel %vm3301, %v3237, %v3365
  %v3430 = vsel %vm3302, %v3238, %v3366
  %v3431 = vsel %vm3303, %v3239, %v3367
  %v3432 = vsel %vm3304, %v3240, %v3368
  %v3433 = vsel %vm3305, %v3241, %v3369
  %v3434 = vsel %vm3306, %v3242, %v3370
  %v3435 = vsel %vm3307, %v3243, %v3371
  %v3436 = vsel %vm3308, %v3244, %v3372
  %v3437 = vsel %vm3309, %v3245, %v3373
  %v3438 = vsel %vm3310, %v3246, %v3374
  %v3439 = vsel %vm3311, %v3247, %v3375
  %v3440 = vsel %vm3312, %v3248, %v3376
  %v3441 = vsel %vm3313, %v3249, %v3377
  %v3442 = vsel %vm3314, %v3250, %v3378
  %v3443 = vsel %vm3315, %v3251, %v3379
  %v3444 = vpack.c.bf16 %v3381, %v3380
  %v3445 = vpack.c.bf16 %v3383, %v3382
  %v3446 = vpack.c.bf16 %v3385, %v3384
  %v3447 = vpack.c.bf16 %v3387, %v3386
  %v3448 = vpack.c.bf16 %v3389, %v3388
  %v3449 = vpack.c.bf16 %v3391, %v3390
  %v3450 = vpack.c.bf16 %v3393, %v3392
  %v3451 = vpack.c.bf16 %v3395, %v3394
  %v3452 = vpack.c.bf16 %v3397, %v3396
  %v3453 = vpack.c.bf16 %v3399, %v3398
  %v3454 = vpack.c.bf16 %v3401, %v3400
  %v3455 = vpack.c.bf16 %v3403, %v3402
  %v3456 = vpack.c.bf16 %v3405, %v3404
  %v3457 = vpack.c.bf16 %v3407, %v3406
  %v3458 = vpack.c.bf16 %v3409, %v3408
  %v3459 = vpack.c.bf16 %v3411, %v3410
  %v3460 = vpack.c.bf16 %v3413, %v3412
  %v3461 = vpack.c.bf16 %v3415, %v3414
  %v3462 = vpack.c.bf16 %v3417, %v3416
  %v3463 = vpack.c.bf16 %v3419, %v3418
  %v3464 = vpack.c.bf16 %v3421, %v3420
  %v3465 = vpack.c.bf16 %v3423, %v3422
  %v3466 = vpack.c.bf16 %v3425, %v3424
  %v3467 = vpack.c.bf16 %v3427, %v3426
  %v3468 = vpack.c.bf16 %v3429, %v3428
  %v3469 = vpack.c.bf16 %v3431, %v3430
  %v3470 = vpack.c.bf16 %v3433, %v3432
  %v3471 = vpack.c.bf16 %v3435, %v3434
  %v3472 = vpack.c.bf16 %v3437, %v3436
  %v3473 = vpack.c.bf16 %v3439, %v3438
  %v3474 = vpack.c.bf16 %v3441, %v3440
  %v3475 = vpack.c.bf16 %v3443, %v3442
  %v3476 = vld [vmem:[%s5] sm:$0xf]
  %v3477 = vld [vmem:[%s5 + $0x4] sm:$0xf]
  %v3478 = vld [vmem:[%s5 + $0x8] sm:$0xf]
  %v3479 = vld [vmem:[%s5 + $0xc] sm:$0xf]
  %v3480 = vld [vmem:[%s5 + $0x10] sm:$0xf]
  %v3481 = vld [vmem:[%s5 + $0x14] sm:$0xf]
  %v3482 = vld [vmem:[%s5 + $0x18] sm:$0xf]
  %v3483 = vld [vmem:[%s5 + $0x1c] sm:$0xf]
  %v3484 = vld [vmem:[%s5 + $0x20] sm:$0xf]
  %v3485 = vld [vmem:[%s5 + $0x24] sm:$0xf]
  %v3486 = vld [vmem:[%s5 + $0x28] sm:$0xf]
  %v3487 = vld [vmem:[%s5 + $0x2c] sm:$0xf]
  %v3488 = vld [vmem:[%s5 + $0x30] sm:$0xf]
  %v3489 = vld [vmem:[%s5 + $0x34] sm:$0xf]
  %v3490 = vld [vmem:[%s5 + $0x38] sm:$0xf]
  %v3491 = vld [vmem:[%s5 + $0x3c] sm:$0xf]
  %v3492 = vld [vmem:[%s6 + $0x4] sm:$0x1]
  %v3493 = vlaneseq
  %v3494 = vshrl.u32 %v3493, 7
  %v3495 = vsub.s32 0, %v3494
  %v3496 = vrot.slane %v3492, %v3495
  %v3513 = vunpack.c.l.b16 %v3476
  %v3514 = vunpack.c.l.b16 %v3477
  %v3515 = vunpack.c.l.b16 %v3478
  %v3516 = vunpack.c.l.b16 %v3479
  %v3517 = vunpack.c.l.b16 %v3480
  %v3518 = vunpack.c.l.b16 %v3481
  %v3519 = vunpack.c.l.b16 %v3482
  %v3520 = vunpack.c.l.b16 %v3483
  %v3521 = vunpack.c.l.b16 %v3484
  %v3522 = vunpack.c.l.b16 %v3485
  %v3523 = vunpack.c.l.b16 %v3486
  %v3524 = vunpack.c.l.b16 %v3487
  %v3525 = vunpack.c.l.b16 %v3488
  %v3526 = vunpack.c.l.b16 %v3489
  %v3527 = vunpack.c.l.b16 %v3490
  %v3528 = vunpack.c.l.b16 %v3491
  %v3529 = vpack.c.b16 %v3514, %v3513
  %v3530 = vpack.c.b16 %v3516, %v3515
  %v3531 = vpack.c.b16 %v3518, %v3517
  %v3532 = vpack.c.b16 %v3520, %v3519
  %v3533 = vpack.c.b16 %v3522, %v3521
  %v3534 = vpack.c.b16 %v3524, %v3523
  %v3535 = vpack.c.b16 %v3526, %v3525
  %v3536 = vpack.c.b16 %v3528, %v3527
  %3545 = vmatprep.subr.bf16.mxu0 0
  %3546 = vmatpush1.bf16.msra.mxu0 %v3529
  %3547 = vmatprep.subr.bf16.mxu0 0
  %3548 = vmatpush1.bf16.msra.mxu0 %v3530
  %3549 = vmatprep.subr.bf16.mxu0 0
  %3550 = vmatpush1.bf16.msra.mxu0 %v3531
  %3551 = vmatprep.subr.bf16.mxu0 0
  %3552 = vmatpush1.bf16.msra.mxu0 %v3532
  %3553 = vmatprep.subr.bf16.mxu0 0
  %3554 = vmatpush1.bf16.msra.mxu0 %v3533
  %3555 = vmatprep.subr.bf16.mxu0 0
  %3556 = vmatpush1.bf16.msra.mxu0 %v3534
  %3557 = vmatprep.subr.bf16.mxu0 0
  %3558 = vmatpush1.bf16.msra.mxu0 %v3535
  %3559 = vmatprep.subr.bf16.mxu0 0
  %3560 = vmatpush1.bf16.msra.mxu0 %v3536
  %3561 = vmatprep.subr.bf16.mxu0 0
  %3562 = vmatpush1.bf16.msra.mxu0 0
  %3563 = vmatprep.subr.bf16.mxu0 0
  %3564 = vmatpush1.bf16.msra.mxu0 0
  %3565 = vmatprep.subr.bf16.mxu0 0
  %3566 = vmatpush1.bf16.msra.mxu0 0
  %3567 = vmatprep.subr.bf16.mxu0 0
  %3568 = vmatpush1.bf16.msra.mxu0 0
  %3569 = vmatprep.subr.bf16.mxu0 0
  %3570 = vmatpush1.bf16.msra.mxu0 0
  %3571 = vmatprep.subr.bf16.mxu0 0
  %3572 = vmatpush1.bf16.msra.mxu0 0
  %3573 = vmatprep.subr.bf16.mxu0 0
  %3574 = vmatpush1.bf16.msra.mxu0 0
  %3575 = vmatprep.subr.bf16.mxu0 0
  %3576 = vmatpush1.bf16.msra.mxu0 0
  %3577 = vmatprep.mubr.bf16.mxu0 0
  %3578 = vmatmul.mubr.bf16.gmra.mrb[0].mxu0 %v3444
  %v3579 = vpop.f32.mrb[0].mxu0
  %v3580 = vadd.f32 %v3496, %v3579
  %v3581 = vpop.f32.mrb[0].mxu0
  %v3582 = vpop.f32.mrb[0].mxu0
  %v3583 = vadd.f32 %v3496, %v3582
  %v3584 = vpop.f32.mrb[0].mxu0
  %3585 = vmatprep.mubr.bf16.mxu0 0
  %3586 = vmatmul.mubr.bf16.gmra.mrb[0].mxu0 %v3445
  %v3587 = vpop.f32.mrb[0].mxu0
  %v3588 = vadd.f32 %v3496, %v3587
  %v3589 = vpop.f32.mrb[0].mxu0
  %v3590 = vpop.f32.mrb[0].mxu0
  %v3591 = vadd.f32 %v3496, %v3590
  %v3592 = vpop.f32.mrb[0].mxu0
  %3593 = vmatprep.mubr.bf16.mxu0 0
  %3594 = vmatmul.mubr.bf16.gmra.mrb[0].mxu0 %v3446
  %v3595 = vpop.f32.mrb[0].mxu0
  %v3596 = vadd.f32 %v3496, %v3595
  %v3597 = vpop.f32.mrb[0].mxu0
  %v3598 = vpop.f32.mrb[0].mxu0
  %v3599 = vadd.f32 %v3496, %v3598
  %v3600 = vpop.f32.mrb[0].mxu0
  %3601 = vmatprep.mubr.bf16.mxu0 0
  %3602 = vmatmul.mubr.bf16.gmra.mrb[0].mxu0 %v3447
  %v3603 = vpop.f32.mrb[0].mxu0
  %v3604 = vadd.f32 %v3496, %v3603
  %v3605 = vpop.f32.mrb[0].mxu0
  %v3606 = vpop.f32.mrb[0].mxu0
  %v3607 = vadd.f32 %v3496, %v3606
  %v3608 = vpop.f32.mrb[0].mxu0
  %3609 = vmatprep.mubr.bf16.mxu0 0
  %3610 = vmatmul.mubr.bf16.gmra.mrb[0].mxu0 %v3448
  %v3611 = vpop.f32.mrb[0].mxu0
  %v3612 = vadd.f32 %v3496, %v3611
  %v3613 = vpop.f32.mrb[0].mxu0
  %v3614 = vpop.f32.mrb[0].mxu0
  %v3615 = vadd.f32 %v3496, %v3614
  %v3616 = vpop.f32.mrb[0].mxu0
  %3617 = vmatprep.mubr.bf16.mxu0 0
  %3618 = vmatmul.mubr.bf16.gmra.mrb[0].mxu0 %v3449
  %v3619 = vpop.f32.mrb[0].mxu0
  %v3620 = vadd.f32 %v3496, %v3619
  %v3621 = vpop.f32.mrb[0].mxu0
  %v3622 = vpop.f32.mrb[0].mxu0
  %v3623 = vadd.f32 %v3496, %v3622
  %v3624 = vpop.f32.mrb[0].mxu0
  %3625 = vmatprep.mubr.bf16.mxu0 0
  %3626 = vmatmul.mubr.bf16.gmra.mrb[0].mxu0 %v3450
  %v3627 = vpop.f32.mrb[0].mxu0
  %v3628 = vadd.f32 %v3496, %v3627
  %v3629 = vpop.f32.mrb[0].mxu0
  %v3630 = vpop.f32.mrb[0].mxu0
  %v3631 = vadd.f32 %v3496, %v3630
  %v3632 = vpop.f32.mrb[0].mxu0
  %3633 = vmatprep.mubr.bf16.mxu0 0
  %3634 = vmatmul.mubr.bf16.gmra.mrb[0].mxu0 %v3451
  %v3635 = vpop.f32.mrb[0].mxu0
  %v3636 = vadd.f32 %v3496, %v3635
  %v3637 = vpop.f32.mrb[0].mxu0
  %v3638 = vpop.f32.mrb[0].mxu0
  %v3639 = vadd.f32 %v3496, %v3638
  %v3640 = vpop.f32.mrb[0].mxu0
  %3641 = vmatprep.mubr.bf16.mxu0 0
  %3642 = vmatmul.mubr.bf16.gmra.mrb[0].mxu0 %v3452
  %v3643 = vpop.f32.mrb[0].mxu0
  %v3644 = vadd.f32 %v3496, %v3643
  %v3645 = vpop.f32.mrb[0].mxu0
  %v3646 = vpop.f32.mrb[0].mxu0
  %v3647 = vadd.f32 %v3496, %v3646
  %v3648 = vpop.f32.mrb[0].mxu0
  %3649 = vmatprep.mubr.bf16.mxu0 0
  %3650 = vmatmul.mubr.bf16.gmra.mrb[0].mxu0 %v3453
  %v3651 = vpop.f32.mrb[0].mxu0
  %v3652 = vadd.f32 %v3496, %v3651
  %v3653 = vpop.f32.mrb[0].mxu0
  %v3654 = vpop.f32.mrb[0].mxu0
  %v3655 = vadd.f32 %v3496, %v3654
  %v3656 = vpop.f32.mrb[0].mxu0
  %3657 = vmatprep.mubr.bf16.mxu0 0
  %3658 = vmatmul.mubr.bf16.gmra.mrb[0].mxu0 %v3454
  %v3659 = vpop.f32.mrb[0].mxu0
  %v3660 = vadd.f32 %v3496, %v3659
  %v3661 = vpop.f32.mrb[0].mxu0
  %v3662 = vpop.f32.mrb[0].mxu0
  %v3663 = vadd.f32 %v3496, %v3662
  %v3664 = vpop.f32.mrb[0].mxu0
  %3665 = vmatprep.mubr.bf16.mxu0 0
  %3666 = vmatmul.mubr.bf16.gmra.mrb[0].mxu0 %v3455
  %v3667 = vpop.f32.mrb[0].mxu0
  %v3668 = vadd.f32 %v3496, %v3667
  %v3669 = vpop.f32.mrb[0].mxu0
  %v3670 = vpop.f32.mrb[0].mxu0
  %v3671 = vadd.f32 %v3496, %v3670
  %v3672 = vpop.f32.mrb[0].mxu0
  %3673 = vmatprep.mubr.bf16.mxu0 0
  %3674 = vmatmul.mubr.bf16.gmra.mrb[0].mxu0 %v3456
  %v3675 = vpop.f32.mrb[0].mxu0
  %v3676 = vadd.f32 %v3496, %v3675
  %v3677 = vpop.f32.mrb[0].mxu0
  %v3678 = vpop.f32.mrb[0].mxu0
  %v3679 = vadd.f32 %v3496, %v3678
  %v3680 = vpop.f32.mrb[0].mxu0
  %3681 = vmatprep.mubr.bf16.mxu0 0
  %3682 = vmatmul.mubr.bf16.gmra.mrb[0].mxu0 %v3457
  %v3683 = vpop.f32.mrb[0].mxu0
  %v3684 = vadd.f32 %v3496, %v3683
  %v3685 = vpop.f32.mrb[0].mxu0
  %v3686 = vpop.f32.mrb[0].mxu0
  %v3687 = vadd.f32 %v3496, %v3686
  %v3688 = vpop.f32.mrb[0].mxu0
  %3689 = vmatprep.mubr.bf16.mxu0 0
  %3690 = vmatmul.mubr.bf16.gmra.mrb[0].mxu0 %v3458
  %v3691 = vpop.f32.mrb[0].mxu0
  %v3692 = vadd.f32 %v3496, %v3691
  %v3693 = vpop.f32.mrb[0].mxu0
  %v3694 = vpop.f32.mrb[0].mxu0
  %v3695 = vadd.f32 %v3496, %v3694
  %v3696 = vpop.f32.mrb[0].mxu0
  %3697 = vmatprep.mubr.bf16.mxu0 0
  %3698 = vmatmul.mubr.bf16.gmra.mrb[0].mxu0 %v3459
  %v3699 = vpop.f32.mrb[0].mxu0
  %v3700 = vadd.f32 %v3496, %v3699
  %v3701 = vpop.f32.mrb[0].mxu0
  %v3702 = vpop.f32.mrb[0].mxu0
  %v3703 = vadd.f32 %v3496, %v3702
  %v3704 = vpop.f32.mrb[0].mxu0
  %3705 = vmatprep.mubr.bf16.mxu0 0
  %3706 = vmatmul.mubr.bf16.gmra.mrb[0].mxu0 %v3460
  %v3707 = vpop.f32.mrb[0].mxu0
  %v3708 = vadd.f32 %v3496, %v3707
  %v3709 = vpop.f32.mrb[0].mxu0
  %v3710 = vpop.f32.mrb[0].mxu0
  %v3711 = vadd.f32 %v3496, %v3710
  %v3712 = vpop.f32.mrb[0].mxu0
  %3713 = vmatprep.mubr.bf16.mxu0 0
  %3714 = vmatmul.mubr.bf16.gmra.mrb[0].mxu0 %v3461
  %v3715 = vpop.f32.mrb[0].mxu0
  %v3716 = vadd.f32 %v3496, %v3715
  %v3717 = vpop.f32.mrb[0].mxu0
  %v3718 = vpop.f32.mrb[0].mxu0
  %v3719 = vadd.f32 %v3496, %v3718
  %v3720 = vpop.f32.mrb[0].mxu0
  %3721 = vmatprep.mubr.bf16.mxu0 0
  %3722 = vmatmul.mubr.bf16.gmra.mrb[0].mxu0 %v3462
  %v3723 = vpop.f32.mrb[0].mxu0
  %v3724 = vadd.f32 %v3496, %v3723
  %v3725 = vpop.f32.mrb[0].mxu0
  %v3726 = vpop.f32.mrb[0].mxu0
  %v3727 = vadd.f32 %v3496, %v3726
  %v3728 = vpop.f32.mrb[0].mxu0
  %3729 = vmatprep.mubr.bf16.mxu0 0
  %3730 = vmatmul.mubr.bf16.gmra.mrb[0].mxu0 %v3463
  %v3731 = vpop.f32.mrb[0].mxu0
  %v3732 = vadd.f32 %v3496, %v3731
  %v3733 = vpop.f32.mrb[0].mxu0
  %v3734 = vpop.f32.mrb[0].mxu0
  %v3735 = vadd.f32 %v3496, %v3734
  %v3736 = vpop.f32.mrb[0].mxu0
  %3737 = vmatprep.mubr.bf16.mxu0 0
  %3738 = vmatmul.mubr.bf16.gmra.mrb[0].mxu0 %v3464
  %v3739 = vpop.f32.mrb[0].mxu0
  %v3740 = vadd.f32 %v3496, %v3739
  %v3741 = vpop.f32.mrb[0].mxu0
  %v3742 = vpop.f32.mrb[0].mxu0
  %v3743 = vadd.f32 %v3496, %v3742
  %v3744 = vpop.f32.mrb[0].mxu0
  %3745 = vmatprep.mubr.bf16.mxu0 0
  %3746 = vmatmul.mubr.bf16.gmra.mrb[0].mxu0 %v3465
  %v3747 = vpop.f32.mrb[0].mxu0
  %v3748 = vadd.f32 %v3496, %v3747
  %v3749 = vpop.f32.mrb[0].mxu0
  %v3750 = vpop.f32.mrb[0].mxu0
  %v3751 = vadd.f32 %v3496, %v3750
  %v3752 = vpop.f32.mrb[0].mxu0
  %3753 = vmatprep.mubr.bf16.mxu0 0
  %3754 = vmatmul.mubr.bf16.gmra.mrb[0].mxu0 %v3466
  %v3755 = vpop.f32.mrb[0].mxu0
  %v3756 = vadd.f32 %v3496, %v3755
  %v3757 = vpop.f32.mrb[0].mxu0
  %v3758 = vpop.f32.mrb[0].mxu0
  %v3759 = vadd.f32 %v3496, %v3758
  %v3760 = vpop.f32.mrb[0].mxu0
  %3761 = vmatprep.mubr.bf16.mxu0 0
  %3762 = vmatmul.mubr.bf16.gmra.mrb[0].mxu0 %v3467
  %v3763 = vpop.f32.mrb[0].mxu0
  %v3764 = vadd.f32 %v3496, %v3763
  %v3765 = vpop.f32.mrb[0].mxu0
  %v3766 = vpop.f32.mrb[0].mxu0
  %v3767 = vadd.f32 %v3496, %v3766
  %v3768 = vpop.f32.mrb[0].mxu0
  %3769 = vmatprep.mubr.bf16.mxu0 0
  %3770 = vmatmul.mubr.bf16.gmra.mrb[0].mxu0 %v3468
  %v3771 = vpop.f32.mrb[0].mxu0
  %v3772 = vadd.f32 %v3496, %v3771
  %v3773 = vpop.f32.mrb[0].mxu0
  %v3774 = vpop.f32.mrb[0].mxu0
  %v3775 = vadd.f32 %v3496, %v3774
  %v3776 = vpop.f32.mrb[0].mxu0
  %3777 = vmatprep.mubr.bf16.mxu0 0
  %3778 = vmatmul.mubr.bf16.gmra.mrb[0].mxu0 %v3469
  %v3779 = vpop.f32.mrb[0].mxu0
  %v3780 = vadd.f32 %v3496, %v3779
  %v3781 = vpop.f32.mrb[0].mxu0
  %v3782 = vpop.f32.mrb[0].mxu0
  %v3783 = vadd.f32 %v3496, %v3782
  %v3784 = vpop.f32.mrb[0].mxu0
  %3785 = vmatprep.mubr.bf16.mxu0 0
  %3786 = vmatmul.mubr.bf16.gmra.mrb[0].mxu0 %v3470
  %v3787 = vpop.f32.mrb[0].mxu0
  %v3788 = vadd.f32 %v3496, %v3787
  %v3789 = vpop.f32.mrb[0].mxu0
  %v3790 = vpop.f32.mrb[0].mxu0
  %v3791 = vadd.f32 %v3496, %v3790
  %v3792 = vpop.f32.mrb[0].mxu0
  %3793 = vmatprep.mubr.bf16.mxu0 0
  %3794 = vmatmul.mubr.bf16.gmra.mrb[0].mxu0 %v3471
  %v3795 = vpop.f32.mrb[0].mxu0
  %v3796 = vadd.f32 %v3496, %v3795
  %v3797 = vpop.f32.mrb[0].mxu0
  %v3798 = vpop.f32.mrb[0].mxu0
  %v3799 = vadd.f32 %v3496, %v3798
  %v3800 = vpop.f32.mrb[0].mxu0
  %3801 = vmatprep.mubr.bf16.mxu0 0
  %3802 = vmatmul.mubr.bf16.gmra.mrb[0].mxu0 %v3472
  %v3803 = vpop.f32.mrb[0].mxu0
  %v3804 = vadd.f32 %v3496, %v3803
  %v3805 = vpop.f32.mrb[0].mxu0
  %v3806 = vpop.f32.mrb[0].mxu0
  %v3807 = vadd.f32 %v3496, %v3806
  %v3808 = vpop.f32.mrb[0].mxu0
  %3809 = vmatprep.mubr.bf16.mxu0 0
  %3810 = vmatmul.mubr.bf16.gmra.mrb[0].mxu0 %v3473
  %v3811 = vpop.f32.mrb[0].mxu0
  %v3812 = vadd.f32 %v3496, %v3811
  %v3813 = vpop.f32.mrb[0].mxu0
  %v3814 = vpop.f32.mrb[0].mxu0
  %v3815 = vadd.f32 %v3496, %v3814
  %v3816 = vpop.f32.mrb[0].mxu0
  %3817 = vmatprep.mubr.bf16.mxu0 0
  %3818 = vmatmul.mubr.bf16.gmra.mrb[0].mxu0 %v3474
  %v3819 = vpop.f32.mrb[0].mxu0
  %v3820 = vadd.f32 %v3496, %v3819
  %v3821 = vpop.f32.mrb[0].mxu0
  %v3822 = vpop.f32.mrb[0].mxu0
  %v3823 = vadd.f32 %v3496, %v3822
  %v3824 = vpop.f32.mrb[0].mxu0
  %3825 = vmatprep.mubr.bf16.mxu0 0
  %3826 = vmatmul.mubr.bf16.gmra.mrb[0].mxu0 %v3475
  %v3827 = vpop.f32.mrb[0].mxu0
  %v3828 = vadd.f32 %v3496, %v3827
  %v3829 = vpop.f32.mrb[0].mxu0
  %v3830 = vpop.f32.mrb[0].mxu0
  %v3831 = vadd.f32 %v3496, %v3830
  %v3832 = vpop.f32.mrb[0].mxu0
  %3833 = vdwg.mxu0
  %3834 = vst [vmem:[%s7] sm:$0xff] %v3580
  %3835 = vst [vmem:[%s7 + $0x8] sm:$0xff] %v3583
  %3836 = vst [vmem:[%s7 + $0x10] sm:$0xff] %v3588
  %3837 = vst [vmem:[%s7 + $0x18] sm:$0xff] %v3591
  %3838 = vst [vmem:[%s7 + $0x20] sm:$0xff] %v3596
  %3839 = vst [vmem:[%s7 + $0x28] sm:$0xff] %v3599
  %3840 = vst [vmem:[%s7 + $0x30] sm:$0xff] %v3604
  %3841 = vst [vmem:[%s7 + $0x38] sm:$0xff] %v3607
  %3842 = vst [vmem:[%s7 + $0x40] sm:$0xff] %v3612
  %3843 = vst [vmem:[%s7 + $0x48] sm:$0xff] %v3615
  %3844 = vst [vmem:[%s7 + $0x50] sm:$0xff] %v3620
  %3845 = vst [vmem:[%s7 + $0x58] sm:$0xff] %v3623
  %3846 = vst [vmem:[%s7 + $0x60] sm:$0xff] %v3628
  %3847 = vst [vmem:[%s7 + $0x68] sm:$0xff] %v3631
  %3848 = vst [vmem:[%s7 + $0x70] sm:$0xff] %v3636
  %3849 = vst [vmem:[%s7 + $0x78] sm:$0xff] %v3639
  %3850 = vst [vmem:[%s7 + $0x80] sm:$0xff] %v3644
  %3851 = vst [vmem:[%s7 + $0x88] sm:$0xff] %v3647
  %3852 = vst [vmem:[%s7 + $0x90] sm:$0xff] %v3652
  %3853 = vst [vmem:[%s7 + $0x98] sm:$0xff] %v3655
  %3854 = vst [vmem:[%s7 + $0xa0] sm:$0xff] %v3660
  %3855 = vst [vmem:[%s7 + $0xa8] sm:$0xff] %v3663
  %3856 = vst [vmem:[%s7 + $0xb0] sm:$0xff] %v3668
  %3857 = vst [vmem:[%s7 + $0xb8] sm:$0xff] %v3671
  %3858 = vst [vmem:[%s7 + $0xc0] sm:$0xff] %v3676
  %3859 = vst [vmem:[%s7 + $0xc8] sm:$0xff] %v3679
  %3860 = vst [vmem:[%s7 + $0xd0] sm:$0xff] %v3684
  %3861 = vst [vmem:[%s7 + $0xd8] sm:$0xff] %v3687
  %3862 = vst [vmem:[%s7 + $0xe0] sm:$0xff] %v3692
  %3863 = vst [vmem:[%s7 + $0xe8] sm:$0xff] %v3695
  %3864 = vst [vmem:[%s7 + $0xf0] sm:$0xff] %v3700
  %3865 = vst [vmem:[%s7 + $0xf8] sm:$0xff] %v3703
  %3866 = vst [vmem:[%s7 + $0x100] sm:$0xff] %v3708
  %3867 = vst [vmem:[%s7 + $0x108] sm:$0xff] %v3711
  %3868 = vst [vmem:[%s7 + $0x110] sm:$0xff] %v3716
  %3869 = vst [vmem:[%s7 + $0x118] sm:$0xff] %v3719
  %3870 = vst [vmem:[%s7 + $0x120] sm:$0xff] %v3724
  %3871 = vst [vmem:[%s7 + $0x128] sm:$0xff] %v3727
  %3872 = vst [vmem:[%s7 + $0x130] sm:$0xff] %v3732
  %3873 = vst [vmem:[%s7 + $0x138] sm:$0xff] %v3735
  %3874 = vst [vmem:[%s7 + $0x140] sm:$0xff] %v3740
  %3875 = vst [vmem:[%s7 + $0x148] sm:$0xff] %v3743
  %3876 = vst [vmem:[%s7 + $0x150] sm:$0xff] %v3748
  %3877 = vst [vmem:[%s7 + $0x158] sm:$0xff] %v3751
  %3878 = vst [vmem:[%s7 + $0x160] sm:$0xff] %v3756
  %3879 = vst [vmem:[%s7 + $0x168] sm:$0xff] %v3759
  %3880 = vst [vmem:[%s7 + $0x170] sm:$0xff] %v3764
  %3881 = vst [vmem:[%s7 + $0x178] sm:$0xff] %v3767
  %3882 = vst [vmem:[%s7 + $0x180] sm:$0xff] %v3772
  %3883 = vst [vmem:[%s7 + $0x188] sm:$0xff] %v3775
  %3884 = vst [vmem:[%s7 + $0x190] sm:$0xff] %v3780
  %3885 = vst [vmem:[%s7 + $0x198] sm:$0xff] %v3783
  %3886 = vst [vmem:[%s7 + $0x1a0] sm:$0xff] %v3788
  %3887 = vst [vmem:[%s7 + $0x1a8] sm:$0xff] %v3791
  %3888 = vst [vmem:[%s7 + $0x1b0] sm:$0xff] %v3796
  %3889 = vst [vmem:[%s7 + $0x1b8] sm:$0xff] %v3799
  %3890 = vst [vmem:[%s7 + $0x1c0] sm:$0xff] %v3804
  %3891 = vst [vmem:[%s7 + $0x1c8] sm:$0xff] %v3807
  %3892 = vst [vmem:[%s7 + $0x1d0] sm:$0xff] %v3812
  %3893 = vst [vmem:[%s7 + $0x1d8] sm:$0xff] %v3815
  %3894 = vst [vmem:[%s7 + $0x1e0] sm:$0xff] %v3820
  %3895 = vst [vmem:[%s7 + $0x1e8] sm:$0xff] %v3823
  %3896 = vst [vmem:[%s7 + $0x1f0] sm:$0xff] %v3828
  %3897 = vst [vmem:[%s7 + $0x1f8] sm:$0xff] %v3831
  // Predicated region
  $region30: #{classifier_forward.1} parent=0 // pred_check
    _
  $region31: #{classifier_forward.1} parent=0 // pred_check_branch
    %3899 = sbr.rel (0) target = $region33
  $region32: #{classifier_forward.1} parent=0 // pred_region
    _
  $region33: #{classifier_forward.1} parent=0 // pred_fallthru
    _
  // Predicated region
  $region34: #{classifier_forward.1} parent=0 // pred_check
    _
  $region35: #{classifier_forward.1} parent=0 // pred_check_branch
    %3901 = sbr.rel (0) target = $region37
  $region36: #{classifier_forward.1} parent=0 // pred_region
    _
  $region37: #{classifier_forward.1} parent=0 // pred_fallthru
    _

</llo_original>
